<compile_context>
chip_gen: v7x
topology: tpu7x:2x2x1
jax: 0.10.0
libtpu: 0.0.40
codegen_flags: <defaults>
</compile_context>

<pallas_src>
import jax
import jax.numpy as jnp
from jax.experimental import pallas as pl
from jax.experimental.pallas import tpu as pltpu

EPS = 1e-5


def _round_up(c, m=128):
    return ((c + m - 1) // m) * m


# ------------------------------ Pallas kernel ------------------------------

def _bottleneck_kernel(x_ref, w1_ref, b1_ref, w2_ref, b2_ref, w3_ref, b3_ref,
                       o_ref, t1p_ref):
    """Fused 1x1 -> 3x3 -> 1x1 conv block (BN folded). One batch image/step."""
    _, H, W, Cin = x_ref.shape
    Cp = w1_ref.shape[1]          # padded mid channels (multiple of 128)
    Coutp = o_ref.shape[3]        # padded output channels (multiple of 128)

    # ---- conv1 (1x1) + bias + ReLU  (bf16 in, f32 accumulate) -------------
    x2d = x_ref[0].reshape(H * W, Cin)                       # bf16 rows
    t1 = jnp.dot(x2d, w1_ref[...], preferred_element_type=jnp.float32)
    t1 = jnp.maximum(t1 + b1_ref[...], 0.0)

    # Stage t1 into the zero-padded (H+2, W+2, Cp) VMEM scratch (3x3 halo).
    t1p_ref[...] = jnp.zeros_like(t1p_ref)
    t1p_ref[1:H + 1, 1:W + 1, :] = t1.reshape(H, W, Cp)

    # ---- conv2 (3x3, pad=1) as 9 accumulated MXU matmuls + bias + ReLU ----
    acc = jnp.zeros((H * W, Cp), jnp.float32)
    for k in range(9):                                       # static unroll
        dy, dx = k // 3, k % 3
        tap = t1p_ref[dy:dy + H, dx:dx + W, :].reshape(H * W, Cp)
        acc = acc + jnp.dot(tap.astype(jnp.bfloat16), w2_ref[k],
                            preferred_element_type=jnp.float32)
    t2 = jnp.maximum(acc + b2_ref[...], 0.0).astype(jnp.bfloat16)

    # ---- conv3 (1x1) + bias (module returns before residual add / ReLU) ---
    y = jnp.dot(t2, w3_ref[...], preferred_element_type=jnp.float32)
    y = y + b3_ref[...]
    o_ref[0] = y.reshape(H, W, Coutp).astype(o_ref.dtype)


# ------------------------------ module glue --------------------------------

def fold_bn(gamma, beta, mean, var):
    scale = gamma / jnp.sqrt(var + EPS)
    bias = beta - mean * scale
    return scale, bias


def bottleneck_forward(x_nchw, params):
    """Bottleneck.forward (stride=1, downsample=None): returns (out, residual)."""
    # TODO(synk): stride>1 / projection-downsample branch not implemented
    # (module defaults stride=1, downsample=None, which this reproduces).
    # TODO(synk): for very large H*W feature maps, tile rows with a +-1-row
    # halo instead of holding the whole image in VMEM per grid step.
    N, cin, H, W = x_nchw.shape
    planes = params["w1"].shape[1]
    cout = params["w3"].shape[1]
    Cp = _round_up(planes)
    Coutp = _round_up(cout)

    s1, b1 = fold_bn(*params["bn1"])
    s2, b2 = fold_bn(*params["bn2"])
    s3, b3 = fold_bn(*params["bn3"])

    # Fold BN scale into the conv weights (f32), zero-pad channel dims to lane
    # multiples, then cast the weights to bf16 for the MXU.
    w1 = params["w1"] * s1[None, :]                                  # (cin, planes)
    w2 = params["w2"].reshape(9, planes, planes) * s2[None, None, :]  # (9, p, p)
    w3 = params["w3"] * s3[None, :]                                  # (planes, cout)

    w1p = jnp.zeros((cin, Cp), jnp.float32).at[:, :planes].set(w1).astype(jnp.bfloat16)
    w2p = jnp.zeros((9, Cp, Cp), jnp.float32).at[:, :planes, :planes].set(w2).astype(jnp.bfloat16)
    w3p = jnp.zeros((Cp, Coutp), jnp.float32).at[:planes, :cout].set(w3).astype(jnp.bfloat16)
    b1p = jnp.zeros((1, Cp), jnp.float32).at[0, :planes].set(b1)
    b2p = jnp.zeros((1, Cp), jnp.float32).at[0, :planes].set(b2)
    b3p = jnp.zeros((1, Coutp), jnp.float32).at[0, :cout].set(b3)

    # NCHW -> NHWC, bf16 activations (halves activation DMA bytes).
    x_nhwc = jnp.transpose(x_nchw, (0, 2, 3, 1)).astype(jnp.bfloat16)

    out_p = pl.pallas_call(
        _bottleneck_kernel,
        out_shape=jax.ShapeDtypeStruct((N, H, W, Coutp), jnp.float32),
        grid=(N,),
        in_specs=[
            pl.BlockSpec((1, H, W, cin), lambda n: (n, 0, 0, 0)),
            pl.BlockSpec((cin, Cp), lambda n: (0, 0)),
            pl.BlockSpec((1, Cp), lambda n: (0, 0)),
            pl.BlockSpec((9, Cp, Cp), lambda n: (0, 0, 0)),
            pl.BlockSpec((1, Cp), lambda n: (0, 0)),
            pl.BlockSpec((Cp, Coutp), lambda n: (0, 0)),
            pl.BlockSpec((1, Coutp), lambda n: (0, 0)),
        ],
        out_specs=pl.BlockSpec((1, H, W, Coutp), lambda n: (n, 0, 0, 0)),
        scratch_shapes=[pltpu.VMEM((H + 2, W + 2, Cp), jnp.float32)],
        compiler_params=pltpu.CompilerParams(
            dimension_semantics=("parallel",),        # batch sharded on v7x 2 TCs
            vmem_limit_bytes=48 * 1024 * 1024,        # headroom, < v7x 64 MiB
        ),
    )(x_nhwc, w1p, b1p, w2p, b2p, w3p, b3p)

    out = jnp.transpose(out_p[..., :cout], (0, 3, 1, 2))   # strip pad, back to NCHW
    residual = x_nchw                                       # downsample is None
    return out, residual


# ------------------------------ reference ----------------------------------

def ref_bottleneck(x_nchw, params):
    def conv(x, w_oihw, pad):
        return jax.lax.conv_general_dilated(
            x, w_oihw, window_strides=(1, 1),
            padding=[(pad, pad), (pad, pad)],
            dimension_numbers=("NCHW", "OIHW", "NCHW"),
            precision=jax.lax.Precision.HIGHEST)

    def bn(x, g, b, m, v):
        inv = g / jnp.sqrt(v + EPS)
        return x * inv[None, :, None, None] + (b - m * inv)[None, :, None, None]

    w1 = params["w1"].T[:, :, None, None]              # OIHW
    w2 = jnp.transpose(params["w2"], (3, 2, 0, 1))     # HWIO -> OIHW
    w3 = params["w3"].T[:, :, None, None]
    out = jax.nn.relu(bn(conv(x_nchw, w1, 0), *params["bn1"]))
    out = jax.nn.relu(bn(conv(out, w2, 1), *params["bn2"]))
    out = bn(conv(out, w3, 0), *params["bn3"])
    return out, x_nchw


# -------------------------------- main --------------------------------------

if __name__ == "__main__":
    N, inplanes, planes, H, W = 2, 16, 8, 16, 16      # expansion = 4 -> cout = 32
    key = jax.random.PRNGKey(0)
    ks = jax.random.split(key, 8)

    def bn_params(k, c):
        k1, k2, k3, k4 = jax.random.split(k, 4)
        gamma = 1.0 + 0.1 * jax.random.normal(k1, (c,), jnp.float32)
        beta = 0.1 * jax.random.normal(k2, (c,), jnp.float32)
        mean = 0.1 * jax.random.normal(k3, (c,), jnp.float32)
        var = 1.0 + 0.1 * jnp.abs(jax.random.normal(k4, (c,), jnp.float32))
        return (gamma, beta, mean, var)

    params = {
        "w1": 0.1 * jax.random.normal(ks[0], (inplanes, planes), jnp.float32),
        "w2": 0.1 * jax.random.normal(ks[1], (3, 3, planes, planes), jnp.float32),
        "w3": 0.1 * jax.random.normal(ks[2], (planes, planes * 4), jnp.float32),
        "bn1": bn_params(ks[3], planes),
        "bn2": bn_params(ks[4], planes),
        "bn3": bn_params(ks[5], planes * 4),
    }
    x = jax.random.normal(ks[6], (N, inplanes, H, W), jnp.float32)

    fwd = jax.jit(bottleneck_forward)
    out, residual = fwd(x, params)
    jax.block_until_ready((out, residual))

    ref_out, ref_res = ref_bottleneck(x, params)
    assert out.shape == (N, planes * 4, H, W), out.shape
    assert residual.shape == x.shape
    err = float(jnp.max(jnp.abs(out - ref_out)))
    assert err < 3e-2, f"max abs err {err}"          # bf16 MXU inputs vs f32 ref
    assert float(jnp.max(jnp.abs(residual - ref_res))) == 0.0
    print("KERNEL_OK")
</pallas_src>

<mosaic_0001>
module attributes {stable_mosaic.version = 11 : i64} {
  func.func @_bottleneck_kernel(%arg0: i32, %arg1: memref<1x16x16x16xbf16, #tpu.memory_space<vmem>>, %arg2: memref<16x128xbf16, #tpu.memory_space<vmem>>, %arg3: memref<1x128xf32, #tpu.memory_space<vmem>>, %arg4: memref<9x128x128xbf16, #tpu.memory_space<vmem>>, %arg5: memref<1x128xf32, #tpu.memory_space<vmem>>, %arg6: memref<128x128xbf16, #tpu.memory_space<vmem>>, %arg7: memref<1x128xf32, #tpu.memory_space<vmem>>, %arg8: memref<1x16x16x128xf32, #tpu.memory_space<vmem>>, %arg9: memref<18x18x128xf32, #tpu.memory_space<vmem>>) attributes {dimension_semantics = [#tpu.dimension_semantics<parallel>], iteration_bounds = array<i64: 2>, scalar_prefetch = 0 : i64, scratch_operands = 1 : i64, tpu.core_type = #tpu.core_type<tc>, window_params = [{transform_indices = @transform_0, window_bounds = array<i64: 1, 16, 16, 16>}, {pipeline_mode = #tpu.pipeline_mode<synchronous>, transform_indices = @transform_1, window_bounds = array<i64: 16, 128>}, {pipeline_mode = #tpu.pipeline_mode<synchronous>, transform_indices = @transform_2, window_bounds = array<i64: 1, 128>}, {pipeline_mode = #tpu.pipeline_mode<synchronous>, transform_indices = @transform_3, window_bounds = array<i64: 9, 128, 128>}, {pipeline_mode = #tpu.pipeline_mode<synchronous>, transform_indices = @transform_4, window_bounds = array<i64: 1, 128>}, {pipeline_mode = #tpu.pipeline_mode<synchronous>, transform_indices = @transform_5, window_bounds = array<i64: 128, 128>}, {pipeline_mode = #tpu.pipeline_mode<synchronous>, transform_indices = @transform_6, window_bounds = array<i64: 1, 128>}, {transform_indices = @transform_7, window_bounds = array<i64: 1, 16, 16, 128>}]} {
    %c0 = arith.constant 0 : index
    %c0_0 = arith.constant 0 : index
    %c0_1 = arith.constant 0 : index
    %c0_2 = arith.constant 0 : index
    %0 = vector.load %arg1[%c0, %c0_0, %c0_1, %c0_2] : memref<1x16x16x16xbf16, #tpu.memory_space<vmem>>, vector<1x16x16x16xbf16>
    %1 = vector.shape_cast %0 : vector<1x16x16x16xbf16> to vector<16x16x16xbf16>
    %2 = vector.shape_cast %1 : vector<16x16x16xbf16> to vector<256x16xbf16>
    %c0_3 = arith.constant 0 : index
    %c0_4 = arith.constant 0 : index
    %3 = vector.load %arg2[%c0_3, %c0_4] : memref<16x128xbf16, #tpu.memory_space<vmem>>, vector<16x128xbf16>
    %cst = arith.constant dense<0.000000e+00> : vector<256x128xf32>
    %4 = tpu.matmul %2, %3, %cst {dimension_numbers = #tpu.dot_dimension_numbers<[1], [0], [0], [1], [0, 0, 1, 1], [], []>} : vector<256x16xbf16>, vector<16x128xbf16>, vector<256x128xf32> -> vector<256x128xf32>
    %c0_5 = arith.constant 0 : index
    %c0_6 = arith.constant 0 : index
    %5 = vector.load %arg3[%c0_5, %c0_6] : memref<1x128xf32, #tpu.memory_space<vmem>>, vector<1x128xf32>
    %6 = vector.broadcast %5 : vector<1x128xf32> to vector<256x128xf32>
    %7 = arith.addf %4, %6 : vector<256x128xf32>
    %cst_7 = arith.constant 0.000000e+00 : f32
    %8 = vector.broadcast %cst_7 : f32 to vector<256x128xf32>
    %9 = arith.maximumf %7, %8 : vector<256x128xf32>
    %cst_8 = arith.constant 0.000000e+00 : f32
    %10 = vector.broadcast %cst_8 : f32 to vector<18x18x128xf32>
    %c0_9 = arith.constant 0 : index
    %c0_10 = arith.constant 0 : index
    %c0_11 = arith.constant 0 : index
    %11 = vector.load %arg9[%c0_9, %c0_10, %c0_11] : memref<18x18x128xf32, #tpu.memory_space<vmem>>, vector<18x18x128xf32>
    tpu.vector_store %arg9[%c0_9, %c0_10, %c0_11], %10 {strides = array<i32>} : memref<18x18x128xf32, #tpu.memory_space<vmem>>, vector<18x18x128xf32>,
    %12 = vector.shape_cast %9 : vector<256x128xf32> to vector<16x16x128xf32>
    %c1 = arith.constant 1 : index
    %c1_12 = arith.constant 1 : index
    %c0_13 = arith.constant 0 : index
    %13 = vector.load %arg9[%c1, %c1_12, %c0_13] : memref<18x18x128xf32, #tpu.memory_space<vmem>>, vector<16x16x128xf32>
    tpu.vector_store %arg9[%c1, %c1_12, %c0_13], %12 {strides = array<i32>} : memref<18x18x128xf32, #tpu.memory_space<vmem>>, vector<16x16x128xf32>,
    %cst_14 = arith.constant 0.000000e+00 : f32
    %14 = vector.broadcast %cst_14 : f32 to vector<256x128xf32>
    %c0_15 = arith.constant 0 : index
    %c0_16 = arith.constant 0 : index
    %c0_17 = arith.constant 0 : index
    %15 = vector.load %arg9[%c0_15, %c0_16, %c0_17] : memref<18x18x128xf32, #tpu.memory_space<vmem>>, vector<16x16x128xf32>
    %16 = vector.shape_cast %15 : vector<16x16x128xf32> to vector<256x128xf32>
    %17 = arith.truncf %16 : vector<256x128xf32> to vector<256x128xbf16>
    %c0_18 = arith.constant 0 : index
    %c0_19 = arith.constant 0 : index
    %c0_20 = arith.constant 0 : index
    %18 = vector.load %arg4[%c0_18, %c0_19, %c0_20] : memref<9x128x128xbf16, #tpu.memory_space<vmem>>, vector<1x128x128xbf16>
    %19 = vector.shape_cast %18 : vector<1x128x128xbf16> to vector<128x128xbf16>
    %cst_21 = arith.constant dense<0.000000e+00> : vector<256x128xf32>
    %20 = tpu.matmul %17, %19, %cst_21 {dimension_numbers = #tpu.dot_dimension_numbers<[1], [0], [0], [1], [0, 0, 1, 1], [], []>} : vector<256x128xbf16>, vector<128x128xbf16>, vector<256x128xf32> -> vector<256x128xf32>
    %21 = arith.addf %14, %20 : vector<256x128xf32>
    %c0_22 = arith.constant 0 : index
    %c1_23 = arith.constant 1 : index
    %c0_24 = arith.constant 0 : index
    %22 = vector.load %arg9[%c0_22, %c1_23, %c0_24] : memref<18x18x128xf32, #tpu.memory_space<vmem>>, vector<16x16x128xf32>
    %23 = vector.shape_cast %22 : vector<16x16x128xf32> to vector<256x128xf32>
    %24 = arith.truncf %23 : vector<256x128xf32> to vector<256x128xbf16>
    %c1_25 = arith.constant 1 : index
    %c0_26 = arith.constant 0 : index
    %c0_27 = arith.constant 0 : index
    %25 = vector.load %arg4[%c1_25, %c0_26, %c0_27] : memref<9x128x128xbf16, #tpu.memory_space<vmem>>, vector<1x128x128xbf16>
    %26 = vector.shape_cast %25 : vector<1x128x128xbf16> to vector<128x128xbf16>
    %cst_28 = arith.constant dense<0.000000e+00> : vector<256x128xf32>
    %27 = tpu.matmul %24, %26, %cst_28 {dimension_numbers = #tpu.dot_dimension_numbers<[1], [0], [0], [1], [0, 0, 1, 1], [], []>} : vector<256x128xbf16>, vector<128x128xbf16>, vector<256x128xf32> -> vector<256x128xf32>
    %28 = arith.addf %21, %27 : vector<256x128xf32>
    %c0_29 = arith.constant 0 : index
    %c2 = arith.constant 2 : index
    %c0_30 = arith.constant 0 : index
    %29 = vector.load %arg9[%c0_29, %c2, %c0_30] : memref<18x18x128xf32, #tpu.memory_space<vmem>>, vector<16x16x128xf32>
    %30 = vector.shape_cast %29 : vector<16x16x128xf32> to vector<256x128xf32>
    %31 = arith.truncf %30 : vector<256x128xf32> to vector<256x128xbf16>
    %c2_31 = arith.constant 2 : index
    %c0_32 = arith.constant 0 : index
    %c0_33 = arith.constant 0 : index
    %32 = vector.load %arg4[%c2_31, %c0_32, %c0_33] : memref<9x128x128xbf16, #tpu.memory_space<vmem>>, vector<1x128x128xbf16>
    %33 = vector.shape_cast %32 : vector<1x128x128xbf16> to vector<128x128xbf16>
    %cst_34 = arith.constant dense<0.000000e+00> : vector<256x128xf32>
    %34 = tpu.matmul %31, %33, %cst_34 {dimension_numbers = #tpu.dot_dimension_numbers<[1], [0], [0], [1], [0, 0, 1, 1], [], []>} : vector<256x128xbf16>, vector<128x128xbf16>, vector<256x128xf32> -> vector<256x128xf32>
    %35 = arith.addf %28, %34 : vector<256x128xf32>
    %c1_35 = arith.constant 1 : index
    %c0_36 = arith.constant 0 : index
    %c0_37 = arith.constant 0 : index
    %36 = vector.load %arg9[%c1_35, %c0_36, %c0_37] : memref<18x18x128xf32, #tpu.memory_space<vmem>>, vector<16x16x128xf32>
    %37 = vector.shape_cast %36 : vector<16x16x128xf32> to vector<256x128xf32>
    %38 = arith.truncf %37 : vector<256x128xf32> to vector<256x128xbf16>
    %c3 = arith.constant 3 : index
    %c0_38 = arith.constant 0 : index
    %c0_39 = arith.constant 0 : index
    %39 = vector.load %arg4[%c3, %c0_38, %c0_39] : memref<9x128x128xbf16, #tpu.memory_space<vmem>>, vector<1x128x128xbf16>
    %40 = vector.shape_cast %39 : vector<1x128x128xbf16> to vector<128x128xbf16>
    %cst_40 = arith.constant dense<0.000000e+00> : vector<256x128xf32>
    %41 = tpu.matmul %38, %40, %cst_40 {dimension_numbers = #tpu.dot_dimension_numbers<[1], [0], [0], [1], [0, 0, 1, 1], [], []>} : vector<256x128xbf16>, vector<128x128xbf16>, vector<256x128xf32> -> vector<256x128xf32>
    %42 = arith.addf %35, %41 : vector<256x128xf32>
    %c1_41 = arith.constant 1 : index
    %c1_42 = arith.constant 1 : index
    %c0_43 = arith.constant 0 : index
    %43 = vector.load %arg9[%c1_41, %c1_42, %c0_43] : memref<18x18x128xf32, #tpu.memory_space<vmem>>, vector<16x16x128xf32>
    %44 = vector.shape_cast %43 : vector<16x16x128xf32> to vector<256x128xf32>
    %45 = arith.truncf %44 : vector<256x128xf32> to vector<256x128xbf16>
    %c4 = arith.constant 4 : index
    %c0_44 = arith.constant 0 : index
    %c0_45 = arith.constant 0 : index
    %46 = vector.load %arg4[%c4, %c0_44, %c0_45] : memref<9x128x128xbf16, #tpu.memory_space<vmem>>, vector<1x128x128xbf16>
    %47 = vector.shape_cast %46 : vector<1x128x128xbf16> to vector<128x128xbf16>
    %cst_46 = arith.constant dense<0.000000e+00> : vector<256x128xf32>
    %48 = tpu.matmul %45, %47, %cst_46 {dimension_numbers = #tpu.dot_dimension_numbers<[1], [0], [0], [1], [0, 0, 1, 1], [], []>} : vector<256x128xbf16>, vector<128x128xbf16>, vector<256x128xf32> -> vector<256x128xf32>
    %49 = arith.addf %42, %48 : vector<256x128xf32>
    %c1_47 = arith.constant 1 : index
    %c2_48 = arith.constant 2 : index
    %c0_49 = arith.constant 0 : index
    %50 = vector.load %arg9[%c1_47, %c2_48, %c0_49] : memref<18x18x128xf32, #tpu.memory_space<vmem>>, vector<16x16x128xf32>
    %51 = vector.shape_cast %50 : vector<16x16x128xf32> to vector<256x128xf32>
    %52 = arith.truncf %51 : vector<256x128xf32> to vector<256x128xbf16>
    %c5 = arith.constant 5 : index
    %c0_50 = arith.constant 0 : index
    %c0_51 = arith.constant 0 : index
    %53 = vector.load %arg4[%c5, %c0_50, %c0_51] : memref<9x128x128xbf16, #tpu.memory_space<vmem>>, vector<1x128x128xbf16>
    %54 = vector.shape_cast %53 : vector<1x128x128xbf16> to vector<128x128xbf16>
    %cst_52 = arith.constant dense<0.000000e+00> : vector<256x128xf32>
    %55 = tpu.matmul %52, %54, %cst_52 {dimension_numbers = #tpu.dot_dimension_numbers<[1], [0], [0], [1], [0, 0, 1, 1], [], []>} : vector<256x128xbf16>, vector<128x128xbf16>, vector<256x128xf32> -> vector<256x128xf32>
    %56 = arith.addf %49, %55 : vector<256x128xf32>
    %c2_53 = arith.constant 2 : index
    %c0_54 = arith.constant 0 : index
    %c0_55 = arith.constant 0 : index
    %57 = vector.load %arg9[%c2_53, %c0_54, %c0_55] : memref<18x18x128xf32, #tpu.memory_space<vmem>>, vector<16x16x128xf32>
    %58 = vector.shape_cast %57 : vector<16x16x128xf32> to vector<256x128xf32>
    %59 = arith.truncf %58 : vector<256x128xf32> to vector<256x128xbf16>
    %c6 = arith.constant 6 : index
    %c0_56 = arith.constant 0 : index
    %c0_57 = arith.constant 0 : index
    %60 = vector.load %arg4[%c6, %c0_56, %c0_57] : memref<9x128x128xbf16, #tpu.memory_space<vmem>>, vector<1x128x128xbf16>
    %61 = vector.shape_cast %60 : vector<1x128x128xbf16> to vector<128x128xbf16>
    %cst_58 = arith.constant dense<0.000000e+00> : vector<256x128xf32>
    %62 = tpu.matmul %59, %61, %cst_58 {dimension_numbers = #tpu.dot_dimension_numbers<[1], [0], [0], [1], [0, 0, 1, 1], [], []>} : vector<256x128xbf16>, vector<128x128xbf16>, vector<256x128xf32> -> vector<256x128xf32>
    %63 = arith.addf %56, %62 : vector<256x128xf32>
    %c2_59 = arith.constant 2 : index
    %c1_60 = arith.constant 1 : index
    %c0_61 = arith.constant 0 : index
    %64 = vector.load %arg9[%c2_59, %c1_60, %c0_61] : memref<18x18x128xf32, #tpu.memory_space<vmem>>, vector<16x16x128xf32>
    %65 = vector.shape_cast %64 : vector<16x16x128xf32> to vector<256x128xf32>
    %66 = arith.truncf %65 : vector<256x128xf32> to vector<256x128xbf16>
    %c7 = arith.constant 7 : index
    %c0_62 = arith.constant 0 : index
    %c0_63 = arith.constant 0 : index
    %67 = vector.load %arg4[%c7, %c0_62, %c0_63] : memref<9x128x128xbf16, #tpu.memory_space<vmem>>, vector<1x128x128xbf16>
    %68 = vector.shape_cast %67 : vector<1x128x128xbf16> to vector<128x128xbf16>
    %cst_64 = arith.constant dense<0.000000e+00> : vector<256x128xf32>
    %69 = tpu.matmul %66, %68, %cst_64 {dimension_numbers = #tpu.dot_dimension_numbers<[1], [0], [0], [1], [0, 0, 1, 1], [], []>} : vector<256x128xbf16>, vector<128x128xbf16>, vector<256x128xf32> -> vector<256x128xf32>
    %70 = arith.addf %63, %69 : vector<256x128xf32>
    %c2_65 = arith.constant 2 : index
    %c2_66 = arith.constant 2 : index
    %c0_67 = arith.constant 0 : index
    %71 = vector.load %arg9[%c2_65, %c2_66, %c0_67] : memref<18x18x128xf32, #tpu.memory_space<vmem>>, vector<16x16x128xf32>
    %72 = vector.shape_cast %71 : vector<16x16x128xf32> to vector<256x128xf32>
    %73 = arith.truncf %72 : vector<256x128xf32> to vector<256x128xbf16>
    %c8 = arith.constant 8 : index
    %c0_68 = arith.constant 0 : index
    %c0_69 = arith.constant 0 : index
    %74 = vector.load %arg4[%c8, %c0_68, %c0_69] : memref<9x128x128xbf16, #tpu.memory_space<vmem>>, vector<1x128x128xbf16>
    %75 = vector.shape_cast %74 : vector<1x128x128xbf16> to vector<128x128xbf16>
    %cst_70 = arith.constant dense<0.000000e+00> : vector<256x128xf32>
    %76 = tpu.matmul %73, %75, %cst_70 {dimension_numbers = #tpu.dot_dimension_numbers<[1], [0], [0], [1], [0, 0, 1, 1], [], []>} : vector<256x128xbf16>, vector<128x128xbf16>, vector<256x128xf32> -> vector<256x128xf32>
    %77 = arith.addf %70, %76 : vector<256x128xf32>
    %c0_71 = arith.constant 0 : index
    %c0_72 = arith.constant 0 : index
    %78 = vector.load %arg5[%c0_71, %c0_72] : memref<1x128xf32, #tpu.memory_space<vmem>>, vector<1x128xf32>
    %79 = vector.broadcast %78 : vector<1x128xf32> to vector<256x128xf32>
    %80 = arith.addf %77, %79 : vector<256x128xf32>
    %cst_73 = arith.constant 0.000000e+00 : f32
    %81 = vector.broadcast %cst_73 : f32 to vector<256x128xf32>
    %82 = arith.maximumf %80, %81 : vector<256x128xf32>
    %83 = arith.truncf %82 : vector<256x128xf32> to vector<256x128xbf16>
    %c0_74 = arith.constant 0 : index
    %c0_75 = arith.constant 0 : index
    %84 = vector.load %arg6[%c0_74, %c0_75] : memref<128x128xbf16, #tpu.memory_space<vmem>>, vector<128x128xbf16>
    %cst_76 = arith.constant dense<0.000000e+00> : vector<256x128xf32>
    %85 = tpu.matmul %83, %84, %cst_76 {dimension_numbers = #tpu.dot_dimension_numbers<[1], [0], [0], [1], [0, 0, 1, 1], [], []>} : vector<256x128xbf16>, vector<128x128xbf16>, vector<256x128xf32> -> vector<256x128xf32>
    %c0_77 = arith.constant 0 : index
    %c0_78 = arith.constant 0 : index
    %86 = vector.load %arg7[%c0_77, %c0_78] : memref<1x128xf32, #tpu.memory_space<vmem>>, vector<1x128xf32>
    %87 = vector.broadcast %86 : vector<1x128xf32> to vector<256x128xf32>
    %88 = arith.addf %85, %87 : vector<256x128xf32>
    %89 = vector.shape_cast %88 : vector<256x128xf32> to vector<16x16x128xf32>
    %c0_79 = arith.constant 0 : index
    %c0_80 = arith.constant 0 : index
    %c0_81 = arith.constant 0 : index
    %c0_82 = arith.constant 0 : index
    %90 = vector.load %arg8[%c0_79, %c0_80, %c0_81, %c0_82] : memref<1x16x16x128xf32, #tpu.memory_space<vmem>>, vector<1x16x16x128xf32>
    %91 = vector.shape_cast %90 : vector<1x16x16x128xf32> to vector<16x16x128xf32>
    %92 = vector.shape_cast %89 : vector<16x16x128xf32> to vector<1x16x16x128xf32>
    tpu.vector_store %arg8[%c0_79, %c0_80, %c0_81, %c0_82], %92 {strides = array<i32>} : memref<1x16x16x128xf32, #tpu.memory_space<vmem>>, vector<1x16x16x128xf32>,
    return
  }
  func.func @transform_0(%arg0: i32) -> (i32, i32, i32, i32) {
    %c0_i32 = arith.constant 0 : i32
    %c0_i32_0 = arith.constant 0 : i32
    %c0_i32_1 = arith.constant 0 : i32
    %c0_i32_2 = arith.constant 0 : i32
    return %arg0, %c0_i32, %c0_i32_0, %c0_i32_1 : i32, i32, i32, i32
  }
  func.func @transform_1(%arg0: i32) -> (i32, i32) {
    %c0_i32 = arith.constant 0 : i32
    %c0_i32_0 = arith.constant 0 : i32
    %c0_i32_1 = arith.constant 0 : i32
    return %c0_i32, %c0_i32_0 : i32, i32
  }
  func.func @transform_2(%arg0: i32) -> (i32, i32) {
    %c0_i32 = arith.constant 0 : i32
    %c0_i32_0 = arith.constant 0 : i32
    %c0_i32_1 = arith.constant 0 : i32
    return %c0_i32, %c0_i32_0 : i32, i32
  }
  func.func @transform_3(%arg0: i32) -> (i32, i32, i32) {
    %c0_i32 = arith.constant 0 : i32
    %c0_i32_0 = arith.constant 0 : i32
    %c0_i32_1 = arith.constant 0 : i32
    %c0_i32_2 = arith.constant 0 : i32
    return %c0_i32, %c0_i32_0, %c0_i32_1 : i32, i32, i32
  }
  func.func @transform_4(%arg0: i32) -> (i32, i32) {
    %c0_i32 = arith.constant 0 : i32
    %c0_i32_0 = arith.constant 0 : i32
    %c0_i32_1 = arith.constant 0 : i32
    return %c0_i32, %c0_i32_0 : i32, i32
  }
  func.func @transform_5(%arg0: i32) -> (i32, i32) {
    %c0_i32 = arith.constant 0 : i32
    %c0_i32_0 = arith.constant 0 : i32
    %c0_i32_1 = arith.constant 0 : i32
    return %c0_i32, %c0_i32_0 : i32, i32
  }
  func.func @transform_6(%arg0: i32) -> (i32, i32) {
    %c0_i32 = arith.constant 0 : i32
    %c0_i32_0 = arith.constant 0 : i32
    %c0_i32_1 = arith.constant 0 : i32
    return %c0_i32, %c0_i32_0 : i32, i32
  }
  func.func @transform_7(%arg0: i32) -> (i32, i32, i32, i32) {
    %c0_i32 = arith.constant 0 : i32
    %c0_i32_0 = arith.constant 0 : i32
    %c0_i32_1 = arith.constant 0 : i32
    %c0_i32_2 = arith.constant 0 : i32
    return %arg0, %c0_i32, %c0_i32_0, %c0_i32_1 : i32, i32, i32, i32
  }
}

</mosaic_0001>

<llo_original>
// kernel: bottleneck_forward.1
$region0: #{bottleneck_forward.1}
  #allocation0 [shape = 'u32[]', space=smem, size = 0x4, offset = 0x4, fixed_abs, tag = 'smem constant byte address 0x4 - core index']
  #allocation1 [shape = 'u32[144,128]{1,0:T(1,128)}', space=vmem, size = 0x12000, scoped, tag = 'internal scratch']
  #allocation2 [shape = 'f32[18,18,128]{2,1,0:T(8,128)}', space=vmem, size = 0x36000, scoped, tag = 'scratch operand']
  %s0 = inlined_call_operand.vmem [shape: bf16[2,16,16,16], index: 0, kind: input, shape index: {}]
  %s1 = inlined_call_operand.vmem [shape: bf16[16,128], index: 1, kind: input, shape index: {}]
  %s2 = inlined_call_operand.vmem [shape: f32[1,128], index: 2, kind: input, shape index: {}]
  %s3 = inlined_call_operand.vmem [shape: bf16[9,128,128], index: 3, kind: input, shape index: {}]
  %s4 = inlined_call_operand.vmem [shape: f32[1,128], index: 4, kind: input, shape index: {}]
  %s5 = inlined_call_operand.vmem [shape: bf16[128,128], index: 5, kind: input, shape index: {}]
  %s6 = inlined_call_operand.vmem [shape: f32[1,128], index: 6, kind: input, shape index: {}]
  %s7 = inlined_call_operand.vmem [shape: f32[2,16,16,128], index: 7, kind: output, shape index: {}]
  %s8 = sld [smem:[#allocation0]]
  $region61: #{bottleneck_forward.1} parent=0
    _
  %s10 = ssub.s32 1, %s8
  %s11 = scalar_select 0, %s10, %s8
  loop: start=0, step=1, limit=4
  $region2: #{bottleneck_forward.1} parent=0 // loop_pre_header
    _
  $region3: #{bottleneck_forward.1} parent=0 // loop_header
    %s13 = sphi 0, %s17
    %p14 = scmp.ge.s32.totalorder %s13, 4
    %s23 = sphi 0, %s25
    %s26 = sphi 0, %s23
    %s27 = sphi 0, %s26
    %s43 = sphi 0, %s27
    %s47 = sphi 0, %s47
    %s49 = sphi 0, %s47
    %s50 = sphi 0, %s49
    %s64 = sphi 0, %s50
    %s68 = sphi 0, %s68
    %s70 = sphi 0, %s68
    %s71 = sphi 0, %s70
    %s85 = sphi 0, %s71
    %s89 = sphi 0, %s89
    %s91 = sphi 0, %s89
    %s92 = sphi 0, %s91
    %s106 = sphi 0, %s92
    %s110 = sphi 0, %s110
    %s112 = sphi 0, %s110
    %s113 = sphi 0, %s112
    %s127 = sphi 0, %s113
    %s131 = sphi 0, %s131
    %s133 = sphi 0, %s131
    %s134 = sphi 0, %s133
    %s148 = sphi 0, %s134
    %s152 = sphi 0, %s152
    %s154 = sphi 0, %s152
    %s155 = sphi 0, %s154
    %s169 = sphi 0, %s155
    %s175 = sphi 0, %s177
    %s178 = sphi 0, %s175
    %s179 = sphi 0, %s178
    %s195 = sphi 0, %s179
  $region4: #{bottleneck_forward.1} parent=0 // loop_header_branch
    %16 = sbr.rel (%p14) target = $region8
  $region5: #{bottleneck_forward.1} parent=0 // loop_body
    %s18 = ssub.s32 %s13, 1
    %s19 = ssub.s32 %s13, 2
    %s20 = sadd.s32 %s13, 1
    %s21 = ssub.s32 %s13, %s20
    %p22 = scmp.eq.s32.totalorder %s21, 0
    %s24 = sadd.s32 %s23, 1
    %s25 = scalar_select %p22, %s23, %s24
    %p28 = pneg %p22
    %p29 = scmp.eq.s32.totalorder %s13, 1
    %p30 = por %p28, %p29
    %p31 = scmp.ne.s32.totalorder %s23, %s26
    %p32 = scmp.eq.s32.totalorder %s13, 0
    %p33 = por %p31, %p32
    %p34 = scmp.ne.s32.totalorder %s23, %s26
    %p35 = scmp.eq.s32.totalorder %s18, 1
    %p36 = por %p34, %p35
    %p37 = scmp.ne.s32.totalorder %s26, %s27
    %p38 = scmp.eq.s32.totalorder %s18, 0
    %p39 = por %p37, %p38
    %p40 = scmp.ne.s32.totalorder %s26, %s27
    %p41 = scmp.eq.s32.totalorder %s19, 1
    %p42 = por %p40, %p41
    %p44 = scmp.ne.s32.totalorder %s27, %s43
    %p45 = scmp.eq.s32.totalorder %s19, 0
    %p46 = por %p44, %p45
    %s48 = sadd.s32 %s47, 1
    %p51 = scmp.eq.s32.totalorder %s13, 1
    %p52 = scmp.ne.s32.totalorder %s47, %s49
    %p53 = scmp.eq.s32.totalorder %s13, 0
    %p54 = por %p52, %p53
    %p55 = scmp.ne.s32.totalorder %s47, %s49
    %p56 = scmp.eq.s32.totalorder %s18, 1
    %p57 = por %p55, %p56
    %p58 = scmp.ne.s32.totalorder %s49, %s50
    %p59 = scmp.eq.s32.totalorder %s18, 0
    %p60 = por %p58, %p59
    %p61 = scmp.ne.s32.totalorder %s49, %s50
    %p62 = scmp.eq.s32.totalorder %s19, 1
    %p63 = por %p61, %p62
    %p65 = scmp.ne.s32.totalorder %s50, %s64
    %p66 = scmp.eq.s32.totalorder %s19, 0
    %p67 = por %p65, %p66
    %s69 = sadd.s32 %s68, 1
    %p72 = scmp.eq.s32.totalorder %s13, 1
    %p73 = scmp.ne.s32.totalorder %s68, %s70
    %p74 = scmp.eq.s32.totalorder %s13, 0
    %p75 = por %p73, %p74
    %p76 = scmp.ne.s32.totalorder %s68, %s70
    %p77 = scmp.eq.s32.totalorder %s18, 1
    %p78 = por %p76, %p77
    %p79 = scmp.ne.s32.totalorder %s70, %s71
    %p80 = scmp.eq.s32.totalorder %s18, 0
    %p81 = por %p79, %p80
    %p82 = scmp.ne.s32.totalorder %s70, %s71
    %p83 = scmp.eq.s32.totalorder %s19, 1
    %p84 = por %p82, %p83
    %p86 = scmp.ne.s32.totalorder %s71, %s85
    %p87 = scmp.eq.s32.totalorder %s19, 0
    %p88 = por %p86, %p87
    %s90 = sadd.s32 %s89, 1
    %p93 = scmp.eq.s32.totalorder %s13, 1
    %p94 = scmp.ne.s32.totalorder %s89, %s91
    %p95 = scmp.eq.s32.totalorder %s13, 0
    %p96 = por %p94, %p95
    %p97 = scmp.ne.s32.totalorder %s89, %s91
    %p98 = scmp.eq.s32.totalorder %s18, 1
    %p99 = por %p97, %p98
    %p100 = scmp.ne.s32.totalorder %s91, %s92
    %p101 = scmp.eq.s32.totalorder %s18, 0
    %p102 = por %p100, %p101
    %p103 = scmp.ne.s32.totalorder %s91, %s92
    %p104 = scmp.eq.s32.totalorder %s19, 1
    %p105 = por %p103, %p104
    %p107 = scmp.ne.s32.totalorder %s92, %s106
    %p108 = scmp.eq.s32.totalorder %s19, 0
    %p109 = por %p107, %p108
    %s111 = sadd.s32 %s110, 1
    %p114 = scmp.eq.s32.totalorder %s13, 1
    %p115 = scmp.ne.s32.totalorder %s110, %s112
    %p116 = scmp.eq.s32.totalorder %s13, 0
    %p117 = por %p115, %p116
    %p118 = scmp.ne.s32.totalorder %s110, %s112
    %p119 = scmp.eq.s32.totalorder %s18, 1
    %p120 = por %p118, %p119
    %p121 = scmp.ne.s32.totalorder %s112, %s113
    %p122 = scmp.eq.s32.totalorder %s18, 0
    %p123 = por %p121, %p122
    %p124 = scmp.ne.s32.totalorder %s112, %s113
    %p125 = scmp.eq.s32.totalorder %s19, 1
    %p126 = por %p124, %p125
    %p128 = scmp.ne.s32.totalorder %s113, %s127
    %p129 = scmp.eq.s32.totalorder %s19, 0
    %p130 = por %p128, %p129
    %s132 = sadd.s32 %s131, 1
    %p135 = scmp.eq.s32.totalorder %s13, 1
    %p136 = scmp.ne.s32.totalorder %s131, %s133
    %p137 = scmp.eq.s32.totalorder %s13, 0
    %p138 = por %p136, %p137
    %p139 = scmp.ne.s32.totalorder %s131, %s133
    %p140 = scmp.eq.s32.totalorder %s18, 1
    %p141 = por %p139, %p140
    %p142 = scmp.ne.s32.totalorder %s133, %s134
    %p143 = scmp.eq.s32.totalorder %s18, 0
    %p144 = por %p142, %p143
    %p145 = scmp.ne.s32.totalorder %s133, %s134
    %p146 = scmp.eq.s32.totalorder %s19, 1
    %p147 = por %p145, %p146
    %p149 = scmp.ne.s32.totalorder %s134, %s148
    %p150 = scmp.eq.s32.totalorder %s19, 0
    %p151 = por %p149, %p150
    %s153 = sadd.s32 %s152, 1
    %p156 = scmp.eq.s32.totalorder %s13, 1
    %p157 = scmp.ne.s32.totalorder %s152, %s154
    %p158 = scmp.eq.s32.totalorder %s13, 0
    %p159 = por %p157, %p158
    %p160 = scmp.ne.s32.totalorder %s152, %s154
    %p161 = scmp.eq.s32.totalorder %s18, 1
    %p162 = por %p160, %p161
    %p163 = scmp.ne.s32.totalorder %s154, %s155
    %p164 = scmp.eq.s32.totalorder %s18, 0
    %p165 = por %p163, %p164
    %p166 = scmp.ne.s32.totalorder %s154, %s155
    %p167 = scmp.eq.s32.totalorder %s19, 1
    %p168 = por %p166, %p167
    %p170 = scmp.ne.s32.totalorder %s155, %s169
    %p171 = scmp.eq.s32.totalorder %s19, 0
    %p172 = por %p170, %p171
    %s173 = ssub.s32 %s13, %s20
    %p174 = scmp.eq.s32.totalorder %s173, 0
    %s176 = sadd.s32 %s175, 1
    %s177 = scalar_select %p174, %s175, %s176
    %p180 = pneg %p174
    %p181 = scmp.eq.s32.totalorder %s13, 1
    %p182 = por %p180, %p181
    %p183 = scmp.ne.s32.totalorder %s175, %s178
    %p184 = scmp.eq.s32.totalorder %s13, 0
    %p185 = por %p183, %p184
    %p186 = scmp.ne.s32.totalorder %s175, %s178
    %p187 = scmp.eq.s32.totalorder %s18, 1
    %p188 = por %p186, %p187
    %p189 = scmp.ne.s32.totalorder %s178, %s179
    %p190 = scmp.eq.s32.totalorder %s18, 0
    %p191 = por %p189, %p190
    %p192 = scmp.ne.s32.totalorder %s178, %s179
    %p193 = scmp.eq.s32.totalorder %s19, 1
    %p194 = por %p192, %p193
    %p196 = scmp.ne.s32.totalorder %s179, %s195
    %p197 = scmp.eq.s32.totalorder %s19, 0
    %p198 = por %p196, %p197
    %p199 = scmp.le.s32.totalorder 1, %s13
    %p200 = scmp.lt.s32.totalorder %s13, 3
    %p201 = pnand %p199, %p200
    %p202 = pneg %p201
    // Predicated region
    $region9: #{bottleneck_forward.1} parent=5 // pred_check
      _
    $region10: #{bottleneck_forward.1} parent=5 // pred_check_branch
      %204 = sbr.rel (%p201) target = $region12
    $region11: #{bottleneck_forward.1} parent=5 // pred_region
      %s205 = ssub.s32 %s13, 1
      // Predicated region
      $region13: #{bottleneck_forward.1} parent=11 // pred_check
        %p206 = pneg %p60
      $region14: #{bottleneck_forward.1} parent=11 // pred_check_branch
        %208 = sbr.rel (%p206) target = $region16
      $region15: #{bottleneck_forward.1} parent=11 // pred_region
        _
      $region16: #{bottleneck_forward.1} parent=11 // pred_fallthru
        _
      // Predicated region
      $region17: #{bottleneck_forward.1} parent=11 // pred_check
        %p209 = pneg %p81
      $region18: #{bottleneck_forward.1} parent=11 // pred_check_branch
        %211 = sbr.rel (%p209) target = $region20
      $region19: #{bottleneck_forward.1} parent=11 // pred_region
        _
      $region20: #{bottleneck_forward.1} parent=11 // pred_fallthru
        _
      // Predicated region
      $region21: #{bottleneck_forward.1} parent=11 // pred_check
        %p212 = pneg %p102
      $region22: #{bottleneck_forward.1} parent=11 // pred_check_branch
        %214 = sbr.rel (%p212) target = $region24
      $region23: #{bottleneck_forward.1} parent=11 // pred_region
        _
      $region24: #{bottleneck_forward.1} parent=11 // pred_fallthru
        _
      // Predicated region
      $region25: #{bottleneck_forward.1} parent=11 // pred_check
        %p215 = pneg %p123
      $region26: #{bottleneck_forward.1} parent=11 // pred_check_branch
        %217 = sbr.rel (%p215) target = $region28
      $region27: #{bottleneck_forward.1} parent=11 // pred_region
        _
      $region28: #{bottleneck_forward.1} parent=11 // pred_fallthru
        _
      // Predicated region
      $region29: #{bottleneck_forward.1} parent=11 // pred_check
        %p218 = pneg %p144
      $region30: #{bottleneck_forward.1} parent=11 // pred_check_branch
        %220 = sbr.rel (%p218) target = $region32
      $region31: #{bottleneck_forward.1} parent=11 // pred_region
        _
      $region32: #{bottleneck_forward.1} parent=11 // pred_fallthru
        _
      // Predicated region
      $region33: #{bottleneck_forward.1} parent=11 // pred_check
        %p221 = pneg %p165
      $region34: #{bottleneck_forward.1} parent=11 // pred_check_branch
        %223 = sbr.rel (%p221) target = $region36
      $region35: #{bottleneck_forward.1} parent=11 // pred_region
        _
      $region36: #{bottleneck_forward.1} parent=11 // pred_fallthru
        _
    $region12: #{bottleneck_forward.1} parent=5 // pred_fallthru
      _
    %p224 = scmp.lt.s32.totalorder %s13, 2
    // Predicated region
    $region37: #{bottleneck_forward.1} parent=5 // pred_check
      %p225 = pneg %p224
    $region38: #{bottleneck_forward.1} parent=5 // pred_check_branch
      %227 = sbr.rel (%p225) target = $region40
    $region39: #{bottleneck_forward.1} parent=5 // pred_region
      // Predicated region
      $region41: #{bottleneck_forward.1} parent=39 // pred_check
        %p228 = pneg %p33
      $region42: #{bottleneck_forward.1} parent=39 // pred_check_branch
        %230 = sbr.rel (%p228) target = $region44
      $region43: #{bottleneck_forward.1} parent=39 // pred_region
        %p231 = scmp.lt.s32.totalorder %s13, 1
        %s232 = scalar_select %p231, %s13, 1
        %s233 = smul.addr %s232, 32
        %s234 = smul.addr %s233, 4
        %s235 = scalar_lea.vmem %s0, %s234
      $region44: #{bottleneck_forward.1} parent=39 // pred_fallthru
        _
    $region40: #{bottleneck_forward.1} parent=5 // pred_fallthru
      _
    %p236 = scmp.le.s32.totalorder 1, %s13
    %p237 = scmp.lt.s32.totalorder %s13, 3
    %p238 = pnand %p236, %p237
    %p239 = pneg %p238
    // Predicated region
    $region45: #{bottleneck_forward.1} parent=5 // pred_check
      _
    $region46: #{bottleneck_forward.1} parent=5 // pred_check_branch
      %241 = sbr.rel (%p238) target = $region48
    $region47: #{bottleneck_forward.1} parent=5 // pred_region
      %s242 = ssub.s32 %s13, 1
      %p243 = scmp.lt.s32.totalorder %s18, 1
      %s244 = scalar_select %p243, %s18, 1
      %s245 = smul.addr %s244, 32
      %s246 = smul.addr %s245, 4
      %s247 = scalar_lea.vmem %s0, %s246
      %p248 = pneg %p39
      %p249 = pneg %p36
      %p250 = pneg %p60
      %p251 = pneg %p57
      %p252 = pneg %p81
      %p253 = pneg %p78
      %p254 = pneg %p102
      %p255 = pneg %p99
      %p256 = pneg %p123
      %p257 = pneg %p120
      %p258 = pneg %p144
      %p259 = pneg %p141
      %p260 = pneg %p165
      %p261 = pneg %p162
      %p262 = pneg %p191
      %p263 = pneg %p188
      %p264 = scmp.lt.s32.totalorder %s18, 1
      %s265 = scalar_select %p264, %s18, 1
      %s266 = smul.addr %s265, 32
      %s267 = smul.addr %s266, 8
      %s268 = scalar_lea.vmem %s7, %s267
      %p269 = scmp.lt.s32.totalorder %s18, 1
      %s270 = scalar_select %p269, %s18, 1
      %s271 = smul.addr %s270, 32
      %s272 = smul.addr %s271, 4
      %s273 = scalar_lea.vmem %s0, %s272
      %p274 = scmp.lt.s32.totalorder %s18, 1
      %s275 = scalar_select %p274, %s18, 1
      %s276 = smul.addr %s275, 32
      %s277 = smul.addr %s276, 8
      %s278 = scalar_lea.vmem %s7, %s277
      %v280 = vld [vmem:[%s273] sm:$0xf]
      %v281 = vld [vmem:[%s273 + $0x4] sm:$0xf]
      %v282 = vld [vmem:[%s273 + $0x8] sm:$0xf]
      %v283 = vld [vmem:[%s273 + $0xc] sm:$0xf]
      %v284 = vld [vmem:[%s273 + $0x10] sm:$0xf]
      %v285 = vld [vmem:[%s273 + $0x14] sm:$0xf]
      %v286 = vld [vmem:[%s273 + $0x18] sm:$0xf]
      %v287 = vld [vmem:[%s273 + $0x1c] sm:$0xf]
      %v288 = vld [vmem:[%s273 + $0x20] sm:$0xf]
      %v289 = vld [vmem:[%s273 + $0x24] sm:$0xf]
      %v290 = vld [vmem:[%s273 + $0x28] sm:$0xf]
      %v291 = vld [vmem:[%s273 + $0x2c] sm:$0xf]
      %v292 = vld [vmem:[%s273 + $0x30] sm:$0xf]
      %v293 = vld [vmem:[%s273 + $0x34] sm:$0xf]
      %v294 = vld [vmem:[%s273 + $0x38] sm:$0xf]
      %v295 = vld [vmem:[%s273 + $0x3c] sm:$0xf]
      %v296 = vld [vmem:[%s273 + $0x40] sm:$0xf]
      %v297 = vld [vmem:[%s273 + $0x44] sm:$0xf]
      %v298 = vld [vmem:[%s273 + $0x48] sm:$0xf]
      %v299 = vld [vmem:[%s273 + $0x4c] sm:$0xf]
      %v300 = vld [vmem:[%s273 + $0x50] sm:$0xf]
      %v301 = vld [vmem:[%s273 + $0x54] sm:$0xf]
      %v302 = vld [vmem:[%s273 + $0x58] sm:$0xf]
      %v303 = vld [vmem:[%s273 + $0x5c] sm:$0xf]
      %v304 = vld [vmem:[%s273 + $0x60] sm:$0xf]
      %v305 = vld [vmem:[%s273 + $0x64] sm:$0xf]
      %v306 = vld [vmem:[%s273 + $0x68] sm:$0xf]
      %v307 = vld [vmem:[%s273 + $0x6c] sm:$0xf]
      %v308 = vld [vmem:[%s273 + $0x70] sm:$0xf]
      %v309 = vld [vmem:[%s273 + $0x74] sm:$0xf]
      %v310 = vld [vmem:[%s273 + $0x78] sm:$0xf]
      %v311 = vld [vmem:[%s273 + $0x7c] sm:$0xf]
      %v312 = vld [vmem:[%s1] sm:$0xf]
      %v313 = vld [vmem:[%s1 + $0x4] sm:$0xf]
      %v314 = vld [vmem:[%s2] sm:$0x1]
      %v316 = vlaneseq
      %v317 = vshrl.u32 %v316, 7
      %v318 = vsub.s32 0, %v317
      %v319 = vrot.slane %v314, %v318
      %v353 = vunpack.c.l.b16 %v280
      %v354 = vunpack.c.l.b16 %v281
      %v355 = vunpack.c.l.b16 %v282
      %v356 = vunpack.c.l.b16 %v283
      %v357 = vunpack.c.l.b16 %v284
      %v358 = vunpack.c.l.b16 %v285
      %v359 = vunpack.c.l.b16 %v286
      %v360 = vunpack.c.l.b16 %v287
      %v361 = vunpack.c.l.b16 %v288
      %v362 = vunpack.c.l.b16 %v289
      %v363 = vunpack.c.l.b16 %v290
      %v364 = vunpack.c.l.b16 %v291
      %v365 = vunpack.c.l.b16 %v292
      %v366 = vunpack.c.l.b16 %v293
      %v367 = vunpack.c.l.b16 %v294
      %v368 = vunpack.c.l.b16 %v295
      %v369 = vunpack.c.l.b16 %v296
      %v370 = vunpack.c.l.b16 %v297
      %v371 = vunpack.c.l.b16 %v298
      %v372 = vunpack.c.l.b16 %v299
      %v373 = vunpack.c.l.b16 %v300
      %v374 = vunpack.c.l.b16 %v301
      %v375 = vunpack.c.l.b16 %v302
      %v376 = vunpack.c.l.b16 %v303
      %v377 = vunpack.c.l.b16 %v304
      %v378 = vunpack.c.l.b16 %v305
      %v379 = vunpack.c.l.b16 %v306
      %v380 = vunpack.c.l.b16 %v307
      %v381 = vunpack.c.l.b16 %v308
      %v382 = vunpack.c.l.b16 %v309
      %v383 = vunpack.c.l.b16 %v310
      %v384 = vunpack.c.l.b16 %v311
      %v385 = vpack.c.b16 %v354, %v353
      %v386 = vpack.c.b16 %v356, %v355
      %v387 = vpack.c.b16 %v358, %v357
      %v388 = vpack.c.b16 %v360, %v359
      %v389 = vpack.c.b16 %v362, %v361
      %v390 = vpack.c.b16 %v364, %v363
      %v391 = vpack.c.b16 %v366, %v365
      %v392 = vpack.c.b16 %v368, %v367
      %v393 = vpack.c.b16 %v370, %v369
      %v394 = vpack.c.b16 %v372, %v371
      %v395 = vpack.c.b16 %v374, %v373
      %v396 = vpack.c.b16 %v376, %v375
      %v397 = vpack.c.b16 %v378, %v377
      %v398 = vpack.c.b16 %v380, %v379
      %v399 = vpack.c.b16 %v382, %v381
      %v400 = vpack.c.b16 %v384, %v383
      %v403 = vunpack.c.l.b16 %v312
      %v404 = vunpack.c.l.b16 %v313
      %v405 = vpack.c.b16 %v404, %v403
      %vm407 = vcmask 130048
      %v409 = vsel %vm407, %v385, 0
      %v412 = vsel %vm407, %v386, 0
      %v415 = vsel %vm407, %v387, 0
      %v418 = vsel %vm407, %v388, 0
      %v421 = vsel %vm407, %v389, 0
      %v424 = vsel %vm407, %v390, 0
      %v427 = vsel %vm407, %v391, 0
      %v430 = vsel %vm407, %v392, 0
      %v433 = vsel %vm407, %v393, 0
      %v436 = vsel %vm407, %v394, 0
      %v439 = vsel %vm407, %v395, 0
      %v442 = vsel %vm407, %v396, 0
      %v445 = vsel %vm407, %v397, 0
      %v448 = vsel %vm407, %v398, 0
      %v451 = vsel %vm407, %v399, 0
      %v454 = vsel %vm407, %v400, 0
      %456 = vmatprep.subr.bf16.mxu0 0
      %457 = vmatpush1.bf16.msra.mxu0 %v405
      %458 = vmatprep.subr.bf16.mxu0 0
      %459 = vmatpush1.bf16.msra.mxu0 0
      %460 = vmatprep.subr.bf16.mxu0 0
      %461 = vmatpush1.bf16.msra.mxu0 0
      %462 = vmatprep.subr.bf16.mxu0 0
      %463 = vmatpush1.bf16.msra.mxu0 0
      %464 = vmatprep.subr.bf16.mxu0 0
      %465 = vmatpush1.bf16.msra.mxu0 0
      %466 = vmatprep.subr.bf16.mxu0 0
      %467 = vmatpush1.bf16.msra.mxu0 0
      %468 = vmatprep.subr.bf16.mxu0 0
      %469 = vmatpush1.bf16.msra.mxu0 0
      %470 = vmatprep.subr.bf16.mxu0 0
      %471 = vmatpush1.bf16.msra.mxu0 0
      %472 = vmatprep.subr.bf16.mxu0 0
      %473 = vmatpush1.bf16.msra.mxu0 0
      %474 = vmatprep.subr.bf16.mxu0 0
      %475 = vmatpush1.bf16.msra.mxu0 0
      %476 = vmatprep.subr.bf16.mxu0 0
      %477 = vmatpush1.bf16.msra.mxu0 0
      %478 = vmatprep.subr.bf16.mxu0 0
      %479 = vmatpush1.bf16.msra.mxu0 0
      %480 = vmatprep.subr.bf16.mxu0 0
      %481 = vmatpush1.bf16.msra.mxu0 0
      %482 = vmatprep.subr.bf16.mxu0 0
      %483 = vmatpush1.bf16.msra.mxu0 0
      %484 = vmatprep.subr.bf16.mxu0 0
      %485 = vmatpush1.bf16.msra.mxu0 0
      %486 = vmatprep.subr.bf16.mxu0 0
      %487 = vmatpush1.bf16.msra.mxu0 0
      %488 = vmatprep.mubr.bf16.mxu0 0
      %489 = vmatmul.mubr.bf16.gmra.mrb[0].mxu0 %v409
      %v490 = vpop.f32.mrb[0].mxu0
      %v491 = vadd.f32 %v319, %v490
      %v492 = vpop.f32.mrb[0].mxu0
      %v493 = vpop.f32.mrb[0].mxu0
      %v494 = vadd.f32 %v319, %v493
      %v495 = vpop.f32.mrb[0].mxu0
      %496 = vmatprep.mubr.bf16.mxu0 0
      %497 = vmatmul.mubr.bf16.gmra.mrb[0].mxu0 %v412
      %v498 = vpop.f32.mrb[0].mxu0
      %v499 = vadd.f32 %v319, %v498
      %v500 = vpop.f32.mrb[0].mxu0
      %v501 = vpop.f32.mrb[0].mxu0
      %v502 = vadd.f32 %v319, %v501
      %v503 = vpop.f32.mrb[0].mxu0
      %504 = vmatprep.mubr.bf16.mxu0 0
      %505 = vmatmul.mubr.bf16.gmra.mrb[0].mxu0 %v415
      %v506 = vpop.f32.mrb[0].mxu0
      %v507 = vadd.f32 %v319, %v506
      %v508 = vpop.f32.mrb[0].mxu0
      %v509 = vpop.f32.mrb[0].mxu0
      %v510 = vadd.f32 %v319, %v509
      %v511 = vpop.f32.mrb[0].mxu0
      %512 = vmatprep.mubr.bf16.mxu0 0
      %513 = vmatmul.mubr.bf16.gmra.mrb[0].mxu0 %v418
      %v514 = vpop.f32.mrb[0].mxu0
      %v515 = vadd.f32 %v319, %v514
      %v516 = vpop.f32.mrb[0].mxu0
      %v517 = vpop.f32.mrb[0].mxu0
      %v518 = vadd.f32 %v319, %v517
      %v519 = vpop.f32.mrb[0].mxu0
      %520 = vmatprep.mubr.bf16.mxu0 0
      %521 = vmatmul.mubr.bf16.gmra.mrb[0].mxu0 %v421
      %v522 = vpop.f32.mrb[0].mxu0
      %v523 = vadd.f32 %v319, %v522
      %v524 = vpop.f32.mrb[0].mxu0
      %v525 = vpop.f32.mrb[0].mxu0
      %v526 = vadd.f32 %v319, %v525
      %v527 = vpop.f32.mrb[0].mxu0
      %528 = vmatprep.mubr.bf16.mxu0 0
      %529 = vmatmul.mubr.bf16.gmra.mrb[0].mxu0 %v424
      %v530 = vpop.f32.mrb[0].mxu0
      %v531 = vadd.f32 %v319, %v530
      %v532 = vpop.f32.mrb[0].mxu0
      %v533 = vpop.f32.mrb[0].mxu0
      %v534 = vadd.f32 %v319, %v533
      %v535 = vpop.f32.mrb[0].mxu0
      %536 = vmatprep.mubr.bf16.mxu0 0
      %537 = vmatmul.mubr.bf16.gmra.mrb[0].mxu0 %v427
      %v538 = vpop.f32.mrb[0].mxu0
      %v539 = vadd.f32 %v319, %v538
      %v540 = vpop.f32.mrb[0].mxu0
      %v541 = vpop.f32.mrb[0].mxu0
      %v542 = vadd.f32 %v319, %v541
      %v543 = vpop.f32.mrb[0].mxu0
      %544 = vmatprep.mubr.bf16.mxu0 0
      %545 = vmatmul.mubr.bf16.gmra.mrb[0].mxu0 %v430
      %v546 = vpop.f32.mrb[0].mxu0
      %v547 = vadd.f32 %v319, %v546
      %v548 = vpop.f32.mrb[0].mxu0
      %v549 = vpop.f32.mrb[0].mxu0
      %v550 = vadd.f32 %v319, %v549
      %v551 = vpop.f32.mrb[0].mxu0
      %552 = vmatprep.mubr.bf16.mxu0 0
      %553 = vmatmul.mubr.bf16.gmra.mrb[0].mxu0 %v433
      %v554 = vpop.f32.mrb[0].mxu0
      %v555 = vadd.f32 %v319, %v554
      %v556 = vpop.f32.mrb[0].mxu0
      %v557 = vpop.f32.mrb[0].mxu0
      %v558 = vadd.f32 %v319, %v557
      %v559 = vpop.f32.mrb[0].mxu0
      %560 = vmatprep.mubr.bf16.mxu0 0
      %561 = vmatmul.mubr.bf16.gmra.mrb[0].mxu0 %v436
      %v562 = vpop.f32.mrb[0].mxu0
      %v563 = vadd.f32 %v319, %v562
      %v564 = vpop.f32.mrb[0].mxu0
      %v565 = vpop.f32.mrb[0].mxu0
      %v566 = vadd.f32 %v319, %v565
      %v567 = vpop.f32.mrb[0].mxu0
      %568 = vmatprep.mubr.bf16.mxu0 0
      %569 = vmatmul.mubr.bf16.gmra.mrb[0].mxu0 %v439
      %v570 = vpop.f32.mrb[0].mxu0
      %v571 = vadd.f32 %v319, %v570
      %v572 = vpop.f32.mrb[0].mxu0
      %v573 = vpop.f32.mrb[0].mxu0
      %v574 = vadd.f32 %v319, %v573
      %v575 = vpop.f32.mrb[0].mxu0
      %576 = vmatprep.mubr.bf16.mxu0 0
      %577 = vmatmul.mubr.bf16.gmra.mrb[0].mxu0 %v442
      %v578 = vpop.f32.mrb[0].mxu0
      %v579 = vadd.f32 %v319, %v578
      %v580 = vpop.f32.mrb[0].mxu0
      %v581 = vpop.f32.mrb[0].mxu0
      %v582 = vadd.f32 %v319, %v581
      %v583 = vpop.f32.mrb[0].mxu0
      %584 = vmatprep.mubr.bf16.mxu0 0
      %585 = vmatmul.mubr.bf16.gmra.mrb[0].mxu0 %v445
      %v586 = vpop.f32.mrb[0].mxu0
      %v587 = vadd.f32 %v319, %v586
      %v588 = vpop.f32.mrb[0].mxu0
      %v589 = vpop.f32.mrb[0].mxu0
      %v590 = vadd.f32 %v319, %v589
      %v591 = vpop.f32.mrb[0].mxu0
      %592 = vmatprep.mubr.bf16.mxu0 0
      %593 = vmatmul.mubr.bf16.gmra.mrb[0].mxu0 %v448
      %v594 = vpop.f32.mrb[0].mxu0
      %v595 = vadd.f32 %v319, %v594
      %v596 = vpop.f32.mrb[0].mxu0
      %v597 = vpop.f32.mrb[0].mxu0
      %v598 = vadd.f32 %v319, %v597
      %v599 = vpop.f32.mrb[0].mxu0
      %600 = vmatprep.mubr.bf16.mxu0 0
      %601 = vmatmul.mubr.bf16.gmra.mrb[0].mxu0 %v451
      %v602 = vpop.f32.mrb[0].mxu0
      %v603 = vadd.f32 %v319, %v602
      %v604 = vpop.f32.mrb[0].mxu0
      %v605 = vpop.f32.mrb[0].mxu0
      %v606 = vadd.f32 %v319, %v605
      %v607 = vpop.f32.mrb[0].mxu0
      %608 = vmatprep.mubr.bf16.mxu0 0
      %609 = vmatmul.mubr.bf16.gmra.mrb[0].mxu0 %v454
      %v610 = vpop.f32.mrb[0].mxu0
      %v611 = vadd.f32 %v319, %v610
      %v612 = vpop.f32.mrb[0].mxu0
      %v613 = vpop.f32.mrb[0].mxu0
      %v614 = vadd.f32 %v319, %v613
      %v615 = vpop.f32.mrb[0].mxu0
      %616 = vdwg.mxu0
      %v617 = vmax.f32 %v491, 0.0
      %v618 = vmax.f32 %v494, 0.0
      %v619 = vmax.f32 %v499, 0.0
      %v620 = vmax.f32 %v502, 0.0
      %v621 = vmax.f32 %v507, 0.0
      %v622 = vmax.f32 %v510, 0.0
      %v623 = vmax.f32 %v515, 0.0
      %v624 = vmax.f32 %v518, 0.0
      %v625 = vmax.f32 %v523, 0.0
      %v626 = vmax.f32 %v526, 0.0
      %v627 = vmax.f32 %v531, 0.0
      %v628 = vmax.f32 %v534, 0.0
      %v629 = vmax.f32 %v539, 0.0
      %v630 = vmax.f32 %v542, 0.0
      %v631 = vmax.f32 %v547, 0.0
      %v632 = vmax.f32 %v550, 0.0
      %v633 = vmax.f32 %v555, 0.0
      %v634 = vmax.f32 %v558, 0.0
      %v635 = vmax.f32 %v563, 0.0
      %v636 = vmax.f32 %v566, 0.0
      %v637 = vmax.f32 %v571, 0.0
      %v638 = vmax.f32 %v574, 0.0
      %v639 = vmax.f32 %v579, 0.0
      %v640 = vmax.f32 %v582, 0.0
      %v641 = vmax.f32 %v587, 0.0
      %v642 = vmax.f32 %v590, 0.0
      %v643 = vmax.f32 %v595, 0.0
      %v644 = vmax.f32 %v598, 0.0
      %v645 = vmax.f32 %v603, 0.0
      %v646 = vmax.f32 %v606, 0.0
      %v647 = vmax.f32 %v611, 0.0
      %v648 = vmax.f32 %v614, 0.0
      %649 = vst [vmem:[#allocation2] sm:$0xff] 0.0
      %650 = vst [vmem:[#allocation2 + $0x8] sm:$0xff] 0.0
      %651 = vst [vmem:[#allocation2 + $0x10] sm:$0x3] 0.0
      %652 = vst [vmem:[#allocation2 + $0x18] sm:$0xff] 0.0
      %653 = vst [vmem:[#allocation2 + $0x20] sm:$0xff] 0.0
      %654 = vst [vmem:[#allocation2 + $0x28] sm:$0x3] 0.0
      %655 = vst [vmem:[#allocation2 + $0x30] sm:$0xff] 0.0
      %656 = vst [vmem:[#allocation2 + $0x38] sm:$0xff] 0.0
      %657 = vst [vmem:[#allocation2 + $0x40] sm:$0x3] 0.0
      %658 = vst [vmem:[#allocation2 + $0x48] sm:$0xff] 0.0
      %659 = vst [vmem:[#allocation2 + $0x50] sm:$0xff] 0.0
      %660 = vst [vmem:[#allocation2 + $0x58] sm:$0x3] 0.0
      %661 = vst [vmem:[#allocation2 + $0x60] sm:$0xff] 0.0
      %662 = vst [vmem:[#allocation2 + $0x68] sm:$0xff] 0.0
      %663 = vst [vmem:[#allocation2 + $0x70] sm:$0x3] 0.0
      %664 = vst [vmem:[#allocation2 + $0x78] sm:$0xff] 0.0
      %665 = vst [vmem:[#allocation2 + $0x80] sm:$0xff] 0.0
      %666 = vst [vmem:[#allocation2 + $0x88] sm:$0x3] 0.0
      %667 = vst [vmem:[#allocation2 + $0x90] sm:$0xff] 0.0
      %668 = vst [vmem:[#allocation2 + $0x98] sm:$0xff] 0.0
      %669 = vst [vmem:[#allocation2 + $0xa0] sm:$0x3] 0.0
      %670 = vst [vmem:[#allocation2 + $0xa8] sm:$0xff] 0.0
      %671 = vst [vmem:[#allocation2 + $0xb0] sm:$0xff] 0.0
      %672 = vst [vmem:[#allocation2 + $0xb8] sm:$0x3] 0.0
      %673 = vst [vmem:[#allocation2 + $0xc0] sm:$0xff] 0.0
      %674 = vst [vmem:[#allocation2 + $0xc8] sm:$0xff] 0.0
      %675 = vst [vmem:[#allocation2 + $0xd0] sm:$0x3] 0.0
      %676 = vst [vmem:[#allocation2 + $0xd8] sm:$0xff] 0.0
      %677 = vst [vmem:[#allocation2 + $0xe0] sm:$0xff] 0.0
      %678 = vst [vmem:[#allocation2 + $0xe8] sm:$0x3] 0.0
      %679 = vst [vmem:[#allocation2 + $0xf0] sm:$0xff] 0.0
      %680 = vst [vmem:[#allocation2 + $0xf8] sm:$0xff] 0.0
      %681 = vst [vmem:[#allocation2 + $0x100] sm:$0x3] 0.0
      %682 = vst [vmem:[#allocation2 + $0x108] sm:$0xff] 0.0
      %683 = vst [vmem:[#allocation2 + $0x110] sm:$0xff] 0.0
      %684 = vst [vmem:[#allocation2 + $0x118] sm:$0x3] 0.0
      %685 = vst [vmem:[#allocation2 + $0x120] sm:$0xff] 0.0
      %686 = vst [vmem:[#allocation2 + $0x128] sm:$0xff] 0.0
      %687 = vst [vmem:[#allocation2 + $0x130] sm:$0x3] 0.0
      %688 = vst [vmem:[#allocation2 + $0x138] sm:$0xff] 0.0
      %689 = vst [vmem:[#allocation2 + $0x140] sm:$0xff] 0.0
      %690 = vst [vmem:[#allocation2 + $0x148] sm:$0x3] 0.0
      %691 = vst [vmem:[#allocation2 + $0x150] sm:$0xff] 0.0
      %692 = vst [vmem:[#allocation2 + $0x158] sm:$0xff] 0.0
      %693 = vst [vmem:[#allocation2 + $0x160] sm:$0x3] 0.0
      %694 = vst [vmem:[#allocation2 + $0x168] sm:$0xff] 0.0
      %695 = vst [vmem:[#allocation2 + $0x170] sm:$0xff] 0.0
      %696 = vst [vmem:[#allocation2 + $0x178] sm:$0x3] 0.0
      %697 = vst [vmem:[#allocation2 + $0x180] sm:$0xff] 0.0
      %698 = vst [vmem:[#allocation2 + $0x188] sm:$0xff] 0.0
      %699 = vst [vmem:[#allocation2 + $0x190] sm:$0x3] 0.0
      %700 = vst [vmem:[#allocation2 + $0x198] sm:$0xff] 0.0
      %701 = vst [vmem:[#allocation2 + $0x1a0] sm:$0xff] 0.0
      %702 = vst [vmem:[#allocation2 + $0x1a8] sm:$0x3] 0.0
      %s703 = scalar_lea.vmem [#allocation2], 24
      %704 = vst [vmem:[%s703 + $0x1] sm:$0xff] %v617
      %705 = vst [vmem:[%s703 + $0x9] sm:$0xff] %v618
      %706 = vst [vmem:[%s703 + $0x19] sm:$0xff] %v619
      %707 = vst [vmem:[%s703 + $0x21] sm:$0xff] %v620
      %708 = vst [vmem:[%s703 + $0x31] sm:$0xff] %v621
      %709 = vst [vmem:[%s703 + $0x39] sm:$0xff] %v622
      %710 = vst [vmem:[%s703 + $0x49] sm:$0xff] %v623
      %711 = vst [vmem:[%s703 + $0x51] sm:$0xff] %v624
      %712 = vst [vmem:[%s703 + $0x61] sm:$0xff] %v625
      %713 = vst [vmem:[%s703 + $0x69] sm:$0xff] %v626
      %714 = vst [vmem:[%s703 + $0x79] sm:$0xff] %v627
      %715 = vst [vmem:[%s703 + $0x81] sm:$0xff] %v628
      %716 = vst [vmem:[%s703 + $0x91] sm:$0xff] %v629
      %717 = vst [vmem:[%s703 + $0x99] sm:$0xff] %v630
      %718 = vst [vmem:[%s703 + $0xa9] sm:$0xff] %v631
      %719 = vst [vmem:[%s703 + $0xb1] sm:$0xff] %v632
      %720 = vst [vmem:[%s703 + $0xc1] sm:$0xff] %v633
      %721 = vst [vmem:[%s703 + $0xc9] sm:$0xff] %v634
      %722 = vst [vmem:[%s703 + $0xd9] sm:$0xff] %v635
      %723 = vst [vmem:[%s703 + $0xe1] sm:$0xff] %v636
      %724 = vst [vmem:[%s703 + $0xf1] sm:$0xff] %v637
      %725 = vst [vmem:[%s703 + $0xf9] sm:$0xff] %v638
      %726 = vst [vmem:[%s703 + $0x109] sm:$0xff] %v639
      %727 = vst [vmem:[%s703 + $0x111] sm:$0xff] %v640
      %728 = vst [vmem:[%s703 + $0x121] sm:$0xff] %v641
      %729 = vst [vmem:[%s703 + $0x129] sm:$0xff] %v642
      %730 = vst [vmem:[%s703 + $0x139] sm:$0xff] %v643
      %731 = vst [vmem:[%s703 + $0x141] sm:$0xff] %v644
      %732 = vst [vmem:[%s703 + $0x151] sm:$0xff] %v645
      %733 = vst [vmem:[%s703 + $0x159] sm:$0xff] %v646
      %734 = vst [vmem:[%s703 + $0x169] sm:$0xff] %v647
      %735 = vst [vmem:[%s703 + $0x171] sm:$0xff] %v648
      %v736 = vld [vmem:[#allocation2] sm:$0xff]
      %v737 = vld [vmem:[#allocation2 + $0x8] sm:$0xff]
      %v738 = vld [vmem:[#allocation2 + $0x18] sm:$0xff]
      %v739 = vld [vmem:[#allocation2 + $0x20] sm:$0xff]
      %v740 = vld [vmem:[#allocation2 + $0x30] sm:$0xff]
      %v741 = vld [vmem:[#allocation2 + $0x38] sm:$0xff]
      %v742 = vld [vmem:[#allocation2 + $0x48] sm:$0xff]
      %v743 = vld [vmem:[#allocation2 + $0x50] sm:$0xff]
      %v744 = vld [vmem:[#allocation2 + $0x60] sm:$0xff]
      %v745 = vld [vmem:[#allocation2 + $0x68] sm:$0xff]
      %v746 = vld [vmem:[#allocation2 + $0x78] sm:$0xff]
      %v747 = vld [vmem:[#allocation2 + $0x80] sm:$0xff]
      %v748 = vld [vmem:[#allocation2 + $0x90] sm:$0xff]
      %v749 = vld [vmem:[#allocation2 + $0x98] sm:$0xff]
      %v750 = vld [vmem:[#allocation2 + $0xa8] sm:$0xff]
      %v751 = vld [vmem:[#allocation2 + $0xb0] sm:$0xff]
      %v752 = vld [vmem:[#allocation2 + $0xc0] sm:$0xff]
      %v753 = vld [vmem:[#allocation2 + $0xc8] sm:$0xff]
      %v754 = vld [vmem:[#allocation2 + $0xd8] sm:$0xff]
      %v755 = vld [vmem:[#allocation2 + $0xe0] sm:$0xff]
      %v756 = vld [vmem:[#allocation2 + $0xf0] sm:$0xff]
      %v757 = vld [vmem:[#allocation2 + $0xf8] sm:$0xff]
      %v758 = vld [vmem:[#allocation2 + $0x108] sm:$0xff]
      %v759 = vld [vmem:[#allocation2 + $0x110] sm:$0xff]
      %v760 = vld [vmem:[#allocation2 + $0x120] sm:$0xff]
      %v761 = vld [vmem:[#allocation2 + $0x128] sm:$0xff]
      %v762 = vld [vmem:[#allocation2 + $0x138] sm:$0xff]
      %v763 = vld [vmem:[#allocation2 + $0x140] sm:$0xff]
      %v764 = vld [vmem:[#allocation2 + $0x150] sm:$0xff]
      %v765 = vld [vmem:[#allocation2 + $0x158] sm:$0xff]
      %v766 = vld [vmem:[#allocation2 + $0x168] sm:$0xff]
      %v767 = vld [vmem:[#allocation2 + $0x170] sm:$0xff]
      %v768 = vpack.c.bf16 %v737, %v736
      %v769 = vpack.c.bf16 %v739, %v738
      %v770 = vpack.c.bf16 %v741, %v740
      %v771 = vpack.c.bf16 %v743, %v742
      %v772 = vpack.c.bf16 %v745, %v744
      %v773 = vpack.c.bf16 %v747, %v746
      %v774 = vpack.c.bf16 %v749, %v748
      %v775 = vpack.c.bf16 %v751, %v750
      %v776 = vpack.c.bf16 %v753, %v752
      %v777 = vpack.c.bf16 %v755, %v754
      %v778 = vpack.c.bf16 %v757, %v756
      %v779 = vpack.c.bf16 %v759, %v758
      %v780 = vpack.c.bf16 %v761, %v760
      %v781 = vpack.c.bf16 %v763, %v762
      %v782 = vpack.c.bf16 %v765, %v764
      %v783 = vpack.c.bf16 %v767, %v766
      %v784 = vld [vmem:[%s3] sm:$0xf]
      %v785 = vld [vmem:[%s3 + $0x4] sm:$0xf]
      %v786 = vld [vmem:[%s3 + $0x8] sm:$0xf]
      %v787 = vld [vmem:[%s3 + $0xc] sm:$0xf]
      %v788 = vld [vmem:[%s3 + $0x10] sm:$0xf]
      %v789 = vld [vmem:[%s3 + $0x14] sm:$0xf]
      %v790 = vld [vmem:[%s3 + $0x18] sm:$0xf]
      %v791 = vld [vmem:[%s3 + $0x1c] sm:$0xf]
      %v792 = vld [vmem:[%s3 + $0x20] sm:$0xf]
      %v793 = vld [vmem:[%s3 + $0x24] sm:$0xf]
      %v794 = vld [vmem:[%s3 + $0x28] sm:$0xf]
      %v795 = vld [vmem:[%s3 + $0x2c] sm:$0xf]
      %v796 = vld [vmem:[%s3 + $0x30] sm:$0xf]
      %v797 = vld [vmem:[%s3 + $0x34] sm:$0xf]
      %v798 = vld [vmem:[%s3 + $0x38] sm:$0xf]
      %v799 = vld [vmem:[%s3 + $0x3c] sm:$0xf]
      %v800 = vld [vmem:[#allocation2 + $0x1] sm:$0xff]
      %v801 = vld [vmem:[#allocation2 + $0x9] sm:$0xff]
      %v802 = vld [vmem:[#allocation2 + $0x19] sm:$0xff]
      %v803 = vld [vmem:[#allocation2 + $0x21] sm:$0xff]
      %v804 = vld [vmem:[#allocation2 + $0x31] sm:$0xff]
      %v805 = vld [vmem:[#allocation2 + $0x39] sm:$0xff]
      %v806 = vld [vmem:[#allocation2 + $0x49] sm:$0xff]
      %v807 = vld [vmem:[#allocation2 + $0x51] sm:$0xff]
      %v808 = vld [vmem:[#allocation2 + $0x61] sm:$0xff]
      %v809 = vld [vmem:[#allocation2 + $0x69] sm:$0xff]
      %v810 = vld [vmem:[#allocation2 + $0x79] sm:$0xff]
      %v811 = vld [vmem:[#allocation2 + $0x81] sm:$0xff]
      %v812 = vld [vmem:[#allocation2 + $0x91] sm:$0xff]
      %v813 = vld [vmem:[#allocation2 + $0x99] sm:$0xff]
      %v814 = vld [vmem:[#allocation2 + $0xa9] sm:$0xff]
      %v815 = vld [vmem:[#allocation2 + $0xb1] sm:$0xff]
      %v816 = vld [vmem:[#allocation2 + $0xc1] sm:$0xff]
      %v817 = vld [vmem:[#allocation2 + $0xc9] sm:$0xff]
      %v818 = vld [vmem:[#allocation2 + $0xd9] sm:$0xff]
      %v819 = vld [vmem:[#allocation2 + $0xe1] sm:$0xff]
      %v820 = vld [vmem:[#allocation2 + $0xf1] sm:$0xff]
      %v821 = vld [vmem:[#allocation2 + $0xf9] sm:$0xff]
      %v822 = vld [vmem:[#allocation2 + $0x109] sm:$0xff]
      %v823 = vld [vmem:[#allocation2 + $0x111] sm:$0xff]
      %v824 = vld [vmem:[#allocation2 + $0x121] sm:$0xff]
      %v825 = vld [vmem:[#allocation2 + $0x129] sm:$0xff]
      %v826 = vld [vmem:[#allocation2 + $0x139] sm:$0xff]
      %v827 = vld [vmem:[#allocation2 + $0x141] sm:$0xff]
      %v828 = vld [vmem:[#allocation2 + $0x151] sm:$0xff]
      %v829 = vld [vmem:[#allocation2 + $0x159] sm:$0xff]
      %v830 = vld [vmem:[#allocation2 + $0x169] sm:$0xff]
      %v831 = vld [vmem:[#allocation2 + $0x171] sm:$0xff]
      %v832 = vpack.c.bf16 %v801, %v800
      %v833 = vpack.c.bf16 %v803, %v802
      %v834 = vpack.c.bf16 %v805, %v804
      %v835 = vpack.c.bf16 %v807, %v806
      %v836 = vpack.c.bf16 %v809, %v808
      %v837 = vpack.c.bf16 %v811, %v810
      %v838 = vpack.c.bf16 %v813, %v812
      %v839 = vpack.c.bf16 %v815, %v814
      %v840 = vpack.c.bf16 %v817, %v816
      %v841 = vpack.c.bf16 %v819, %v818
      %v842 = vpack.c.bf16 %v821, %v820
      %v843 = vpack.c.bf16 %v823, %v822
      %v844 = vpack.c.bf16 %v825, %v824
      %v845 = vpack.c.bf16 %v827, %v826
      %v846 = vpack.c.bf16 %v829, %v828
      %v847 = vpack.c.bf16 %v831, %v830
      %s848 = scalar_lea.vmem %s3, 64
      %v849 = vld [vmem:[%s848] sm:$0xf]
      %v850 = vld [vmem:[%s848 + $0x4] sm:$0xf]
      %v851 = vld [vmem:[%s848 + $0x8] sm:$0xf]
      %v852 = vld [vmem:[%s848 + $0xc] sm:$0xf]
      %v853 = vld [vmem:[%s848 + $0x10] sm:$0xf]
      %v854 = vld [vmem:[%s848 + $0x14] sm:$0xf]
      %v855 = vld [vmem:[%s848 + $0x18] sm:$0xf]
      %v856 = vld [vmem:[%s848 + $0x1c] sm:$0xf]
      %v857 = vld [vmem:[%s848 + $0x20] sm:$0xf]
      %v858 = vld [vmem:[%s848 + $0x24] sm:$0xf]
      %v859 = vld [vmem:[%s848 + $0x28] sm:$0xf]
      %v860 = vld [vmem:[%s848 + $0x2c] sm:$0xf]
      %v861 = vld [vmem:[%s848 + $0x30] sm:$0xf]
      %v862 = vld [vmem:[%s848 + $0x34] sm:$0xf]
      %v863 = vld [vmem:[%s848 + $0x38] sm:$0xf]
      %v864 = vld [vmem:[%s848 + $0x3c] sm:$0xf]
      %v881 = vunpack.c.l.b16 %v849
      %v882 = vunpack.c.l.b16 %v850
      %v883 = vunpack.c.l.b16 %v851
      %v884 = vunpack.c.l.b16 %v852
      %v885 = vunpack.c.l.b16 %v853
      %v886 = vunpack.c.l.b16 %v854
      %v887 = vunpack.c.l.b16 %v855
      %v888 = vunpack.c.l.b16 %v856
      %v889 = vunpack.c.l.b16 %v857
      %v890 = vunpack.c.l.b16 %v858
      %v891 = vunpack.c.l.b16 %v859
      %v892 = vunpack.c.l.b16 %v860
      %v893 = vunpack.c.l.b16 %v861
      %v894 = vunpack.c.l.b16 %v862
      %v895 = vunpack.c.l.b16 %v863
      %v896 = vunpack.c.l.b16 %v864
      %v897 = vpack.c.b16 %v882, %v881
      %v898 = vpack.c.b16 %v884, %v883
      %v899 = vpack.c.b16 %v886, %v885
      %v900 = vpack.c.b16 %v888, %v887
      %v901 = vpack.c.b16 %v890, %v889
      %v902 = vpack.c.b16 %v892, %v891
      %v903 = vpack.c.b16 %v894, %v893
      %v904 = vpack.c.b16 %v896, %v895
      %913 = vmatprep.subr.bf16.mxu0 0
      %914 = vmatpush1.bf16.msra.mxu0 %v897
      %915 = vmatprep.subr.bf16.mxu0 0
      %916 = vmatpush1.bf16.msra.mxu0 %v898
      %917 = vmatprep.subr.bf16.mxu0 0
      %918 = vmatpush1.bf16.msra.mxu0 %v899
      %919 = vmatprep.subr.bf16.mxu0 0
      %920 = vmatpush1.bf16.msra.mxu0 %v900
      %921 = vmatprep.subr.bf16.mxu0 0
      %922 = vmatpush1.bf16.msra.mxu0 %v901
      %923 = vmatprep.subr.bf16.mxu0 0
      %924 = vmatpush1.bf16.msra.mxu0 %v902
      %925 = vmatprep.subr.bf16.mxu0 0
      %926 = vmatpush1.bf16.msra.mxu0 %v903
      %927 = vmatprep.subr.bf16.mxu0 0
      %928 = vmatpush1.bf16.msra.mxu0 %v904
      %929 = vmatprep.subr.bf16.mxu0 0
      %930 = vmatpush1.bf16.msra.mxu0 0
      %931 = vmatprep.subr.bf16.mxu0 0
      %932 = vmatpush1.bf16.msra.mxu0 0
      %933 = vmatprep.subr.bf16.mxu0 0
      %934 = vmatpush1.bf16.msra.mxu0 0
      %935 = vmatprep.subr.bf16.mxu0 0
      %936 = vmatpush1.bf16.msra.mxu0 0
      %937 = vmatprep.subr.bf16.mxu0 0
      %938 = vmatpush1.bf16.msra.mxu0 0
      %939 = vmatprep.subr.bf16.mxu0 0
      %940 = vmatpush1.bf16.msra.mxu0 0
      %941 = vmatprep.subr.bf16.mxu0 0
      %942 = vmatpush1.bf16.msra.mxu0 0
      %943 = vmatprep.subr.bf16.mxu0 0
      %944 = vmatpush1.bf16.msra.mxu0 0
      %945 = vmatprep.mubr.bf16.mxu0 0
      %946 = vmatmul.mubr.bf16.gmra.mrb[0].mxu0 %v832
      %v947 = vpop.f32.mrb[0].mxu0
      %v948 = vadd.f32 0.0, %v947
      %v949 = vpop.f32.mrb[0].mxu0
      %v950 = vpop.f32.mrb[0].mxu0
      %v951 = vadd.f32 0.0, %v950
      %v952 = vpop.f32.mrb[0].mxu0
      %953 = vmatprep.mubr.bf16.mxu0 0
      %954 = vmatmul.mubr.bf16.gmra.mrb[0].mxu0 %v833
      %v955 = vpop.f32.mrb[0].mxu0
      %v956 = vadd.f32 0.0, %v955
      %v957 = vpop.f32.mrb[0].mxu0
      %v958 = vpop.f32.mrb[0].mxu0
      %v959 = vadd.f32 0.0, %v958
      %v960 = vpop.f32.mrb[0].mxu0
      %961 = vmatprep.mubr.bf16.mxu0 0
      %962 = vmatmul.mubr.bf16.gmra.mrb[0].mxu0 %v834
      %v963 = vpop.f32.mrb[0].mxu0
      %v964 = vadd.f32 0.0, %v963
      %v965 = vpop.f32.mrb[0].mxu0
      %v966 = vpop.f32.mrb[0].mxu0
      %v967 = vadd.f32 0.0, %v966
      %v968 = vpop.f32.mrb[0].mxu0
      %969 = vmatprep.mubr.bf16.mxu0 0
      %970 = vmatmul.mubr.bf16.gmra.mrb[0].mxu0 %v835
      %v971 = vpop.f32.mrb[0].mxu0
      %v972 = vadd.f32 0.0, %v971
      %v973 = vpop.f32.mrb[0].mxu0
      %v974 = vpop.f32.mrb[0].mxu0
      %v975 = vadd.f32 0.0, %v974
      %v976 = vpop.f32.mrb[0].mxu0
      %977 = vmatprep.mubr.bf16.mxu0 0
      %978 = vmatmul.mubr.bf16.gmra.mrb[0].mxu0 %v836
      %v979 = vpop.f32.mrb[0].mxu0
      %v980 = vadd.f32 0.0, %v979
      %v981 = vpop.f32.mrb[0].mxu0
      %v982 = vpop.f32.mrb[0].mxu0
      %v983 = vadd.f32 0.0, %v982
      %v984 = vpop.f32.mrb[0].mxu0
      %985 = vmatprep.mubr.bf16.mxu0 0
      %986 = vmatmul.mubr.bf16.gmra.mrb[0].mxu0 %v837
      %v987 = vpop.f32.mrb[0].mxu0
      %v988 = vadd.f32 0.0, %v987
      %v989 = vpop.f32.mrb[0].mxu0
      %v990 = vpop.f32.mrb[0].mxu0
      %v991 = vadd.f32 0.0, %v990
      %v992 = vpop.f32.mrb[0].mxu0
      %993 = vmatprep.mubr.bf16.mxu0 0
      %994 = vmatmul.mubr.bf16.gmra.mrb[0].mxu0 %v838
      %v995 = vpop.f32.mrb[0].mxu0
      %v996 = vadd.f32 0.0, %v995
      %v997 = vpop.f32.mrb[0].mxu0
      %v998 = vpop.f32.mrb[0].mxu0
      %v999 = vadd.f32 0.0, %v998
      %v1000 = vpop.f32.mrb[0].mxu0
      %1001 = vmatprep.mubr.bf16.mxu0 0
      %1002 = vmatmul.mubr.bf16.gmra.mrb[0].mxu0 %v839
      %v1003 = vpop.f32.mrb[0].mxu0
      %v1004 = vadd.f32 0.0, %v1003
      %v1005 = vpop.f32.mrb[0].mxu0
      %v1006 = vpop.f32.mrb[0].mxu0
      %v1007 = vadd.f32 0.0, %v1006
      %v1008 = vpop.f32.mrb[0].mxu0
      %1009 = vmatprep.mubr.bf16.mxu0 0
      %1010 = vmatmul.mubr.bf16.gmra.mrb[0].mxu0 %v840
      %v1011 = vpop.f32.mrb[0].mxu0
      %v1012 = vadd.f32 0.0, %v1011
      %v1013 = vpop.f32.mrb[0].mxu0
      %v1014 = vpop.f32.mrb[0].mxu0
      %v1015 = vadd.f32 0.0, %v1014
      %v1016 = vpop.f32.mrb[0].mxu0
      %1017 = vmatprep.mubr.bf16.mxu0 0
      %1018 = vmatmul.mubr.bf16.gmra.mrb[0].mxu0 %v841
      %v1019 = vpop.f32.mrb[0].mxu0
      %v1020 = vadd.f32 0.0, %v1019
      %v1021 = vpop.f32.mrb[0].mxu0
      %v1022 = vpop.f32.mrb[0].mxu0
      %v1023 = vadd.f32 0.0, %v1022
      %v1024 = vpop.f32.mrb[0].mxu0
      %1025 = vmatprep.mubr.bf16.mxu0 0
      %1026 = vmatmul.mubr.bf16.gmra.mrb[0].mxu0 %v842
      %v1027 = vpop.f32.mrb[0].mxu0
      %v1028 = vadd.f32 0.0, %v1027
      %v1029 = vpop.f32.mrb[0].mxu0
      %v1030 = vpop.f32.mrb[0].mxu0
      %v1031 = vadd.f32 0.0, %v1030
      %v1032 = vpop.f32.mrb[0].mxu0
      %1033 = vmatprep.mubr.bf16.mxu0 0
      %1034 = vmatmul.mubr.bf16.gmra.mrb[0].mxu0 %v843
      %v1035 = vpop.f32.mrb[0].mxu0
      %v1036 = vadd.f32 0.0, %v1035
      %v1037 = vpop.f32.mrb[0].mxu0
      %v1038 = vpop.f32.mrb[0].mxu0
      %v1039 = vadd.f32 0.0, %v1038
      %v1040 = vpop.f32.mrb[0].mxu0
      %1041 = vmatprep.mubr.bf16.mxu0 0
      %1042 = vmatmul.mubr.bf16.gmra.mrb[0].mxu0 %v844
      %v1043 = vpop.f32.mrb[0].mxu0
      %v1044 = vadd.f32 0.0, %v1043
      %v1045 = vpop.f32.mrb[0].mxu0
      %v1046 = vpop.f32.mrb[0].mxu0
      %v1047 = vadd.f32 0.0, %v1046
      %v1048 = vpop.f32.mrb[0].mxu0
      %1049 = vmatprep.mubr.bf16.mxu0 0
      %1050 = vmatmul.mubr.bf16.gmra.mrb[0].mxu0 %v845
      %v1051 = vpop.f32.mrb[0].mxu0
      %v1052 = vadd.f32 0.0, %v1051
      %v1053 = vpop.f32.mrb[0].mxu0
      %v1054 = vpop.f32.mrb[0].mxu0
      %v1055 = vadd.f32 0.0, %v1054
      %v1056 = vpop.f32.mrb[0].mxu0
      %1057 = vmatprep.mubr.bf16.mxu0 0
      %1058 = vmatmul.mubr.bf16.gmra.mrb[0].mxu0 %v846
      %v1059 = vpop.f32.mrb[0].mxu0
      %v1060 = vadd.f32 0.0, %v1059
      %v1061 = vpop.f32.mrb[0].mxu0
      %v1062 = vpop.f32.mrb[0].mxu0
      %v1063 = vadd.f32 0.0, %v1062
      %v1064 = vpop.f32.mrb[0].mxu0
      %1065 = vmatprep.mubr.bf16.mxu0 0
      %1066 = vmatmul.mubr.bf16.gmra.mrb[0].mxu0 %v847
      %v1067 = vpop.f32.mrb[0].mxu0
      %v1068 = vadd.f32 0.0, %v1067
      %v1069 = vpop.f32.mrb[0].mxu0
      %v1070 = vpop.f32.mrb[0].mxu0
      %v1071 = vadd.f32 0.0, %v1070
      %v1072 = vpop.f32.mrb[0].mxu0
      %1073 = vdwg.mxu0
      %v1090 = vunpack.c.l.b16 %v784
      %v1091 = vunpack.c.l.b16 %v785
      %v1092 = vunpack.c.l.b16 %v786
      %v1093 = vunpack.c.l.b16 %v787
      %v1094 = vunpack.c.l.b16 %v788
      %v1095 = vunpack.c.l.b16 %v789
      %v1096 = vunpack.c.l.b16 %v790
      %v1097 = vunpack.c.l.b16 %v791
      %v1098 = vunpack.c.l.b16 %v792
      %v1099 = vunpack.c.l.b16 %v793
      %v1100 = vunpack.c.l.b16 %v794
      %v1101 = vunpack.c.l.b16 %v795
      %v1102 = vunpack.c.l.b16 %v796
      %v1103 = vunpack.c.l.b16 %v797
      %v1104 = vunpack.c.l.b16 %v798
      %v1105 = vunpack.c.l.b16 %v799
      %v1106 = vpack.c.b16 %v1091, %v1090
      %v1107 = vpack.c.b16 %v1093, %v1092
      %v1108 = vpack.c.b16 %v1095, %v1094
      %v1109 = vpack.c.b16 %v1097, %v1096
      %v1110 = vpack.c.b16 %v1099, %v1098
      %v1111 = vpack.c.b16 %v1101, %v1100
      %v1112 = vpack.c.b16 %v1103, %v1102
      %v1113 = vpack.c.b16 %v1105, %v1104
      %1122 = vmatprep.subr.bf16.mxu0 0
      %1123 = vmatpush1.bf16.msra.mxu0 %v1106
      %1124 = vmatprep.subr.bf16.mxu0 0
      %1125 = vmatpush1.bf16.msra.mxu0 %v1107
      %1126 = vmatprep.subr.bf16.mxu0 0
      %1127 = vmatpush1.bf16.msra.mxu0 %v1108
      %1128 = vmatprep.subr.bf16.mxu0 0
      %1129 = vmatpush1.bf16.msra.mxu0 %v1109
      %1130 = vmatprep.subr.bf16.mxu0 0
      %1131 = vmatpush1.bf16.msra.mxu0 %v1110
      %1132 = vmatprep.subr.bf16.mxu0 0
      %1133 = vmatpush1.bf16.msra.mxu0 %v1111
      %1134 = vmatprep.subr.bf16.mxu0 0
      %1135 = vmatpush1.bf16.msra.mxu0 %v1112
      %1136 = vmatprep.subr.bf16.mxu0 0
      %1137 = vmatpush1.bf16.msra.mxu0 %v1113
      %1138 = vmatprep.subr.bf16.mxu0 0
      %1139 = vmatpush1.bf16.msra.mxu0 0
      %1140 = vmatprep.subr.bf16.mxu0 0
      %1141 = vmatpush1.bf16.msra.mxu0 0
      %1142 = vmatprep.subr.bf16.mxu0 0
      %1143 = vmatpush1.bf16.msra.mxu0 0
      %1144 = vmatprep.subr.bf16.mxu0 0
      %1145 = vmatpush1.bf16.msra.mxu0 0
      %1146 = vmatprep.subr.bf16.mxu0 0
      %1147 = vmatpush1.bf16.msra.mxu0 0
      %1148 = vmatprep.subr.bf16.mxu0 0
      %1149 = vmatpush1.bf16.msra.mxu0 0
      %1150 = vmatprep.subr.bf16.mxu0 0
      %1151 = vmatpush1.bf16.msra.mxu0 0
      %1152 = vmatprep.subr.bf16.mxu0 0
      %1153 = vmatpush1.bf16.msra.mxu0 0
      %1154 = vmatprep.mubr.bf16.mxu0 0
      %1155 = vmatmul.mubr.bf16.gmra.mrb[0].mxu0 %v768
      %v1156 = vpop.f32.mrb[0].mxu0
      %v1157 = vadd.f32 %v948, %v1156
      %v1158 = vpop.f32.mrb[0].mxu0
      %v1159 = vpop.f32.mrb[0].mxu0
      %v1160 = vadd.f32 %v951, %v1159
      %v1161 = vpop.f32.mrb[0].mxu0
      %1162 = vmatprep.mubr.bf16.mxu0 0
      %1163 = vmatmul.mubr.bf16.gmra.mrb[0].mxu0 %v769
      %v1164 = vpop.f32.mrb[0].mxu0
      %v1165 = vadd.f32 %v956, %v1164
      %v1166 = vpop.f32.mrb[0].mxu0
      %v1167 = vpop.f32.mrb[0].mxu0
      %v1168 = vadd.f32 %v959, %v1167
      %v1169 = vpop.f32.mrb[0].mxu0
      %1170 = vmatprep.mubr.bf16.mxu0 0
      %1171 = vmatmul.mubr.bf16.gmra.mrb[0].mxu0 %v770
      %v1172 = vpop.f32.mrb[0].mxu0
      %v1173 = vadd.f32 %v964, %v1172
      %v1174 = vpop.f32.mrb[0].mxu0
      %v1175 = vpop.f32.mrb[0].mxu0
      %v1176 = vadd.f32 %v967, %v1175
      %v1177 = vpop.f32.mrb[0].mxu0
      %1178 = vmatprep.mubr.bf16.mxu0 0
      %1179 = vmatmul.mubr.bf16.gmra.mrb[0].mxu0 %v771
      %v1180 = vpop.f32.mrb[0].mxu0
      %v1181 = vadd.f32 %v972, %v1180
      %v1182 = vpop.f32.mrb[0].mxu0
      %v1183 = vpop.f32.mrb[0].mxu0
      %v1184 = vadd.f32 %v975, %v1183
      %v1185 = vpop.f32.mrb[0].mxu0
      %1186 = vmatprep.mubr.bf16.mxu0 0
      %1187 = vmatmul.mubr.bf16.gmra.mrb[0].mxu0 %v772
      %v1188 = vpop.f32.mrb[0].mxu0
      %v1189 = vadd.f32 %v980, %v1188
      %v1190 = vpop.f32.mrb[0].mxu0
      %v1191 = vpop.f32.mrb[0].mxu0
      %v1192 = vadd.f32 %v983, %v1191
      %v1193 = vpop.f32.mrb[0].mxu0
      %1194 = vmatprep.mubr.bf16.mxu0 0
      %1195 = vmatmul.mubr.bf16.gmra.mrb[0].mxu0 %v773
      %v1196 = vpop.f32.mrb[0].mxu0
      %v1197 = vadd.f32 %v988, %v1196
      %v1198 = vpop.f32.mrb[0].mxu0
      %v1199 = vpop.f32.mrb[0].mxu0
      %v1200 = vadd.f32 %v991, %v1199
      %v1201 = vpop.f32.mrb[0].mxu0
      %1202 = vmatprep.mubr.bf16.mxu0 0
      %1203 = vmatmul.mubr.bf16.gmra.mrb[0].mxu0 %v774
      %v1204 = vpop.f32.mrb[0].mxu0
      %v1205 = vadd.f32 %v996, %v1204
      %v1206 = vpop.f32.mrb[0].mxu0
      %v1207 = vpop.f32.mrb[0].mxu0
      %v1208 = vadd.f32 %v999, %v1207
      %v1209 = vpop.f32.mrb[0].mxu0
      %1210 = vmatprep.mubr.bf16.mxu0 0
      %1211 = vmatmul.mubr.bf16.gmra.mrb[0].mxu0 %v775
      %v1212 = vpop.f32.mrb[0].mxu0
      %v1213 = vadd.f32 %v1004, %v1212
      %v1214 = vpop.f32.mrb[0].mxu0
      %v1215 = vpop.f32.mrb[0].mxu0
      %v1216 = vadd.f32 %v1007, %v1215
      %v1217 = vpop.f32.mrb[0].mxu0
      %1218 = vmatprep.mubr.bf16.mxu0 0
      %1219 = vmatmul.mubr.bf16.gmra.mrb[0].mxu0 %v776
      %v1220 = vpop.f32.mrb[0].mxu0
      %v1221 = vadd.f32 %v1012, %v1220
      %v1222 = vpop.f32.mrb[0].mxu0
      %v1223 = vpop.f32.mrb[0].mxu0
      %v1224 = vadd.f32 %v1015, %v1223
      %v1225 = vpop.f32.mrb[0].mxu0
      %1226 = vmatprep.mubr.bf16.mxu0 0
      %1227 = vmatmul.mubr.bf16.gmra.mrb[0].mxu0 %v777
      %v1228 = vpop.f32.mrb[0].mxu0
      %v1229 = vadd.f32 %v1020, %v1228
      %v1230 = vpop.f32.mrb[0].mxu0
      %v1231 = vpop.f32.mrb[0].mxu0
      %v1232 = vadd.f32 %v1023, %v1231
      %v1233 = vpop.f32.mrb[0].mxu0
      %1234 = vmatprep.mubr.bf16.mxu0 0
      %1235 = vmatmul.mubr.bf16.gmra.mrb[0].mxu0 %v778
      %v1236 = vpop.f32.mrb[0].mxu0
      %v1237 = vadd.f32 %v1028, %v1236
      %v1238 = vpop.f32.mrb[0].mxu0
      %v1239 = vpop.f32.mrb[0].mxu0
      %v1240 = vadd.f32 %v1031, %v1239
      %v1241 = vpop.f32.mrb[0].mxu0
      %1242 = vmatprep.mubr.bf16.mxu0 0
      %1243 = vmatmul.mubr.bf16.gmra.mrb[0].mxu0 %v779
      %v1244 = vpop.f32.mrb[0].mxu0
      %v1245 = vadd.f32 %v1036, %v1244
      %v1246 = vpop.f32.mrb[0].mxu0
      %v1247 = vpop.f32.mrb[0].mxu0
      %v1248 = vadd.f32 %v1039, %v1247
      %v1249 = vpop.f32.mrb[0].mxu0
      %1250 = vmatprep.mubr.bf16.mxu0 0
      %1251 = vmatmul.mubr.bf16.gmra.mrb[0].mxu0 %v780
      %v1252 = vpop.f32.mrb[0].mxu0
      %v1253 = vadd.f32 %v1044, %v1252
      %v1254 = vpop.f32.mrb[0].mxu0
      %v1255 = vpop.f32.mrb[0].mxu0
      %v1256 = vadd.f32 %v1047, %v1255
      %v1257 = vpop.f32.mrb[0].mxu0
      %1258 = vmatprep.mubr.bf16.mxu0 0
      %1259 = vmatmul.mubr.bf16.gmra.mrb[0].mxu0 %v781
      %v1260 = vpop.f32.mrb[0].mxu0
      %v1261 = vadd.f32 %v1052, %v1260
      %v1262 = vpop.f32.mrb[0].mxu0
      %v1263 = vpop.f32.mrb[0].mxu0
      %v1264 = vadd.f32 %v1055, %v1263
      %v1265 = vpop.f32.mrb[0].mxu0
      %1266 = vmatprep.mubr.bf16.mxu0 0
      %1267 = vmatmul.mubr.bf16.gmra.mrb[0].mxu0 %v782
      %v1268 = vpop.f32.mrb[0].mxu0
      %v1269 = vadd.f32 %v1060, %v1268
      %v1270 = vpop.f32.mrb[0].mxu0
      %v1271 = vpop.f32.mrb[0].mxu0
      %v1272 = vadd.f32 %v1063, %v1271
      %v1273 = vpop.f32.mrb[0].mxu0
      %1274 = vmatprep.mubr.bf16.mxu0 0
      %1275 = vmatmul.mubr.bf16.gmra.mrb[0].mxu0 %v783
      %v1276 = vpop.f32.mrb[0].mxu0
      %v1277 = vadd.f32 %v1068, %v1276
      %v1278 = vpop.f32.mrb[0].mxu0
      %v1279 = vpop.f32.mrb[0].mxu0
      %v1280 = vadd.f32 %v1071, %v1279
      %v1281 = vpop.f32.mrb[0].mxu0
      %1282 = vdwg.mxu0
      %v1283 = vld [vmem:[#allocation2 + $0x2] sm:$0xff]
      %v1284 = vld [vmem:[#allocation2 + $0xa] sm:$0xff]
      %v1285 = vld [vmem:[#allocation2 + $0x1a] sm:$0xff]
      %v1286 = vld [vmem:[#allocation2 + $0x22] sm:$0xff]
      %v1287 = vld [vmem:[#allocation2 + $0x32] sm:$0xff]
      %v1288 = vld [vmem:[#allocation2 + $0x3a] sm:$0xff]
      %v1289 = vld [vmem:[#allocation2 + $0x4a] sm:$0xff]
      %v1290 = vld [vmem:[#allocation2 + $0x52] sm:$0xff]
      %v1291 = vld [vmem:[#allocation2 + $0x62] sm:$0xff]
      %v1292 = vld [vmem:[#allocation2 + $0x6a] sm:$0xff]
      %v1293 = vld [vmem:[#allocation2 + $0x7a] sm:$0xff]
      %v1294 = vld [vmem:[#allocation2 + $0x82] sm:$0xff]
      %v1295 = vld [vmem:[#allocation2 + $0x92] sm:$0xff]
      %v1296 = vld [vmem:[#allocation2 + $0x9a] sm:$0xff]
      %v1297 = vld [vmem:[#allocation2 + $0xaa] sm:$0xff]
      %v1298 = vld [vmem:[#allocation2 + $0xb2] sm:$0xff]
      %v1299 = vld [vmem:[#allocation2 + $0xc2] sm:$0xff]
      %v1300 = vld [vmem:[#allocation2 + $0xca] sm:$0xff]
      %v1301 = vld [vmem:[#allocation2 + $0xda] sm:$0xff]
      %v1302 = vld [vmem:[#allocation2 + $0xe2] sm:$0xff]
      %v1303 = vld [vmem:[#allocation2 + $0xf2] sm:$0xff]
      %v1304 = vld [vmem:[#allocation2 + $0xfa] sm:$0xff]
      %v1305 = vld [vmem:[#allocation2 + $0x10a] sm:$0xff]
      %v1306 = vld [vmem:[#allocation2 + $0x112] sm:$0xff]
      %v1307 = vld [vmem:[#allocation2 + $0x122] sm:$0xff]
      %v1308 = vld [vmem:[#allocation2 + $0x12a] sm:$0xff]
      %v1309 = vld [vmem:[#allocation2 + $0x13a] sm:$0xff]
      %v1310 = vld [vmem:[#allocation2 + $0x142] sm:$0xff]
      %v1311 = vld [vmem:[#allocation2 + $0x152] sm:$0xff]
      %v1312 = vld [vmem:[#allocation2 + $0x15a] sm:$0xff]
      %v1313 = vld [vmem:[#allocation2 + $0x16a] sm:$0xff]
      %v1314 = vld [vmem:[#allocation2 + $0x172] sm:$0xff]
      %v1315 = vpack.c.bf16 %v1284, %v1283
      %v1316 = vpack.c.bf16 %v1286, %v1285
      %v1317 = vpack.c.bf16 %v1288, %v1287
      %v1318 = vpack.c.bf16 %v1290, %v1289
      %v1319 = vpack.c.bf16 %v1292, %v1291
      %v1320 = vpack.c.bf16 %v1294, %v1293
      %v1321 = vpack.c.bf16 %v1296, %v1295
      %v1322 = vpack.c.bf16 %v1298, %v1297
      %v1323 = vpack.c.bf16 %v1300, %v1299
      %v1324 = vpack.c.bf16 %v1302, %v1301
      %v1325 = vpack.c.bf16 %v1304, %v1303
      %v1326 = vpack.c.bf16 %v1306, %v1305
      %v1327 = vpack.c.bf16 %v1308, %v1307
      %v1328 = vpack.c.bf16 %v1310, %v1309
      %v1329 = vpack.c.bf16 %v1312, %v1311
      %v1330 = vpack.c.bf16 %v1314, %v1313
      %s1331 = scalar_lea.vmem %s3, 128
      %v1332 = vld [vmem:[%s1331] sm:$0xf]
      %v1333 = vld [vmem:[%s1331 + $0x4] sm:$0xf]
      %v1334 = vld [vmem:[%s1331 + $0x8] sm:$0xf]
      %v1335 = vld [vmem:[%s1331 + $0xc] sm:$0xf]
      %v1336 = vld [vmem:[%s1331 + $0x10] sm:$0xf]
      %v1337 = vld [vmem:[%s1331 + $0x14] sm:$0xf]
      %v1338 = vld [vmem:[%s1331 + $0x18] sm:$0xf]
      %v1339 = vld [vmem:[%s1331 + $0x1c] sm:$0xf]
      %v1340 = vld [vmem:[%s1331 + $0x20] sm:$0xf]
      %v1341 = vld [vmem:[%s1331 + $0x24] sm:$0xf]
      %v1342 = vld [vmem:[%s1331 + $0x28] sm:$0xf]
      %v1343 = vld [vmem:[%s1331 + $0x2c] sm:$0xf]
      %v1344 = vld [vmem:[%s1331 + $0x30] sm:$0xf]
      %v1345 = vld [vmem:[%s1331 + $0x34] sm:$0xf]
      %v1346 = vld [vmem:[%s1331 + $0x38] sm:$0xf]
      %v1347 = vld [vmem:[%s1331 + $0x3c] sm:$0xf]
      %v1364 = vunpack.c.l.b16 %v1332
      %v1365 = vunpack.c.l.b16 %v1333
      %v1366 = vunpack.c.l.b16 %v1334
      %v1367 = vunpack.c.l.b16 %v1335
      %v1368 = vunpack.c.l.b16 %v1336
      %v1369 = vunpack.c.l.b16 %v1337
      %v1370 = vunpack.c.l.b16 %v1338
      %v1371 = vunpack.c.l.b16 %v1339
      %v1372 = vunpack.c.l.b16 %v1340
      %v1373 = vunpack.c.l.b16 %v1341
      %v1374 = vunpack.c.l.b16 %v1342
      %v1375 = vunpack.c.l.b16 %v1343
      %v1376 = vunpack.c.l.b16 %v1344
      %v1377 = vunpack.c.l.b16 %v1345
      %v1378 = vunpack.c.l.b16 %v1346
      %v1379 = vunpack.c.l.b16 %v1347
      %v1380 = vpack.c.b16 %v1365, %v1364
      %v1381 = vpack.c.b16 %v1367, %v1366
      %v1382 = vpack.c.b16 %v1369, %v1368
      %v1383 = vpack.c.b16 %v1371, %v1370
      %v1384 = vpack.c.b16 %v1373, %v1372
      %v1385 = vpack.c.b16 %v1375, %v1374
      %v1386 = vpack.c.b16 %v1377, %v1376
      %v1387 = vpack.c.b16 %v1379, %v1378
      %1396 = vmatprep.subr.bf16.mxu0 0
      %1397 = vmatpush1.bf16.msra.mxu0 %v1380
      %1398 = vmatprep.subr.bf16.mxu0 0
      %1399 = vmatpush1.bf16.msra.mxu0 %v1381
      %1400 = vmatprep.subr.bf16.mxu0 0
      %1401 = vmatpush1.bf16.msra.mxu0 %v1382
      %1402 = vmatprep.subr.bf16.mxu0 0
      %1403 = vmatpush1.bf16.msra.mxu0 %v1383
      %1404 = vmatprep.subr.bf16.mxu0 0
      %1405 = vmatpush1.bf16.msra.mxu0 %v1384
      %1406 = vmatprep.subr.bf16.mxu0 0
      %1407 = vmatpush1.bf16.msra.mxu0 %v1385
      %1408 = vmatprep.subr.bf16.mxu0 0
      %1409 = vmatpush1.bf16.msra.mxu0 %v1386
      %1410 = vmatprep.subr.bf16.mxu0 0
      %1411 = vmatpush1.bf16.msra.mxu0 %v1387
      %1412 = vmatprep.subr.bf16.mxu0 0
      %1413 = vmatpush1.bf16.msra.mxu0 0
      %1414 = vmatprep.subr.bf16.mxu0 0
      %1415 = vmatpush1.bf16.msra.mxu0 0
      %1416 = vmatprep.subr.bf16.mxu0 0
      %1417 = vmatpush1.bf16.msra.mxu0 0
      %1418 = vmatprep.subr.bf16.mxu0 0
      %1419 = vmatpush1.bf16.msra.mxu0 0
      %1420 = vmatprep.subr.bf16.mxu0 0
      %1421 = vmatpush1.bf16.msra.mxu0 0
      %1422 = vmatprep.subr.bf16.mxu0 0
      %1423 = vmatpush1.bf16.msra.mxu0 0
      %1424 = vmatprep.subr.bf16.mxu0 0
      %1425 = vmatpush1.bf16.msra.mxu0 0
      %1426 = vmatprep.subr.bf16.mxu0 0
      %1427 = vmatpush1.bf16.msra.mxu0 0
      %1428 = vmatprep.mubr.bf16.mxu0 0
      %1429 = vmatmul.mubr.bf16.gmra.mrb[0].mxu0 %v1315
      %v1430 = vpop.f32.mrb[0].mxu0
      %v1431 = vadd.f32 0.0, %v1430
      %v1432 = vpop.f32.mrb[0].mxu0
      %v1433 = vpop.f32.mrb[0].mxu0
      %v1434 = vadd.f32 0.0, %v1433
      %v1435 = vpop.f32.mrb[0].mxu0
      %1436 = vmatprep.mubr.bf16.mxu0 0
      %1437 = vmatmul.mubr.bf16.gmra.mrb[0].mxu0 %v1316
      %v1438 = vpop.f32.mrb[0].mxu0
      %v1439 = vadd.f32 0.0, %v1438
      %v1440 = vpop.f32.mrb[0].mxu0
      %v1441 = vpop.f32.mrb[0].mxu0
      %v1442 = vadd.f32 0.0, %v1441
      %v1443 = vpop.f32.mrb[0].mxu0
      %1444 = vmatprep.mubr.bf16.mxu0 0
      %1445 = vmatmul.mubr.bf16.gmra.mrb[0].mxu0 %v1317
      %v1446 = vpop.f32.mrb[0].mxu0
      %v1447 = vadd.f32 0.0, %v1446
      %v1448 = vpop.f32.mrb[0].mxu0
      %v1449 = vpop.f32.mrb[0].mxu0
      %v1450 = vadd.f32 0.0, %v1449
      %v1451 = vpop.f32.mrb[0].mxu0
      %1452 = vmatprep.mubr.bf16.mxu0 0
      %1453 = vmatmul.mubr.bf16.gmra.mrb[0].mxu0 %v1318
      %v1454 = vpop.f32.mrb[0].mxu0
      %v1455 = vadd.f32 0.0, %v1454
      %v1456 = vpop.f32.mrb[0].mxu0
      %v1457 = vpop.f32.mrb[0].mxu0
      %v1458 = vadd.f32 0.0, %v1457
      %v1459 = vpop.f32.mrb[0].mxu0
      %1460 = vmatprep.mubr.bf16.mxu0 0
      %1461 = vmatmul.mubr.bf16.gmra.mrb[0].mxu0 %v1319
      %v1462 = vpop.f32.mrb[0].mxu0
      %v1463 = vadd.f32 0.0, %v1462
      %v1464 = vpop.f32.mrb[0].mxu0
      %v1465 = vpop.f32.mrb[0].mxu0
      %v1466 = vadd.f32 0.0, %v1465
      %v1467 = vpop.f32.mrb[0].mxu0
      %1468 = vmatprep.mubr.bf16.mxu0 0
      %1469 = vmatmul.mubr.bf16.gmra.mrb[0].mxu0 %v1320
      %v1470 = vpop.f32.mrb[0].mxu0
      %v1471 = vadd.f32 0.0, %v1470
      %v1472 = vpop.f32.mrb[0].mxu0
      %v1473 = vpop.f32.mrb[0].mxu0
      %v1474 = vadd.f32 0.0, %v1473
      %v1475 = vpop.f32.mrb[0].mxu0
      %1476 = vmatprep.mubr.bf16.mxu0 0
      %1477 = vmatmul.mubr.bf16.gmra.mrb[0].mxu0 %v1321
      %v1478 = vpop.f32.mrb[0].mxu0
      %v1479 = vadd.f32 0.0, %v1478
      %v1480 = vpop.f32.mrb[0].mxu0
      %v1481 = vpop.f32.mrb[0].mxu0
      %v1482 = vadd.f32 0.0, %v1481
      %v1483 = vpop.f32.mrb[0].mxu0
      %1484 = vmatprep.mubr.bf16.mxu0 0
      %1485 = vmatmul.mubr.bf16.gmra.mrb[0].mxu0 %v1322
      %v1486 = vpop.f32.mrb[0].mxu0
      %v1487 = vadd.f32 0.0, %v1486
      %v1488 = vpop.f32.mrb[0].mxu0
      %v1489 = vpop.f32.mrb[0].mxu0
      %v1490 = vadd.f32 0.0, %v1489
      %v1491 = vpop.f32.mrb[0].mxu0
      %1492 = vmatprep.mubr.bf16.mxu0 0
      %1493 = vmatmul.mubr.bf16.gmra.mrb[0].mxu0 %v1323
      %v1494 = vpop.f32.mrb[0].mxu0
      %v1495 = vadd.f32 0.0, %v1494
      %v1496 = vpop.f32.mrb[0].mxu0
      %v1497 = vpop.f32.mrb[0].mxu0
      %v1498 = vadd.f32 0.0, %v1497
      %v1499 = vpop.f32.mrb[0].mxu0
      %1500 = vmatprep.mubr.bf16.mxu0 0
      %1501 = vmatmul.mubr.bf16.gmra.mrb[0].mxu0 %v1324
      %v1502 = vpop.f32.mrb[0].mxu0
      %v1503 = vadd.f32 0.0, %v1502
      %v1504 = vpop.f32.mrb[0].mxu0
      %v1505 = vpop.f32.mrb[0].mxu0
      %v1506 = vadd.f32 0.0, %v1505
      %v1507 = vpop.f32.mrb[0].mxu0
      %1508 = vmatprep.mubr.bf16.mxu0 0
      %1509 = vmatmul.mubr.bf16.gmra.mrb[0].mxu0 %v1325
      %v1510 = vpop.f32.mrb[0].mxu0
      %v1511 = vadd.f32 0.0, %v1510
      %v1512 = vpop.f32.mrb[0].mxu0
      %v1513 = vpop.f32.mrb[0].mxu0
      %v1514 = vadd.f32 0.0, %v1513
      %v1515 = vpop.f32.mrb[0].mxu0
      %1516 = vmatprep.mubr.bf16.mxu0 0
      %1517 = vmatmul.mubr.bf16.gmra.mrb[0].mxu0 %v1326
      %v1518 = vpop.f32.mrb[0].mxu0
      %v1519 = vadd.f32 0.0, %v1518
      %v1520 = vpop.f32.mrb[0].mxu0
      %v1521 = vpop.f32.mrb[0].mxu0
      %v1522 = vadd.f32 0.0, %v1521
      %v1523 = vpop.f32.mrb[0].mxu0
      %1524 = vmatprep.mubr.bf16.mxu0 0
      %1525 = vmatmul.mubr.bf16.gmra.mrb[0].mxu0 %v1327
      %v1526 = vpop.f32.mrb[0].mxu0
      %v1527 = vadd.f32 0.0, %v1526
      %v1528 = vpop.f32.mrb[0].mxu0
      %v1529 = vpop.f32.mrb[0].mxu0
      %v1530 = vadd.f32 0.0, %v1529
      %v1531 = vpop.f32.mrb[0].mxu0
      %1532 = vmatprep.mubr.bf16.mxu0 0
      %1533 = vmatmul.mubr.bf16.gmra.mrb[0].mxu0 %v1328
      %v1534 = vpop.f32.mrb[0].mxu0
      %v1535 = vadd.f32 0.0, %v1534
      %v1536 = vpop.f32.mrb[0].mxu0
      %v1537 = vpop.f32.mrb[0].mxu0
      %v1538 = vadd.f32 0.0, %v1537
      %v1539 = vpop.f32.mrb[0].mxu0
      %1540 = vmatprep.mubr.bf16.mxu0 0
      %1541 = vmatmul.mubr.bf16.gmra.mrb[0].mxu0 %v1329
      %v1542 = vpop.f32.mrb[0].mxu0
      %v1543 = vadd.f32 0.0, %v1542
      %v1544 = vpop.f32.mrb[0].mxu0
      %v1545 = vpop.f32.mrb[0].mxu0
      %v1546 = vadd.f32 0.0, %v1545
      %v1547 = vpop.f32.mrb[0].mxu0
      %1548 = vmatprep.mubr.bf16.mxu0 0
      %1549 = vmatmul.mubr.bf16.gmra.mrb[0].mxu0 %v1330
      %v1550 = vpop.f32.mrb[0].mxu0
      %v1551 = vadd.f32 0.0, %v1550
      %v1552 = vpop.f32.mrb[0].mxu0
      %v1553 = vpop.f32.mrb[0].mxu0
      %v1554 = vadd.f32 0.0, %v1553
      %v1555 = vpop.f32.mrb[0].mxu0
      %1556 = vdwg.mxu0
      %v1557 = vadd.f32 %v1157, %v1431
      %v1558 = vadd.f32 %v1160, %v1434
      %v1559 = vadd.f32 %v1165, %v1439
      %v1560 = vadd.f32 %v1168, %v1442
      %v1561 = vadd.f32 %v1173, %v1447
      %v1562 = vadd.f32 %v1176, %v1450
      %v1563 = vadd.f32 %v1181, %v1455
      %v1564 = vadd.f32 %v1184, %v1458
      %v1565 = vadd.f32 %v1189, %v1463
      %v1566 = vadd.f32 %v1192, %v1466
      %v1567 = vadd.f32 %v1197, %v1471
      %v1568 = vadd.f32 %v1200, %v1474
      %v1569 = vadd.f32 %v1205, %v1479
      %v1570 = vadd.f32 %v1208, %v1482
      %v1571 = vadd.f32 %v1213, %v1487
      %v1572 = vadd.f32 %v1216, %v1490
      %v1573 = vadd.f32 %v1221, %v1495
      %v1574 = vadd.f32 %v1224, %v1498
      %v1575 = vadd.f32 %v1229, %v1503
      %v1576 = vadd.f32 %v1232, %v1506
      %v1577 = vadd.f32 %v1237, %v1511
      %v1578 = vadd.f32 %v1240, %v1514
      %v1579 = vadd.f32 %v1245, %v1519
      %v1580 = vadd.f32 %v1248, %v1522
      %v1581 = vadd.f32 %v1253, %v1527
      %v1582 = vadd.f32 %v1256, %v1530
      %v1583 = vadd.f32 %v1261, %v1535
      %v1584 = vadd.f32 %v1264, %v1538
      %v1585 = vadd.f32 %v1269, %v1543
      %v1586 = vadd.f32 %v1272, %v1546
      %v1587 = vadd.f32 %v1277, %v1551
      %v1588 = vadd.f32 %v1280, %v1554
      %v1589 = vld [vmem:[%s703] sm:$0xff]
      %v1590 = vld [vmem:[%s703 + $0x8] sm:$0xff]
      %v1591 = vld [vmem:[%s703 + $0x18] sm:$0xff]
      %v1592 = vld [vmem:[%s703 + $0x20] sm:$0xff]
      %v1593 = vld [vmem:[%s703 + $0x30] sm:$0xff]
      %v1594 = vld [vmem:[%s703 + $0x38] sm:$0xff]
      %v1595 = vld [vmem:[%s703 + $0x48] sm:$0xff]
      %v1596 = vld [vmem:[%s703 + $0x50] sm:$0xff]
      %v1597 = vld [vmem:[%s703 + $0x60] sm:$0xff]
      %v1598 = vld [vmem:[%s703 + $0x68] sm:$0xff]
      %v1599 = vld [vmem:[%s703 + $0x78] sm:$0xff]
      %v1600 = vld [vmem:[%s703 + $0x80] sm:$0xff]
      %v1601 = vld [vmem:[%s703 + $0x90] sm:$0xff]
      %v1602 = vld [vmem:[%s703 + $0x98] sm:$0xff]
      %v1603 = vld [vmem:[%s703 + $0xa8] sm:$0xff]
      %v1604 = vld [vmem:[%s703 + $0xb0] sm:$0xff]
      %v1605 = vld [vmem:[%s703 + $0xc0] sm:$0xff]
      %v1606 = vld [vmem:[%s703 + $0xc8] sm:$0xff]
      %v1607 = vld [vmem:[%s703 + $0xd8] sm:$0xff]
      %v1608 = vld [vmem:[%s703 + $0xe0] sm:$0xff]
      %v1609 = vld [vmem:[%s703 + $0xf0] sm:$0xff]
      %v1610 = vld [vmem:[%s703 + $0xf8] sm:$0xff]
      %v1611 = vld [vmem:[%s703 + $0x108] sm:$0xff]
      %v1612 = vld [vmem:[%s703 + $0x110] sm:$0xff]
      %v1613 = vld [vmem:[%s703 + $0x120] sm:$0xff]
      %v1614 = vld [vmem:[%s703 + $0x128] sm:$0xff]
      %v1615 = vld [vmem:[%s703 + $0x138] sm:$0xff]
      %v1616 = vld [vmem:[%s703 + $0x140] sm:$0xff]
      %v1617 = vld [vmem:[%s703 + $0x150] sm:$0xff]
      %v1618 = vld [vmem:[%s703 + $0x158] sm:$0xff]
      %v1619 = vld [vmem:[%s703 + $0x168] sm:$0xff]
      %v1620 = vld [vmem:[%s703 + $0x170] sm:$0xff]
      %v1621 = vpack.c.bf16 %v1590, %v1589
      %v1622 = vpack.c.bf16 %v1592, %v1591
      %v1623 = vpack.c.bf16 %v1594, %v1593
      %v1624 = vpack.c.bf16 %v1596, %v1595
      %v1625 = vpack.c.bf16 %v1598, %v1597
      %v1626 = vpack.c.bf16 %v1600, %v1599
      %v1627 = vpack.c.bf16 %v1602, %v1601
      %v1628 = vpack.c.bf16 %v1604, %v1603
      %v1629 = vpack.c.bf16 %v1606, %v1605
      %v1630 = vpack.c.bf16 %v1608, %v1607
      %v1631 = vpack.c.bf16 %v1610, %v1609
      %v1632 = vpack.c.bf16 %v1612, %v1611
      %v1633 = vpack.c.bf16 %v1614, %v1613
      %v1634 = vpack.c.bf16 %v1616, %v1615
      %v1635 = vpack.c.bf16 %v1618, %v1617
      %v1636 = vpack.c.bf16 %v1620, %v1619
      %s1637 = scalar_lea.vmem %s3, 192
      %v1638 = vld [vmem:[%s1637] sm:$0xf]
      %v1639 = vld [vmem:[%s1637 + $0x4] sm:$0xf]
      %v1640 = vld [vmem:[%s1637 + $0x8] sm:$0xf]
      %v1641 = vld [vmem:[%s1637 + $0xc] sm:$0xf]
      %v1642 = vld [vmem:[%s1637 + $0x10] sm:$0xf]
      %v1643 = vld [vmem:[%s1637 + $0x14] sm:$0xf]
      %v1644 = vld [vmem:[%s1637 + $0x18] sm:$0xf]
      %v1645 = vld [vmem:[%s1637 + $0x1c] sm:$0xf]
      %v1646 = vld [vmem:[%s1637 + $0x20] sm:$0xf]
      %v1647 = vld [vmem:[%s1637 + $0x24] sm:$0xf]
      %v1648 = vld [vmem:[%s1637 + $0x28] sm:$0xf]
      %v1649 = vld [vmem:[%s1637 + $0x2c] sm:$0xf]
      %v1650 = vld [vmem:[%s1637 + $0x30] sm:$0xf]
      %v1651 = vld [vmem:[%s1637 + $0x34] sm:$0xf]
      %v1652 = vld [vmem:[%s1637 + $0x38] sm:$0xf]
      %v1653 = vld [vmem:[%s1637 + $0x3c] sm:$0xf]
      %v1670 = vunpack.c.l.b16 %v1638
      %v1671 = vunpack.c.l.b16 %v1639
      %v1672 = vunpack.c.l.b16 %v1640
      %v1673 = vunpack.c.l.b16 %v1641
      %v1674 = vunpack.c.l.b16 %v1642
      %v1675 = vunpack.c.l.b16 %v1643
      %v1676 = vunpack.c.l.b16 %v1644
      %v1677 = vunpack.c.l.b16 %v1645
      %v1678 = vunpack.c.l.b16 %v1646
      %v1679 = vunpack.c.l.b16 %v1647
      %v1680 = vunpack.c.l.b16 %v1648
      %v1681 = vunpack.c.l.b16 %v1649
      %v1682 = vunpack.c.l.b16 %v1650
      %v1683 = vunpack.c.l.b16 %v1651
      %v1684 = vunpack.c.l.b16 %v1652
      %v1685 = vunpack.c.l.b16 %v1653
      %v1686 = vpack.c.b16 %v1671, %v1670
      %v1687 = vpack.c.b16 %v1673, %v1672
      %v1688 = vpack.c.b16 %v1675, %v1674
      %v1689 = vpack.c.b16 %v1677, %v1676
      %v1690 = vpack.c.b16 %v1679, %v1678
      %v1691 = vpack.c.b16 %v1681, %v1680
      %v1692 = vpack.c.b16 %v1683, %v1682
      %v1693 = vpack.c.b16 %v1685, %v1684
      %1702 = vmatprep.subr.bf16.mxu0 0
      %1703 = vmatpush1.bf16.msra.mxu0 %v1686
      %1704 = vmatprep.subr.bf16.mxu0 0
      %1705 = vmatpush1.bf16.msra.mxu0 %v1687
      %1706 = vmatprep.subr.bf16.mxu0 0
      %1707 = vmatpush1.bf16.msra.mxu0 %v1688
      %1708 = vmatprep.subr.bf16.mxu0 0
      %1709 = vmatpush1.bf16.msra.mxu0 %v1689
      %1710 = vmatprep.subr.bf16.mxu0 0
      %1711 = vmatpush1.bf16.msra.mxu0 %v1690
      %1712 = vmatprep.subr.bf16.mxu0 0
      %1713 = vmatpush1.bf16.msra.mxu0 %v1691
      %1714 = vmatprep.subr.bf16.mxu0 0
      %1715 = vmatpush1.bf16.msra.mxu0 %v1692
      %1716 = vmatprep.subr.bf16.mxu0 0
      %1717 = vmatpush1.bf16.msra.mxu0 %v1693
      %1718 = vmatprep.subr.bf16.mxu0 0
      %1719 = vmatpush1.bf16.msra.mxu0 0
      %1720 = vmatprep.subr.bf16.mxu0 0
      %1721 = vmatpush1.bf16.msra.mxu0 0
      %1722 = vmatprep.subr.bf16.mxu0 0
      %1723 = vmatpush1.bf16.msra.mxu0 0
      %1724 = vmatprep.subr.bf16.mxu0 0
      %1725 = vmatpush1.bf16.msra.mxu0 0
      %1726 = vmatprep.subr.bf16.mxu0 0
      %1727 = vmatpush1.bf16.msra.mxu0 0
      %1728 = vmatprep.subr.bf16.mxu0 0
      %1729 = vmatpush1.bf16.msra.mxu0 0
      %1730 = vmatprep.subr.bf16.mxu0 0
      %1731 = vmatpush1.bf16.msra.mxu0 0
      %1732 = vmatprep.subr.bf16.mxu0 0
      %1733 = vmatpush1.bf16.msra.mxu0 0
      %1734 = vmatprep.mubr.bf16.mxu0 0
      %1735 = vmatmul.mubr.bf16.gmra.mrb[0].mxu0 %v1621
      %v1736 = vpop.f32.mrb[0].mxu0
      %v1737 = vadd.f32 0.0, %v1736
      %v1738 = vpop.f32.mrb[0].mxu0
      %v1739 = vpop.f32.mrb[0].mxu0
      %v1740 = vadd.f32 0.0, %v1739
      %v1741 = vpop.f32.mrb[0].mxu0
      %1742 = vmatprep.mubr.bf16.mxu0 0
      %1743 = vmatmul.mubr.bf16.gmra.mrb[0].mxu0 %v1622
      %v1744 = vpop.f32.mrb[0].mxu0
      %v1745 = vadd.f32 0.0, %v1744
      %v1746 = vpop.f32.mrb[0].mxu0
      %v1747 = vpop.f32.mrb[0].mxu0
      %v1748 = vadd.f32 0.0, %v1747
      %v1749 = vpop.f32.mrb[0].mxu0
      %1750 = vmatprep.mubr.bf16.mxu0 0
      %1751 = vmatmul.mubr.bf16.gmra.mrb[0].mxu0 %v1623
      %v1752 = vpop.f32.mrb[0].mxu0
      %v1753 = vadd.f32 0.0, %v1752
      %v1754 = vpop.f32.mrb[0].mxu0
      %v1755 = vpop.f32.mrb[0].mxu0
      %v1756 = vadd.f32 0.0, %v1755
      %v1757 = vpop.f32.mrb[0].mxu0
      %1758 = vmatprep.mubr.bf16.mxu0 0
      %1759 = vmatmul.mubr.bf16.gmra.mrb[0].mxu0 %v1624
      %v1760 = vpop.f32.mrb[0].mxu0
      %v1761 = vadd.f32 0.0, %v1760
      %v1762 = vpop.f32.mrb[0].mxu0
      %v1763 = vpop.f32.mrb[0].mxu0
      %v1764 = vadd.f32 0.0, %v1763
      %v1765 = vpop.f32.mrb[0].mxu0
      %1766 = vmatprep.mubr.bf16.mxu0 0
      %1767 = vmatmul.mubr.bf16.gmra.mrb[0].mxu0 %v1625
      %v1768 = vpop.f32.mrb[0].mxu0
      %v1769 = vadd.f32 0.0, %v1768
      %v1770 = vpop.f32.mrb[0].mxu0
      %v1771 = vpop.f32.mrb[0].mxu0
      %v1772 = vadd.f32 0.0, %v1771
      %v1773 = vpop.f32.mrb[0].mxu0
      %1774 = vmatprep.mubr.bf16.mxu0 0
      %1775 = vmatmul.mubr.bf16.gmra.mrb[0].mxu0 %v1626
      %v1776 = vpop.f32.mrb[0].mxu0
      %v1777 = vadd.f32 0.0, %v1776
      %v1778 = vpop.f32.mrb[0].mxu0
      %v1779 = vpop.f32.mrb[0].mxu0
      %v1780 = vadd.f32 0.0, %v1779
      %v1781 = vpop.f32.mrb[0].mxu0
      %1782 = vmatprep.mubr.bf16.mxu0 0
      %1783 = vmatmul.mubr.bf16.gmra.mrb[0].mxu0 %v1627
      %v1784 = vpop.f32.mrb[0].mxu0
      %v1785 = vadd.f32 0.0, %v1784
      %v1786 = vpop.f32.mrb[0].mxu0
      %v1787 = vpop.f32.mrb[0].mxu0
      %v1788 = vadd.f32 0.0, %v1787
      %v1789 = vpop.f32.mrb[0].mxu0
      %1790 = vmatprep.mubr.bf16.mxu0 0
      %1791 = vmatmul.mubr.bf16.gmra.mrb[0].mxu0 %v1628
      %v1792 = vpop.f32.mrb[0].mxu0
      %v1793 = vadd.f32 0.0, %v1792
      %v1794 = vpop.f32.mrb[0].mxu0
      %v1795 = vpop.f32.mrb[0].mxu0
      %v1796 = vadd.f32 0.0, %v1795
      %v1797 = vpop.f32.mrb[0].mxu0
      %1798 = vmatprep.mubr.bf16.mxu0 0
      %1799 = vmatmul.mubr.bf16.gmra.mrb[0].mxu0 %v1629
      %v1800 = vpop.f32.mrb[0].mxu0
      %v1801 = vadd.f32 0.0, %v1800
      %v1802 = vpop.f32.mrb[0].mxu0
      %v1803 = vpop.f32.mrb[0].mxu0
      %v1804 = vadd.f32 0.0, %v1803
      %v1805 = vpop.f32.mrb[0].mxu0
      %1806 = vmatprep.mubr.bf16.mxu0 0
      %1807 = vmatmul.mubr.bf16.gmra.mrb[0].mxu0 %v1630
      %v1808 = vpop.f32.mrb[0].mxu0
      %v1809 = vadd.f32 0.0, %v1808
      %v1810 = vpop.f32.mrb[0].mxu0
      %v1811 = vpop.f32.mrb[0].mxu0
      %v1812 = vadd.f32 0.0, %v1811
      %v1813 = vpop.f32.mrb[0].mxu0
      %1814 = vmatprep.mubr.bf16.mxu0 0
      %1815 = vmatmul.mubr.bf16.gmra.mrb[0].mxu0 %v1631
      %v1816 = vpop.f32.mrb[0].mxu0
      %v1817 = vadd.f32 0.0, %v1816
      %v1818 = vpop.f32.mrb[0].mxu0
      %v1819 = vpop.f32.mrb[0].mxu0
      %v1820 = vadd.f32 0.0, %v1819
      %v1821 = vpop.f32.mrb[0].mxu0
      %1822 = vmatprep.mubr.bf16.mxu0 0
      %1823 = vmatmul.mubr.bf16.gmra.mrb[0].mxu0 %v1632
      %v1824 = vpop.f32.mrb[0].mxu0
      %v1825 = vadd.f32 0.0, %v1824
      %v1826 = vpop.f32.mrb[0].mxu0
      %v1827 = vpop.f32.mrb[0].mxu0
      %v1828 = vadd.f32 0.0, %v1827
      %v1829 = vpop.f32.mrb[0].mxu0
      %1830 = vmatprep.mubr.bf16.mxu0 0
      %1831 = vmatmul.mubr.bf16.gmra.mrb[0].mxu0 %v1633
      %v1832 = vpop.f32.mrb[0].mxu0
      %v1833 = vadd.f32 0.0, %v1832
      %v1834 = vpop.f32.mrb[0].mxu0
      %v1835 = vpop.f32.mrb[0].mxu0
      %v1836 = vadd.f32 0.0, %v1835
      %v1837 = vpop.f32.mrb[0].mxu0
      %1838 = vmatprep.mubr.bf16.mxu0 0
      %1839 = vmatmul.mubr.bf16.gmra.mrb[0].mxu0 %v1634
      %v1840 = vpop.f32.mrb[0].mxu0
      %v1841 = vadd.f32 0.0, %v1840
      %v1842 = vpop.f32.mrb[0].mxu0
      %v1843 = vpop.f32.mrb[0].mxu0
      %v1844 = vadd.f32 0.0, %v1843
      %v1845 = vpop.f32.mrb[0].mxu0
      %1846 = vmatprep.mubr.bf16.mxu0 0
      %1847 = vmatmul.mubr.bf16.gmra.mrb[0].mxu0 %v1635
      %v1848 = vpop.f32.mrb[0].mxu0
      %v1849 = vadd.f32 0.0, %v1848
      %v1850 = vpop.f32.mrb[0].mxu0
      %v1851 = vpop.f32.mrb[0].mxu0
      %v1852 = vadd.f32 0.0, %v1851
      %v1853 = vpop.f32.mrb[0].mxu0
      %1854 = vmatprep.mubr.bf16.mxu0 0
      %1855 = vmatmul.mubr.bf16.gmra.mrb[0].mxu0 %v1636
      %v1856 = vpop.f32.mrb[0].mxu0
      %v1857 = vadd.f32 0.0, %v1856
      %v1858 = vpop.f32.mrb[0].mxu0
      %v1859 = vpop.f32.mrb[0].mxu0
      %v1860 = vadd.f32 0.0, %v1859
      %v1861 = vpop.f32.mrb[0].mxu0
      %1862 = vdwg.mxu0
      %v1863 = vadd.f32 %v1557, %v1737
      %v1864 = vadd.f32 %v1558, %v1740
      %v1865 = vadd.f32 %v1559, %v1745
      %v1866 = vadd.f32 %v1560, %v1748
      %v1867 = vadd.f32 %v1561, %v1753
      %v1868 = vadd.f32 %v1562, %v1756
      %v1869 = vadd.f32 %v1563, %v1761
      %v1870 = vadd.f32 %v1564, %v1764
      %v1871 = vadd.f32 %v1565, %v1769
      %v1872 = vadd.f32 %v1566, %v1772
      %v1873 = vadd.f32 %v1567, %v1777
      %v1874 = vadd.f32 %v1568, %v1780
      %v1875 = vadd.f32 %v1569, %v1785
      %v1876 = vadd.f32 %v1570, %v1788
      %v1877 = vadd.f32 %v1571, %v1793
      %v1878 = vadd.f32 %v1572, %v1796
      %v1879 = vadd.f32 %v1573, %v1801
      %v1880 = vadd.f32 %v1574, %v1804
      %v1881 = vadd.f32 %v1575, %v1809
      %v1882 = vadd.f32 %v1576, %v1812
      %v1883 = vadd.f32 %v1577, %v1817
      %v1884 = vadd.f32 %v1578, %v1820
      %v1885 = vadd.f32 %v1579, %v1825
      %v1886 = vadd.f32 %v1580, %v1828
      %v1887 = vadd.f32 %v1581, %v1833
      %v1888 = vadd.f32 %v1582, %v1836
      %v1889 = vadd.f32 %v1583, %v1841
      %v1890 = vadd.f32 %v1584, %v1844
      %v1891 = vadd.f32 %v1585, %v1849
      %v1892 = vadd.f32 %v1586, %v1852
      %v1893 = vadd.f32 %v1587, %v1857
      %v1894 = vadd.f32 %v1588, %v1860
      %v1895 = vld [vmem:[%s703 + $0x1] sm:$0xff]
      %v1896 = vld [vmem:[%s703 + $0x9] sm:$0xff]
      %v1897 = vld [vmem:[%s703 + $0x19] sm:$0xff]
      %v1898 = vld [vmem:[%s703 + $0x21] sm:$0xff]
      %v1899 = vld [vmem:[%s703 + $0x31] sm:$0xff]
      %v1900 = vld [vmem:[%s703 + $0x39] sm:$0xff]
      %v1901 = vld [vmem:[%s703 + $0x49] sm:$0xff]
      %v1902 = vld [vmem:[%s703 + $0x51] sm:$0xff]
      %v1903 = vld [vmem:[%s703 + $0x61] sm:$0xff]
      %v1904 = vld [vmem:[%s703 + $0x69] sm:$0xff]
      %v1905 = vld [vmem:[%s703 + $0x79] sm:$0xff]
      %v1906 = vld [vmem:[%s703 + $0x81] sm:$0xff]
      %v1907 = vld [vmem:[%s703 + $0x91] sm:$0xff]
      %v1908 = vld [vmem:[%s703 + $0x99] sm:$0xff]
      %v1909 = vld [vmem:[%s703 + $0xa9] sm:$0xff]
      %v1910 = vld [vmem:[%s703 + $0xb1] sm:$0xff]
      %v1911 = vld [vmem:[%s703 + $0xc1] sm:$0xff]
      %v1912 = vld [vmem:[%s703 + $0xc9] sm:$0xff]
      %v1913 = vld [vmem:[%s703 + $0xd9] sm:$0xff]
      %v1914 = vld [vmem:[%s703 + $0xe1] sm:$0xff]
      %v1915 = vld [vmem:[%s703 + $0xf1] sm:$0xff]
      %v1916 = vld [vmem:[%s703 + $0xf9] sm:$0xff]
      %v1917 = vld [vmem:[%s703 + $0x109] sm:$0xff]
      %v1918 = vld [vmem:[%s703 + $0x111] sm:$0xff]
      %v1919 = vld [vmem:[%s703 + $0x121] sm:$0xff]
      %v1920 = vld [vmem:[%s703 + $0x129] sm:$0xff]
      %v1921 = vld [vmem:[%s703 + $0x139] sm:$0xff]
      %v1922 = vld [vmem:[%s703 + $0x141] sm:$0xff]
      %v1923 = vld [vmem:[%s703 + $0x151] sm:$0xff]
      %v1924 = vld [vmem:[%s703 + $0x159] sm:$0xff]
      %v1925 = vld [vmem:[%s703 + $0x169] sm:$0xff]
      %v1926 = vld [vmem:[%s703 + $0x171] sm:$0xff]
      %v1927 = vpack.c.bf16 %v1896, %v1895
      %v1928 = vpack.c.bf16 %v1898, %v1897
      %v1929 = vpack.c.bf16 %v1900, %v1899
      %v1930 = vpack.c.bf16 %v1902, %v1901
      %v1931 = vpack.c.bf16 %v1904, %v1903
      %v1932 = vpack.c.bf16 %v1906, %v1905
      %v1933 = vpack.c.bf16 %v1908, %v1907
      %v1934 = vpack.c.bf16 %v1910, %v1909
      %v1935 = vpack.c.bf16 %v1912, %v1911
      %v1936 = vpack.c.bf16 %v1914, %v1913
      %v1937 = vpack.c.bf16 %v1916, %v1915
      %v1938 = vpack.c.bf16 %v1918, %v1917
      %v1939 = vpack.c.bf16 %v1920, %v1919
      %v1940 = vpack.c.bf16 %v1922, %v1921
      %v1941 = vpack.c.bf16 %v1924, %v1923
      %v1942 = vpack.c.bf16 %v1926, %v1925
      %s1943 = scalar_lea.vmem %s3, 256
      %v1944 = vld [vmem:[%s1943] sm:$0xf]
      %v1945 = vld [vmem:[%s1943 + $0x4] sm:$0xf]
      %v1946 = vld [vmem:[%s1943 + $0x8] sm:$0xf]
      %v1947 = vld [vmem:[%s1943 + $0xc] sm:$0xf]
      %v1948 = vld [vmem:[%s1943 + $0x10] sm:$0xf]
      %v1949 = vld [vmem:[%s1943 + $0x14] sm:$0xf]
      %v1950 = vld [vmem:[%s1943 + $0x18] sm:$0xf]
      %v1951 = vld [vmem:[%s1943 + $0x1c] sm:$0xf]
      %v1952 = vld [vmem:[%s1943 + $0x20] sm:$0xf]
      %v1953 = vld [vmem:[%s1943 + $0x24] sm:$0xf]
      %v1954 = vld [vmem:[%s1943 + $0x28] sm:$0xf]
      %v1955 = vld [vmem:[%s1943 + $0x2c] sm:$0xf]
      %v1956 = vld [vmem:[%s1943 + $0x30] sm:$0xf]
      %v1957 = vld [vmem:[%s1943 + $0x34] sm:$0xf]
      %v1958 = vld [vmem:[%s1943 + $0x38] sm:$0xf]
      %v1959 = vld [vmem:[%s1943 + $0x3c] sm:$0xf]
      %v1976 = vunpack.c.l.b16 %v1944
      %v1977 = vunpack.c.l.b16 %v1945
      %v1978 = vunpack.c.l.b16 %v1946
      %v1979 = vunpack.c.l.b16 %v1947
      %v1980 = vunpack.c.l.b16 %v1948
      %v1981 = vunpack.c.l.b16 %v1949
      %v1982 = vunpack.c.l.b16 %v1950
      %v1983 = vunpack.c.l.b16 %v1951
      %v1984 = vunpack.c.l.b16 %v1952
      %v1985 = vunpack.c.l.b16 %v1953
      %v1986 = vunpack.c.l.b16 %v1954
      %v1987 = vunpack.c.l.b16 %v1955
      %v1988 = vunpack.c.l.b16 %v1956
      %v1989 = vunpack.c.l.b16 %v1957
      %v1990 = vunpack.c.l.b16 %v1958
      %v1991 = vunpack.c.l.b16 %v1959
      %v1992 = vpack.c.b16 %v1977, %v1976
      %v1993 = vpack.c.b16 %v1979, %v1978
      %v1994 = vpack.c.b16 %v1981, %v1980
      %v1995 = vpack.c.b16 %v1983, %v1982
      %v1996 = vpack.c.b16 %v1985, %v1984
      %v1997 = vpack.c.b16 %v1987, %v1986
      %v1998 = vpack.c.b16 %v1989, %v1988
      %v1999 = vpack.c.b16 %v1991, %v1990
      %2008 = vmatprep.subr.bf16.mxu0 0
      %2009 = vmatpush1.bf16.msra.mxu0 %v1992
      %2010 = vmatprep.subr.bf16.mxu0 0
      %2011 = vmatpush1.bf16.msra.mxu0 %v1993
      %2012 = vmatprep.subr.bf16.mxu0 0
      %2013 = vmatpush1.bf16.msra.mxu0 %v1994
      %2014 = vmatprep.subr.bf16.mxu0 0
      %2015 = vmatpush1.bf16.msra.mxu0 %v1995
      %2016 = vmatprep.subr.bf16.mxu0 0
      %2017 = vmatpush1.bf16.msra.mxu0 %v1996
      %2018 = vmatprep.subr.bf16.mxu0 0
      %2019 = vmatpush1.bf16.msra.mxu0 %v1997
      %2020 = vmatprep.subr.bf16.mxu0 0
      %2021 = vmatpush1.bf16.msra.mxu0 %v1998
      %2022 = vmatprep.subr.bf16.mxu0 0
      %2023 = vmatpush1.bf16.msra.mxu0 %v1999
      %2024 = vmatprep.subr.bf16.mxu0 0
      %2025 = vmatpush1.bf16.msra.mxu0 0
      %2026 = vmatprep.subr.bf16.mxu0 0
      %2027 = vmatpush1.bf16.msra.mxu0 0
      %2028 = vmatprep.subr.bf16.mxu0 0
      %2029 = vmatpush1.bf16.msra.mxu0 0
      %2030 = vmatprep.subr.bf16.mxu0 0
      %2031 = vmatpush1.bf16.msra.mxu0 0
      %2032 = vmatprep.subr.bf16.mxu0 0
      %2033 = vmatpush1.bf16.msra.mxu0 0
      %2034 = vmatprep.subr.bf16.mxu0 0
      %2035 = vmatpush1.bf16.msra.mxu0 0
      %2036 = vmatprep.subr.bf16.mxu0 0
      %2037 = vmatpush1.bf16.msra.mxu0 0
      %2038 = vmatprep.subr.bf16.mxu0 0
      %2039 = vmatpush1.bf16.msra.mxu0 0
      %2040 = vmatprep.mubr.bf16.mxu0 0
      %2041 = vmatmul.mubr.bf16.gmra.mrb[0].mxu0 %v1927
      %v2042 = vpop.f32.mrb[0].mxu0
      %v2043 = vadd.f32 0.0, %v2042
      %v2044 = vpop.f32.mrb[0].mxu0
      %v2045 = vpop.f32.mrb[0].mxu0
      %v2046 = vadd.f32 0.0, %v2045
      %v2047 = vpop.f32.mrb[0].mxu0
      %2048 = vmatprep.mubr.bf16.mxu0 0
      %2049 = vmatmul.mubr.bf16.gmra.mrb[0].mxu0 %v1928
      %v2050 = vpop.f32.mrb[0].mxu0
      %v2051 = vadd.f32 0.0, %v2050
      %v2052 = vpop.f32.mrb[0].mxu0
      %v2053 = vpop.f32.mrb[0].mxu0
      %v2054 = vadd.f32 0.0, %v2053
      %v2055 = vpop.f32.mrb[0].mxu0
      %2056 = vmatprep.mubr.bf16.mxu0 0
      %2057 = vmatmul.mubr.bf16.gmra.mrb[0].mxu0 %v1929
      %v2058 = vpop.f32.mrb[0].mxu0
      %v2059 = vadd.f32 0.0, %v2058
      %v2060 = vpop.f32.mrb[0].mxu0
      %v2061 = vpop.f32.mrb[0].mxu0
      %v2062 = vadd.f32 0.0, %v2061
      %v2063 = vpop.f32.mrb[0].mxu0
      %2064 = vmatprep.mubr.bf16.mxu0 0
      %2065 = vmatmul.mubr.bf16.gmra.mrb[0].mxu0 %v1930
      %v2066 = vpop.f32.mrb[0].mxu0
      %v2067 = vadd.f32 0.0, %v2066
      %v2068 = vpop.f32.mrb[0].mxu0
      %v2069 = vpop.f32.mrb[0].mxu0
      %v2070 = vadd.f32 0.0, %v2069
      %v2071 = vpop.f32.mrb[0].mxu0
      %2072 = vmatprep.mubr.bf16.mxu0 0
      %2073 = vmatmul.mubr.bf16.gmra.mrb[0].mxu0 %v1931
      %v2074 = vpop.f32.mrb[0].mxu0
      %v2075 = vadd.f32 0.0, %v2074
      %v2076 = vpop.f32.mrb[0].mxu0
      %v2077 = vpop.f32.mrb[0].mxu0
      %v2078 = vadd.f32 0.0, %v2077
      %v2079 = vpop.f32.mrb[0].mxu0
      %2080 = vmatprep.mubr.bf16.mxu0 0
      %2081 = vmatmul.mubr.bf16.gmra.mrb[0].mxu0 %v1932
      %v2082 = vpop.f32.mrb[0].mxu0
      %v2083 = vadd.f32 0.0, %v2082
      %v2084 = vpop.f32.mrb[0].mxu0
      %v2085 = vpop.f32.mrb[0].mxu0
      %v2086 = vadd.f32 0.0, %v2085
      %v2087 = vpop.f32.mrb[0].mxu0
      %2088 = vmatprep.mubr.bf16.mxu0 0
      %2089 = vmatmul.mubr.bf16.gmra.mrb[0].mxu0 %v1933
      %v2090 = vpop.f32.mrb[0].mxu0
      %v2091 = vadd.f32 0.0, %v2090
      %v2092 = vpop.f32.mrb[0].mxu0
      %v2093 = vpop.f32.mrb[0].mxu0
      %v2094 = vadd.f32 0.0, %v2093
      %v2095 = vpop.f32.mrb[0].mxu0
      %2096 = vmatprep.mubr.bf16.mxu0 0
      %2097 = vmatmul.mubr.bf16.gmra.mrb[0].mxu0 %v1934
      %v2098 = vpop.f32.mrb[0].mxu0
      %v2099 = vadd.f32 0.0, %v2098
      %v2100 = vpop.f32.mrb[0].mxu0
      %v2101 = vpop.f32.mrb[0].mxu0
      %v2102 = vadd.f32 0.0, %v2101
      %v2103 = vpop.f32.mrb[0].mxu0
      %2104 = vmatprep.mubr.bf16.mxu0 0
      %2105 = vmatmul.mubr.bf16.gmra.mrb[0].mxu0 %v1935
      %v2106 = vpop.f32.mrb[0].mxu0
      %v2107 = vadd.f32 0.0, %v2106
      %v2108 = vpop.f32.mrb[0].mxu0
      %v2109 = vpop.f32.mrb[0].mxu0
      %v2110 = vadd.f32 0.0, %v2109
      %v2111 = vpop.f32.mrb[0].mxu0
      %2112 = vmatprep.mubr.bf16.mxu0 0
      %2113 = vmatmul.mubr.bf16.gmra.mrb[0].mxu0 %v1936
      %v2114 = vpop.f32.mrb[0].mxu0
      %v2115 = vadd.f32 0.0, %v2114
      %v2116 = vpop.f32.mrb[0].mxu0
      %v2117 = vpop.f32.mrb[0].mxu0
      %v2118 = vadd.f32 0.0, %v2117
      %v2119 = vpop.f32.mrb[0].mxu0
      %2120 = vmatprep.mubr.bf16.mxu0 0
      %2121 = vmatmul.mubr.bf16.gmra.mrb[0].mxu0 %v1937
      %v2122 = vpop.f32.mrb[0].mxu0
      %v2123 = vadd.f32 0.0, %v2122
      %v2124 = vpop.f32.mrb[0].mxu0
      %v2125 = vpop.f32.mrb[0].mxu0
      %v2126 = vadd.f32 0.0, %v2125
      %v2127 = vpop.f32.mrb[0].mxu0
      %2128 = vmatprep.mubr.bf16.mxu0 0
      %2129 = vmatmul.mubr.bf16.gmra.mrb[0].mxu0 %v1938
      %v2130 = vpop.f32.mrb[0].mxu0
      %v2131 = vadd.f32 0.0, %v2130
      %v2132 = vpop.f32.mrb[0].mxu0
      %v2133 = vpop.f32.mrb[0].mxu0
      %v2134 = vadd.f32 0.0, %v2133
      %v2135 = vpop.f32.mrb[0].mxu0
      %2136 = vmatprep.mubr.bf16.mxu0 0
      %2137 = vmatmul.mubr.bf16.gmra.mrb[0].mxu0 %v1939
      %v2138 = vpop.f32.mrb[0].mxu0
      %v2139 = vadd.f32 0.0, %v2138
      %v2140 = vpop.f32.mrb[0].mxu0
      %v2141 = vpop.f32.mrb[0].mxu0
      %v2142 = vadd.f32 0.0, %v2141
      %v2143 = vpop.f32.mrb[0].mxu0
      %2144 = vmatprep.mubr.bf16.mxu0 0
      %2145 = vmatmul.mubr.bf16.gmra.mrb[0].mxu0 %v1940
      %v2146 = vpop.f32.mrb[0].mxu0
      %v2147 = vadd.f32 0.0, %v2146
      %v2148 = vpop.f32.mrb[0].mxu0
      %v2149 = vpop.f32.mrb[0].mxu0
      %v2150 = vadd.f32 0.0, %v2149
      %v2151 = vpop.f32.mrb[0].mxu0
      %2152 = vmatprep.mubr.bf16.mxu0 0
      %2153 = vmatmul.mubr.bf16.gmra.mrb[0].mxu0 %v1941
      %v2154 = vpop.f32.mrb[0].mxu0
      %v2155 = vadd.f32 0.0, %v2154
      %v2156 = vpop.f32.mrb[0].mxu0
      %v2157 = vpop.f32.mrb[0].mxu0
      %v2158 = vadd.f32 0.0, %v2157
      %v2159 = vpop.f32.mrb[0].mxu0
      %2160 = vmatprep.mubr.bf16.mxu0 0
      %2161 = vmatmul.mubr.bf16.gmra.mrb[0].mxu0 %v1942
      %v2162 = vpop.f32.mrb[0].mxu0
      %v2163 = vadd.f32 0.0, %v2162
      %v2164 = vpop.f32.mrb[0].mxu0
      %v2165 = vpop.f32.mrb[0].mxu0
      %v2166 = vadd.f32 0.0, %v2165
      %v2167 = vpop.f32.mrb[0].mxu0
      %2168 = vdwg.mxu0
      %v2169 = vadd.f32 %v1863, %v2043
      %v2170 = vadd.f32 %v1864, %v2046
      %v2171 = vadd.f32 %v1865, %v2051
      %v2172 = vadd.f32 %v1866, %v2054
      %v2173 = vadd.f32 %v1867, %v2059
      %v2174 = vadd.f32 %v1868, %v2062
      %v2175 = vadd.f32 %v1869, %v2067
      %v2176 = vadd.f32 %v1870, %v2070
      %v2177 = vadd.f32 %v1871, %v2075
      %v2178 = vadd.f32 %v1872, %v2078
      %v2179 = vadd.f32 %v1873, %v2083
      %v2180 = vadd.f32 %v1874, %v2086
      %v2181 = vadd.f32 %v1875, %v2091
      %v2182 = vadd.f32 %v1876, %v2094
      %v2183 = vadd.f32 %v1877, %v2099
      %v2184 = vadd.f32 %v1878, %v2102
      %v2185 = vadd.f32 %v1879, %v2107
      %v2186 = vadd.f32 %v1880, %v2110
      %v2187 = vadd.f32 %v1881, %v2115
      %v2188 = vadd.f32 %v1882, %v2118
      %v2189 = vadd.f32 %v1883, %v2123
      %v2190 = vadd.f32 %v1884, %v2126
      %v2191 = vadd.f32 %v1885, %v2131
      %v2192 = vadd.f32 %v1886, %v2134
      %v2193 = vadd.f32 %v1887, %v2139
      %v2194 = vadd.f32 %v1888, %v2142
      %v2195 = vadd.f32 %v1889, %v2147
      %v2196 = vadd.f32 %v1890, %v2150
      %v2197 = vadd.f32 %v1891, %v2155
      %v2198 = vadd.f32 %v1892, %v2158
      %v2199 = vadd.f32 %v1893, %v2163
      %v2200 = vadd.f32 %v1894, %v2166
      %v2201 = vld [vmem:[%s703 + $0x2] sm:$0xff]
      %v2202 = vld [vmem:[%s703 + $0xa] sm:$0xff]
      %v2203 = vld [vmem:[%s703 + $0x1a] sm:$0xff]
      %v2204 = vld [vmem:[%s703 + $0x22] sm:$0xff]
      %v2205 = vld [vmem:[%s703 + $0x32] sm:$0xff]
      %v2206 = vld [vmem:[%s703 + $0x3a] sm:$0xff]
      %v2207 = vld [vmem:[%s703 + $0x4a] sm:$0xff]
      %v2208 = vld [vmem:[%s703 + $0x52] sm:$0xff]
      %v2209 = vld [vmem:[%s703 + $0x62] sm:$0xff]
      %v2210 = vld [vmem:[%s703 + $0x6a] sm:$0xff]
      %v2211 = vld [vmem:[%s703 + $0x7a] sm:$0xff]
      %v2212 = vld [vmem:[%s703 + $0x82] sm:$0xff]
      %v2213 = vld [vmem:[%s703 + $0x92] sm:$0xff]
      %v2214 = vld [vmem:[%s703 + $0x9a] sm:$0xff]
      %v2215 = vld [vmem:[%s703 + $0xaa] sm:$0xff]
      %v2216 = vld [vmem:[%s703 + $0xb2] sm:$0xff]
      %v2217 = vld [vmem:[%s703 + $0xc2] sm:$0xff]
      %v2218 = vld [vmem:[%s703 + $0xca] sm:$0xff]
      %v2219 = vld [vmem:[%s703 + $0xda] sm:$0xff]
      %v2220 = vld [vmem:[%s703 + $0xe2] sm:$0xff]
      %v2221 = vld [vmem:[%s703 + $0xf2] sm:$0xff]
      %v2222 = vld [vmem:[%s703 + $0xfa] sm:$0xff]
      %v2223 = vld [vmem:[%s703 + $0x10a] sm:$0xff]
      %v2224 = vld [vmem:[%s703 + $0x112] sm:$0xff]
      %v2225 = vld [vmem:[%s703 + $0x122] sm:$0xff]
      %v2226 = vld [vmem:[%s703 + $0x12a] sm:$0xff]
      %v2227 = vld [vmem:[%s703 + $0x13a] sm:$0xff]
      %v2228 = vld [vmem:[%s703 + $0x142] sm:$0xff]
      %v2229 = vld [vmem:[%s703 + $0x152] sm:$0xff]
      %v2230 = vld [vmem:[%s703 + $0x15a] sm:$0xff]
      %v2231 = vld [vmem:[%s703 + $0x16a] sm:$0xff]
      %v2232 = vld [vmem:[%s703 + $0x172] sm:$0xff]
      %v2233 = vpack.c.bf16 %v2202, %v2201
      %v2234 = vpack.c.bf16 %v2204, %v2203
      %v2235 = vpack.c.bf16 %v2206, %v2205
      %v2236 = vpack.c.bf16 %v2208, %v2207
      %v2237 = vpack.c.bf16 %v2210, %v2209
      %v2238 = vpack.c.bf16 %v2212, %v2211
      %v2239 = vpack.c.bf16 %v2214, %v2213
      %v2240 = vpack.c.bf16 %v2216, %v2215
      %v2241 = vpack.c.bf16 %v2218, %v2217
      %v2242 = vpack.c.bf16 %v2220, %v2219
      %v2243 = vpack.c.bf16 %v2222, %v2221
      %v2244 = vpack.c.bf16 %v2224, %v2223
      %v2245 = vpack.c.bf16 %v2226, %v2225
      %v2246 = vpack.c.bf16 %v2228, %v2227
      %v2247 = vpack.c.bf16 %v2230, %v2229
      %v2248 = vpack.c.bf16 %v2232, %v2231
      %s2249 = scalar_lea.vmem %s3, 320
      %v2250 = vld [vmem:[%s2249] sm:$0xf]
      %v2251 = vld [vmem:[%s2249 + $0x4] sm:$0xf]
      %v2252 = vld [vmem:[%s2249 + $0x8] sm:$0xf]
      %v2253 = vld [vmem:[%s2249 + $0xc] sm:$0xf]
      %v2254 = vld [vmem:[%s2249 + $0x10] sm:$0xf]
      %v2255 = vld [vmem:[%s2249 + $0x14] sm:$0xf]
      %v2256 = vld [vmem:[%s2249 + $0x18] sm:$0xf]
      %v2257 = vld [vmem:[%s2249 + $0x1c] sm:$0xf]
      %v2258 = vld [vmem:[%s2249 + $0x20] sm:$0xf]
      %v2259 = vld [vmem:[%s2249 + $0x24] sm:$0xf]
      %v2260 = vld [vmem:[%s2249 + $0x28] sm:$0xf]
      %v2261 = vld [vmem:[%s2249 + $0x2c] sm:$0xf]
      %v2262 = vld [vmem:[%s2249 + $0x30] sm:$0xf]
      %v2263 = vld [vmem:[%s2249 + $0x34] sm:$0xf]
      %v2264 = vld [vmem:[%s2249 + $0x38] sm:$0xf]
      %v2265 = vld [vmem:[%s2249 + $0x3c] sm:$0xf]
      %v2282 = vunpack.c.l.b16 %v2250
      %v2283 = vunpack.c.l.b16 %v2251
      %v2284 = vunpack.c.l.b16 %v2252
      %v2285 = vunpack.c.l.b16 %v2253
      %v2286 = vunpack.c.l.b16 %v2254
      %v2287 = vunpack.c.l.b16 %v2255
      %v2288 = vunpack.c.l.b16 %v2256
      %v2289 = vunpack.c.l.b16 %v2257
      %v2290 = vunpack.c.l.b16 %v2258
      %v2291 = vunpack.c.l.b16 %v2259
      %v2292 = vunpack.c.l.b16 %v2260
      %v2293 = vunpack.c.l.b16 %v2261
      %v2294 = vunpack.c.l.b16 %v2262
      %v2295 = vunpack.c.l.b16 %v2263
      %v2296 = vunpack.c.l.b16 %v2264
      %v2297 = vunpack.c.l.b16 %v2265
      %v2298 = vpack.c.b16 %v2283, %v2282
      %v2299 = vpack.c.b16 %v2285, %v2284
      %v2300 = vpack.c.b16 %v2287, %v2286
      %v2301 = vpack.c.b16 %v2289, %v2288
      %v2302 = vpack.c.b16 %v2291, %v2290
      %v2303 = vpack.c.b16 %v2293, %v2292
      %v2304 = vpack.c.b16 %v2295, %v2294
      %v2305 = vpack.c.b16 %v2297, %v2296
      %2314 = vmatprep.subr.bf16.mxu0 0
      %2315 = vmatpush1.bf16.msra.mxu0 %v2298
      %2316 = vmatprep.subr.bf16.mxu0 0
      %2317 = vmatpush1.bf16.msra.mxu0 %v2299
      %2318 = vmatprep.subr.bf16.mxu0 0
      %2319 = vmatpush1.bf16.msra.mxu0 %v2300
      %2320 = vmatprep.subr.bf16.mxu0 0
      %2321 = vmatpush1.bf16.msra.mxu0 %v2301
      %2322 = vmatprep.subr.bf16.mxu0 0
      %2323 = vmatpush1.bf16.msra.mxu0 %v2302
      %2324 = vmatprep.subr.bf16.mxu0 0
      %2325 = vmatpush1.bf16.msra.mxu0 %v2303
      %2326 = vmatprep.subr.bf16.mxu0 0
      %2327 = vmatpush1.bf16.msra.mxu0 %v2304
      %2328 = vmatprep.subr.bf16.mxu0 0
      %2329 = vmatpush1.bf16.msra.mxu0 %v2305
      %2330 = vmatprep.subr.bf16.mxu0 0
      %2331 = vmatpush1.bf16.msra.mxu0 0
      %2332 = vmatprep.subr.bf16.mxu0 0
      %2333 = vmatpush1.bf16.msra.mxu0 0
      %2334 = vmatprep.subr.bf16.mxu0 0
      %2335 = vmatpush1.bf16.msra.mxu0 0
      %2336 = vmatprep.subr.bf16.mxu0 0
      %2337 = vmatpush1.bf16.msra.mxu0 0
      %2338 = vmatprep.subr.bf16.mxu0 0
      %2339 = vmatpush1.bf16.msra.mxu0 0
      %2340 = vmatprep.subr.bf16.mxu0 0
      %2341 = vmatpush1.bf16.msra.mxu0 0
      %2342 = vmatprep.subr.bf16.mxu0 0
      %2343 = vmatpush1.bf16.msra.mxu0 0
      %2344 = vmatprep.subr.bf16.mxu0 0
      %2345 = vmatpush1.bf16.msra.mxu0 0
      %2346 = vmatprep.mubr.bf16.mxu0 0
      %2347 = vmatmul.mubr.bf16.gmra.mrb[0].mxu0 %v2233
      %v2348 = vpop.f32.mrb[0].mxu0
      %v2349 = vadd.f32 0.0, %v2348
      %v2350 = vpop.f32.mrb[0].mxu0
      %v2351 = vpop.f32.mrb[0].mxu0
      %v2352 = vadd.f32 0.0, %v2351
      %v2353 = vpop.f32.mrb[0].mxu0
      %2354 = vmatprep.mubr.bf16.mxu0 0
      %2355 = vmatmul.mubr.bf16.gmra.mrb[0].mxu0 %v2234
      %v2356 = vpop.f32.mrb[0].mxu0
      %v2357 = vadd.f32 0.0, %v2356
      %v2358 = vpop.f32.mrb[0].mxu0
      %v2359 = vpop.f32.mrb[0].mxu0
      %v2360 = vadd.f32 0.0, %v2359
      %v2361 = vpop.f32.mrb[0].mxu0
      %2362 = vmatprep.mubr.bf16.mxu0 0
      %2363 = vmatmul.mubr.bf16.gmra.mrb[0].mxu0 %v2235
      %v2364 = vpop.f32.mrb[0].mxu0
      %v2365 = vadd.f32 0.0, %v2364
      %v2366 = vpop.f32.mrb[0].mxu0
      %v2367 = vpop.f32.mrb[0].mxu0
      %v2368 = vadd.f32 0.0, %v2367
      %v2369 = vpop.f32.mrb[0].mxu0
      %2370 = vmatprep.mubr.bf16.mxu0 0
      %2371 = vmatmul.mubr.bf16.gmra.mrb[0].mxu0 %v2236
      %v2372 = vpop.f32.mrb[0].mxu0
      %v2373 = vadd.f32 0.0, %v2372
      %v2374 = vpop.f32.mrb[0].mxu0
      %v2375 = vpop.f32.mrb[0].mxu0
      %v2376 = vadd.f32 0.0, %v2375
      %v2377 = vpop.f32.mrb[0].mxu0
      %2378 = vmatprep.mubr.bf16.mxu0 0
      %2379 = vmatmul.mubr.bf16.gmra.mrb[0].mxu0 %v2237
      %v2380 = vpop.f32.mrb[0].mxu0
      %v2381 = vadd.f32 0.0, %v2380
      %v2382 = vpop.f32.mrb[0].mxu0
      %v2383 = vpop.f32.mrb[0].mxu0
      %v2384 = vadd.f32 0.0, %v2383
      %v2385 = vpop.f32.mrb[0].mxu0
      %2386 = vmatprep.mubr.bf16.mxu0 0
      %2387 = vmatmul.mubr.bf16.gmra.mrb[0].mxu0 %v2238
      %v2388 = vpop.f32.mrb[0].mxu0
      %v2389 = vadd.f32 0.0, %v2388
      %v2390 = vpop.f32.mrb[0].mxu0
      %v2391 = vpop.f32.mrb[0].mxu0
      %v2392 = vadd.f32 0.0, %v2391
      %v2393 = vpop.f32.mrb[0].mxu0
      %2394 = vmatprep.mubr.bf16.mxu0 0
      %2395 = vmatmul.mubr.bf16.gmra.mrb[0].mxu0 %v2239
      %v2396 = vpop.f32.mrb[0].mxu0
      %v2397 = vadd.f32 0.0, %v2396
      %v2398 = vpop.f32.mrb[0].mxu0
      %v2399 = vpop.f32.mrb[0].mxu0
      %v2400 = vadd.f32 0.0, %v2399
      %v2401 = vpop.f32.mrb[0].mxu0
      %2402 = vmatprep.mubr.bf16.mxu0 0
      %2403 = vmatmul.mubr.bf16.gmra.mrb[0].mxu0 %v2240
      %v2404 = vpop.f32.mrb[0].mxu0
      %v2405 = vadd.f32 0.0, %v2404
      %v2406 = vpop.f32.mrb[0].mxu0
      %v2407 = vpop.f32.mrb[0].mxu0
      %v2408 = vadd.f32 0.0, %v2407
      %v2409 = vpop.f32.mrb[0].mxu0
      %2410 = vmatprep.mubr.bf16.mxu0 0
      %2411 = vmatmul.mubr.bf16.gmra.mrb[0].mxu0 %v2241
      %v2412 = vpop.f32.mrb[0].mxu0
      %v2413 = vadd.f32 0.0, %v2412
      %v2414 = vpop.f32.mrb[0].mxu0
      %v2415 = vpop.f32.mrb[0].mxu0
      %v2416 = vadd.f32 0.0, %v2415
      %v2417 = vpop.f32.mrb[0].mxu0
      %2418 = vmatprep.mubr.bf16.mxu0 0
      %2419 = vmatmul.mubr.bf16.gmra.mrb[0].mxu0 %v2242
      %v2420 = vpop.f32.mrb[0].mxu0
      %v2421 = vadd.f32 0.0, %v2420
      %v2422 = vpop.f32.mrb[0].mxu0
      %v2423 = vpop.f32.mrb[0].mxu0
      %v2424 = vadd.f32 0.0, %v2423
      %v2425 = vpop.f32.mrb[0].mxu0
      %2426 = vmatprep.mubr.bf16.mxu0 0
      %2427 = vmatmul.mubr.bf16.gmra.mrb[0].mxu0 %v2243
      %v2428 = vpop.f32.mrb[0].mxu0
      %v2429 = vadd.f32 0.0, %v2428
      %v2430 = vpop.f32.mrb[0].mxu0
      %v2431 = vpop.f32.mrb[0].mxu0
      %v2432 = vadd.f32 0.0, %v2431
      %v2433 = vpop.f32.mrb[0].mxu0
      %2434 = vmatprep.mubr.bf16.mxu0 0
      %2435 = vmatmul.mubr.bf16.gmra.mrb[0].mxu0 %v2244
      %v2436 = vpop.f32.mrb[0].mxu0
      %v2437 = vadd.f32 0.0, %v2436
      %v2438 = vpop.f32.mrb[0].mxu0
      %v2439 = vpop.f32.mrb[0].mxu0
      %v2440 = vadd.f32 0.0, %v2439
      %v2441 = vpop.f32.mrb[0].mxu0
      %2442 = vmatprep.mubr.bf16.mxu0 0
      %2443 = vmatmul.mubr.bf16.gmra.mrb[0].mxu0 %v2245
      %v2444 = vpop.f32.mrb[0].mxu0
      %v2445 = vadd.f32 0.0, %v2444
      %v2446 = vpop.f32.mrb[0].mxu0
      %v2447 = vpop.f32.mrb[0].mxu0
      %v2448 = vadd.f32 0.0, %v2447
      %v2449 = vpop.f32.mrb[0].mxu0
      %2450 = vmatprep.mubr.bf16.mxu0 0
      %2451 = vmatmul.mubr.bf16.gmra.mrb[0].mxu0 %v2246
      %v2452 = vpop.f32.mrb[0].mxu0
      %v2453 = vadd.f32 0.0, %v2452
      %v2454 = vpop.f32.mrb[0].mxu0
      %v2455 = vpop.f32.mrb[0].mxu0
      %v2456 = vadd.f32 0.0, %v2455
      %v2457 = vpop.f32.mrb[0].mxu0
      %2458 = vmatprep.mubr.bf16.mxu0 0
      %2459 = vmatmul.mubr.bf16.gmra.mrb[0].mxu0 %v2247
      %v2460 = vpop.f32.mrb[0].mxu0
      %v2461 = vadd.f32 0.0, %v2460
      %v2462 = vpop.f32.mrb[0].mxu0
      %v2463 = vpop.f32.mrb[0].mxu0
      %v2464 = vadd.f32 0.0, %v2463
      %v2465 = vpop.f32.mrb[0].mxu0
      %2466 = vmatprep.mubr.bf16.mxu0 0
      %2467 = vmatmul.mubr.bf16.gmra.mrb[0].mxu0 %v2248
      %v2468 = vpop.f32.mrb[0].mxu0
      %v2469 = vadd.f32 0.0, %v2468
      %v2470 = vpop.f32.mrb[0].mxu0
      %v2471 = vpop.f32.mrb[0].mxu0
      %v2472 = vadd.f32 0.0, %v2471
      %v2473 = vpop.f32.mrb[0].mxu0
      %2474 = vdwg.mxu0
      %v2475 = vadd.f32 %v2169, %v2349
      %v2476 = vadd.f32 %v2170, %v2352
      %v2477 = vadd.f32 %v2171, %v2357
      %v2478 = vadd.f32 %v2172, %v2360
      %v2479 = vadd.f32 %v2173, %v2365
      %v2480 = vadd.f32 %v2174, %v2368
      %v2481 = vadd.f32 %v2175, %v2373
      %v2482 = vadd.f32 %v2176, %v2376
      %v2483 = vadd.f32 %v2177, %v2381
      %v2484 = vadd.f32 %v2178, %v2384
      %v2485 = vadd.f32 %v2179, %v2389
      %v2486 = vadd.f32 %v2180, %v2392
      %v2487 = vadd.f32 %v2181, %v2397
      %v2488 = vadd.f32 %v2182, %v2400
      %v2489 = vadd.f32 %v2183, %v2405
      %v2490 = vadd.f32 %v2184, %v2408
      %v2491 = vadd.f32 %v2185, %v2413
      %v2492 = vadd.f32 %v2186, %v2416
      %v2493 = vadd.f32 %v2187, %v2421
      %v2494 = vadd.f32 %v2188, %v2424
      %v2495 = vadd.f32 %v2189, %v2429
      %v2496 = vadd.f32 %v2190, %v2432
      %v2497 = vadd.f32 %v2191, %v2437
      %v2498 = vadd.f32 %v2192, %v2440
      %v2499 = vadd.f32 %v2193, %v2445
      %v2500 = vadd.f32 %v2194, %v2448
      %v2501 = vadd.f32 %v2195, %v2453
      %v2502 = vadd.f32 %v2196, %v2456
      %v2503 = vadd.f32 %v2197, %v2461
      %v2504 = vadd.f32 %v2198, %v2464
      %v2505 = vadd.f32 %v2199, %v2469
      %v2506 = vadd.f32 %v2200, %v2472
      %s2507 = scalar_lea.vmem [#allocation2], 48
      %v2508 = vld [vmem:[%s2507] sm:$0xff]
      %v2509 = vld [vmem:[%s2507 + $0x8] sm:$0xff]
      %v2510 = vld [vmem:[%s2507 + $0x18] sm:$0xff]
      %v2511 = vld [vmem:[%s2507 + $0x20] sm:$0xff]
      %v2512 = vld [vmem:[%s2507 + $0x30] sm:$0xff]
      %v2513 = vld [vmem:[%s2507 + $0x38] sm:$0xff]
      %v2514 = vld [vmem:[%s2507 + $0x48] sm:$0xff]
      %v2515 = vld [vmem:[%s2507 + $0x50] sm:$0xff]
      %v2516 = vld [vmem:[%s2507 + $0x60] sm:$0xff]
      %v2517 = vld [vmem:[%s2507 + $0x68] sm:$0xff]
      %v2518 = vld [vmem:[%s2507 + $0x78] sm:$0xff]
      %v2519 = vld [vmem:[%s2507 + $0x80] sm:$0xff]
      %v2520 = vld [vmem:[%s2507 + $0x90] sm:$0xff]
      %v2521 = vld [vmem:[%s2507 + $0x98] sm:$0xff]
      %v2522 = vld [vmem:[%s2507 + $0xa8] sm:$0xff]
      %v2523 = vld [vmem:[%s2507 + $0xb0] sm:$0xff]
      %v2524 = vld [vmem:[%s2507 + $0xc0] sm:$0xff]
      %v2525 = vld [vmem:[%s2507 + $0xc8] sm:$0xff]
      %v2526 = vld [vmem:[%s2507 + $0xd8] sm:$0xff]
      %v2527 = vld [vmem:[%s2507 + $0xe0] sm:$0xff]
      %v2528 = vld [vmem:[%s2507 + $0xf0] sm:$0xff]
      %v2529 = vld [vmem:[%s2507 + $0xf8] sm:$0xff]
      %v2530 = vld [vmem:[%s2507 + $0x108] sm:$0xff]
      %v2531 = vld [vmem:[%s2507 + $0x110] sm:$0xff]
      %v2532 = vld [vmem:[%s2507 + $0x120] sm:$0xff]
      %v2533 = vld [vmem:[%s2507 + $0x128] sm:$0xff]
      %v2534 = vld [vmem:[%s2507 + $0x138] sm:$0xff]
      %v2535 = vld [vmem:[%s2507 + $0x140] sm:$0xff]
      %v2536 = vld [vmem:[%s2507 + $0x150] sm:$0xff]
      %v2537 = vld [vmem:[%s2507 + $0x158] sm:$0xff]
      %v2538 = vld [vmem:[%s2507 + $0x168] sm:$0xff]
      %v2539 = vld [vmem:[%s2507 + $0x170] sm:$0xff]
      %v2540 = vpack.c.bf16 %v2509, %v2508
      %v2541 = vpack.c.bf16 %v2511, %v2510
      %v2542 = vpack.c.bf16 %v2513, %v2512
      %v2543 = vpack.c.bf16 %v2515, %v2514
      %v2544 = vpack.c.bf16 %v2517, %v2516
      %v2545 = vpack.c.bf16 %v2519, %v2518
      %v2546 = vpack.c.bf16 %v2521, %v2520
      %v2547 = vpack.c.bf16 %v2523, %v2522
      %v2548 = vpack.c.bf16 %v2525, %v2524
      %v2549 = vpack.c.bf16 %v2527, %v2526
      %v2550 = vpack.c.bf16 %v2529, %v2528
      %v2551 = vpack.c.bf16 %v2531, %v2530
      %v2552 = vpack.c.bf16 %v2533, %v2532
      %v2553 = vpack.c.bf16 %v2535, %v2534
      %v2554 = vpack.c.bf16 %v2537, %v2536
      %v2555 = vpack.c.bf16 %v2539, %v2538
      %s2556 = scalar_lea.vmem %s3, 384
      %v2557 = vld [vmem:[%s2556] sm:$0xf]
      %v2558 = vld [vmem:[%s2556 + $0x4] sm:$0xf]
      %v2559 = vld [vmem:[%s2556 + $0x8] sm:$0xf]
      %v2560 = vld [vmem:[%s2556 + $0xc] sm:$0xf]
      %v2561 = vld [vmem:[%s2556 + $0x10] sm:$0xf]
      %v2562 = vld [vmem:[%s2556 + $0x14] sm:$0xf]
      %v2563 = vld [vmem:[%s2556 + $0x18] sm:$0xf]
      %v2564 = vld [vmem:[%s2556 + $0x1c] sm:$0xf]
      %v2565 = vld [vmem:[%s2556 + $0x20] sm:$0xf]
      %v2566 = vld [vmem:[%s2556 + $0x24] sm:$0xf]
      %v2567 = vld [vmem:[%s2556 + $0x28] sm:$0xf]
      %v2568 = vld [vmem:[%s2556 + $0x2c] sm:$0xf]
      %v2569 = vld [vmem:[%s2556 + $0x30] sm:$0xf]
      %v2570 = vld [vmem:[%s2556 + $0x34] sm:$0xf]
      %v2571 = vld [vmem:[%s2556 + $0x38] sm:$0xf]
      %v2572 = vld [vmem:[%s2556 + $0x3c] sm:$0xf]
      %v2589 = vunpack.c.l.b16 %v2557
      %v2590 = vunpack.c.l.b16 %v2558
      %v2591 = vunpack.c.l.b16 %v2559
      %v2592 = vunpack.c.l.b16 %v2560
      %v2593 = vunpack.c.l.b16 %v2561
      %v2594 = vunpack.c.l.b16 %v2562
      %v2595 = vunpack.c.l.b16 %v2563
      %v2596 = vunpack.c.l.b16 %v2564
      %v2597 = vunpack.c.l.b16 %v2565
      %v2598 = vunpack.c.l.b16 %v2566
      %v2599 = vunpack.c.l.b16 %v2567
      %v2600 = vunpack.c.l.b16 %v2568
      %v2601 = vunpack.c.l.b16 %v2569
      %v2602 = vunpack.c.l.b16 %v2570
      %v2603 = vunpack.c.l.b16 %v2571
      %v2604 = vunpack.c.l.b16 %v2572
      %v2605 = vpack.c.b16 %v2590, %v2589
      %v2606 = vpack.c.b16 %v2592, %v2591
      %v2607 = vpack.c.b16 %v2594, %v2593
      %v2608 = vpack.c.b16 %v2596, %v2595
      %v2609 = vpack.c.b16 %v2598, %v2597
      %v2610 = vpack.c.b16 %v2600, %v2599
      %v2611 = vpack.c.b16 %v2602, %v2601
      %v2612 = vpack.c.b16 %v2604, %v2603
      %2621 = vmatprep.subr.bf16.mxu0 0
      %2622 = vmatpush1.bf16.msra.mxu0 %v2605
      %2623 = vmatprep.subr.bf16.mxu0 0
      %2624 = vmatpush1.bf16.msra.mxu0 %v2606
      %2625 = vmatprep.subr.bf16.mxu0 0
      %2626 = vmatpush1.bf16.msra.mxu0 %v2607
      %2627 = vmatprep.subr.bf16.mxu0 0
      %2628 = vmatpush1.bf16.msra.mxu0 %v2608
      %2629 = vmatprep.subr.bf16.mxu0 0
      %2630 = vmatpush1.bf16.msra.mxu0 %v2609
      %2631 = vmatprep.subr.bf16.mxu0 0
      %2632 = vmatpush1.bf16.msra.mxu0 %v2610
      %2633 = vmatprep.subr.bf16.mxu0 0
      %2634 = vmatpush1.bf16.msra.mxu0 %v2611
      %2635 = vmatprep.subr.bf16.mxu0 0
      %2636 = vmatpush1.bf16.msra.mxu0 %v2612
      %2637 = vmatprep.subr.bf16.mxu0 0
      %2638 = vmatpush1.bf16.msra.mxu0 0
      %2639 = vmatprep.subr.bf16.mxu0 0
      %2640 = vmatpush1.bf16.msra.mxu0 0
      %2641 = vmatprep.subr.bf16.mxu0 0
      %2642 = vmatpush1.bf16.msra.mxu0 0
      %2643 = vmatprep.subr.bf16.mxu0 0
      %2644 = vmatpush1.bf16.msra.mxu0 0
      %2645 = vmatprep.subr.bf16.mxu0 0
      %2646 = vmatpush1.bf16.msra.mxu0 0
      %2647 = vmatprep.subr.bf16.mxu0 0
      %2648 = vmatpush1.bf16.msra.mxu0 0
      %2649 = vmatprep.subr.bf16.mxu0 0
      %2650 = vmatpush1.bf16.msra.mxu0 0
      %2651 = vmatprep.subr.bf16.mxu0 0
      %2652 = vmatpush1.bf16.msra.mxu0 0
      %2653 = vmatprep.mubr.bf16.mxu0 0
      %2654 = vmatmul.mubr.bf16.gmra.mrb[0].mxu0 %v2540
      %v2655 = vpop.f32.mrb[0].mxu0
      %v2656 = vadd.f32 0.0, %v2655
      %v2657 = vpop.f32.mrb[0].mxu0
      %v2658 = vpop.f32.mrb[0].mxu0
      %v2659 = vadd.f32 0.0, %v2658
      %v2660 = vpop.f32.mrb[0].mxu0
      %2661 = vmatprep.mubr.bf16.mxu0 0
      %2662 = vmatmul.mubr.bf16.gmra.mrb[0].mxu0 %v2541
      %v2663 = vpop.f32.mrb[0].mxu0
      %v2664 = vadd.f32 0.0, %v2663
      %v2665 = vpop.f32.mrb[0].mxu0
      %v2666 = vpop.f32.mrb[0].mxu0
      %v2667 = vadd.f32 0.0, %v2666
      %v2668 = vpop.f32.mrb[0].mxu0
      %2669 = vmatprep.mubr.bf16.mxu0 0
      %2670 = vmatmul.mubr.bf16.gmra.mrb[0].mxu0 %v2542
      %v2671 = vpop.f32.mrb[0].mxu0
      %v2672 = vadd.f32 0.0, %v2671
      %v2673 = vpop.f32.mrb[0].mxu0
      %v2674 = vpop.f32.mrb[0].mxu0
      %v2675 = vadd.f32 0.0, %v2674
      %v2676 = vpop.f32.mrb[0].mxu0
      %2677 = vmatprep.mubr.bf16.mxu0 0
      %2678 = vmatmul.mubr.bf16.gmra.mrb[0].mxu0 %v2543
      %v2679 = vpop.f32.mrb[0].mxu0
      %v2680 = vadd.f32 0.0, %v2679
      %v2681 = vpop.f32.mrb[0].mxu0
      %v2682 = vpop.f32.mrb[0].mxu0
      %v2683 = vadd.f32 0.0, %v2682
      %v2684 = vpop.f32.mrb[0].mxu0
      %2685 = vmatprep.mubr.bf16.mxu0 0
      %2686 = vmatmul.mubr.bf16.gmra.mrb[0].mxu0 %v2544
      %v2687 = vpop.f32.mrb[0].mxu0
      %v2688 = vadd.f32 0.0, %v2687
      %v2689 = vpop.f32.mrb[0].mxu0
      %v2690 = vpop.f32.mrb[0].mxu0
      %v2691 = vadd.f32 0.0, %v2690
      %v2692 = vpop.f32.mrb[0].mxu0
      %2693 = vmatprep.mubr.bf16.mxu0 0
      %2694 = vmatmul.mubr.bf16.gmra.mrb[0].mxu0 %v2545
      %v2695 = vpop.f32.mrb[0].mxu0
      %v2696 = vadd.f32 0.0, %v2695
      %v2697 = vpop.f32.mrb[0].mxu0
      %v2698 = vpop.f32.mrb[0].mxu0
      %v2699 = vadd.f32 0.0, %v2698
      %v2700 = vpop.f32.mrb[0].mxu0
      %2701 = vmatprep.mubr.bf16.mxu0 0
      %2702 = vmatmul.mubr.bf16.gmra.mrb[0].mxu0 %v2546
      %v2703 = vpop.f32.mrb[0].mxu0
      %v2704 = vadd.f32 0.0, %v2703
      %v2705 = vpop.f32.mrb[0].mxu0
      %v2706 = vpop.f32.mrb[0].mxu0
      %v2707 = vadd.f32 0.0, %v2706
      %v2708 = vpop.f32.mrb[0].mxu0
      %2709 = vmatprep.mubr.bf16.mxu0 0
      %2710 = vmatmul.mubr.bf16.gmra.mrb[0].mxu0 %v2547
      %v2711 = vpop.f32.mrb[0].mxu0
      %v2712 = vadd.f32 0.0, %v2711
      %v2713 = vpop.f32.mrb[0].mxu0
      %v2714 = vpop.f32.mrb[0].mxu0
      %v2715 = vadd.f32 0.0, %v2714
      %v2716 = vpop.f32.mrb[0].mxu0
      %2717 = vmatprep.mubr.bf16.mxu0 0
      %2718 = vmatmul.mubr.bf16.gmra.mrb[0].mxu0 %v2548
      %v2719 = vpop.f32.mrb[0].mxu0
      %v2720 = vadd.f32 0.0, %v2719
      %v2721 = vpop.f32.mrb[0].mxu0
      %v2722 = vpop.f32.mrb[0].mxu0
      %v2723 = vadd.f32 0.0, %v2722
      %v2724 = vpop.f32.mrb[0].mxu0
      %2725 = vmatprep.mubr.bf16.mxu0 0
      %2726 = vmatmul.mubr.bf16.gmra.mrb[0].mxu0 %v2549
      %v2727 = vpop.f32.mrb[0].mxu0
      %v2728 = vadd.f32 0.0, %v2727
      %v2729 = vpop.f32.mrb[0].mxu0
      %v2730 = vpop.f32.mrb[0].mxu0
      %v2731 = vadd.f32 0.0, %v2730
      %v2732 = vpop.f32.mrb[0].mxu0
      %2733 = vmatprep.mubr.bf16.mxu0 0
      %2734 = vmatmul.mubr.bf16.gmra.mrb[0].mxu0 %v2550
      %v2735 = vpop.f32.mrb[0].mxu0
      %v2736 = vadd.f32 0.0, %v2735
      %v2737 = vpop.f32.mrb[0].mxu0
      %v2738 = vpop.f32.mrb[0].mxu0
      %v2739 = vadd.f32 0.0, %v2738
      %v2740 = vpop.f32.mrb[0].mxu0
      %2741 = vmatprep.mubr.bf16.mxu0 0
      %2742 = vmatmul.mubr.bf16.gmra.mrb[0].mxu0 %v2551
      %v2743 = vpop.f32.mrb[0].mxu0
      %v2744 = vadd.f32 0.0, %v2743
      %v2745 = vpop.f32.mrb[0].mxu0
      %v2746 = vpop.f32.mrb[0].mxu0
      %v2747 = vadd.f32 0.0, %v2746
      %v2748 = vpop.f32.mrb[0].mxu0
      %2749 = vmatprep.mubr.bf16.mxu0 0
      %2750 = vmatmul.mubr.bf16.gmra.mrb[0].mxu0 %v2552
      %v2751 = vpop.f32.mrb[0].mxu0
      %v2752 = vadd.f32 0.0, %v2751
      %v2753 = vpop.f32.mrb[0].mxu0
      %v2754 = vpop.f32.mrb[0].mxu0
      %v2755 = vadd.f32 0.0, %v2754
      %v2756 = vpop.f32.mrb[0].mxu0
      %2757 = vmatprep.mubr.bf16.mxu0 0
      %2758 = vmatmul.mubr.bf16.gmra.mrb[0].mxu0 %v2553
      %v2759 = vpop.f32.mrb[0].mxu0
      %v2760 = vadd.f32 0.0, %v2759
      %v2761 = vpop.f32.mrb[0].mxu0
      %v2762 = vpop.f32.mrb[0].mxu0
      %v2763 = vadd.f32 0.0, %v2762
      %v2764 = vpop.f32.mrb[0].mxu0
      %2765 = vmatprep.mubr.bf16.mxu0 0
      %2766 = vmatmul.mubr.bf16.gmra.mrb[0].mxu0 %v2554
      %v2767 = vpop.f32.mrb[0].mxu0
      %v2768 = vadd.f32 0.0, %v2767
      %v2769 = vpop.f32.mrb[0].mxu0
      %v2770 = vpop.f32.mrb[0].mxu0
      %v2771 = vadd.f32 0.0, %v2770
      %v2772 = vpop.f32.mrb[0].mxu0
      %2773 = vmatprep.mubr.bf16.mxu0 0
      %2774 = vmatmul.mubr.bf16.gmra.mrb[0].mxu0 %v2555
      %v2775 = vpop.f32.mrb[0].mxu0
      %v2776 = vadd.f32 0.0, %v2775
      %v2777 = vpop.f32.mrb[0].mxu0
      %v2778 = vpop.f32.mrb[0].mxu0
      %v2779 = vadd.f32 0.0, %v2778
      %v2780 = vpop.f32.mrb[0].mxu0
      %2781 = vdwg.mxu0
      %v2782 = vadd.f32 %v2475, %v2656
      %v2783 = vadd.f32 %v2476, %v2659
      %v2784 = vadd.f32 %v2477, %v2664
      %v2785 = vadd.f32 %v2478, %v2667
      %v2786 = vadd.f32 %v2479, %v2672
      %v2787 = vadd.f32 %v2480, %v2675
      %v2788 = vadd.f32 %v2481, %v2680
      %v2789 = vadd.f32 %v2482, %v2683
      %v2790 = vadd.f32 %v2483, %v2688
      %v2791 = vadd.f32 %v2484, %v2691
      %v2792 = vadd.f32 %v2485, %v2696
      %v2793 = vadd.f32 %v2486, %v2699
      %v2794 = vadd.f32 %v2487, %v2704
      %v2795 = vadd.f32 %v2488, %v2707
      %v2796 = vadd.f32 %v2489, %v2712
      %v2797 = vadd.f32 %v2490, %v2715
      %v2798 = vadd.f32 %v2491, %v2720
      %v2799 = vadd.f32 %v2492, %v2723
      %v2800 = vadd.f32 %v2493, %v2728
      %v2801 = vadd.f32 %v2494, %v2731
      %v2802 = vadd.f32 %v2495, %v2736
      %v2803 = vadd.f32 %v2496, %v2739
      %v2804 = vadd.f32 %v2497, %v2744
      %v2805 = vadd.f32 %v2498, %v2747
      %v2806 = vadd.f32 %v2499, %v2752
      %v2807 = vadd.f32 %v2500, %v2755
      %v2808 = vadd.f32 %v2501, %v2760
      %v2809 = vadd.f32 %v2502, %v2763
      %v2810 = vadd.f32 %v2503, %v2768
      %v2811 = vadd.f32 %v2504, %v2771
      %v2812 = vadd.f32 %v2505, %v2776
      %v2813 = vadd.f32 %v2506, %v2779
      %v2814 = vld [vmem:[%s2507 + $0x1] sm:$0xff]
      %v2815 = vld [vmem:[%s2507 + $0x9] sm:$0xff]
      %v2816 = vld [vmem:[%s2507 + $0x19] sm:$0xff]
      %v2817 = vld [vmem:[%s2507 + $0x21] sm:$0xff]
      %v2818 = vld [vmem:[%s2507 + $0x31] sm:$0xff]
      %v2819 = vld [vmem:[%s2507 + $0x39] sm:$0xff]
      %v2820 = vld [vmem:[%s2507 + $0x49] sm:$0xff]
      %v2821 = vld [vmem:[%s2507 + $0x51] sm:$0xff]
      %v2822 = vld [vmem:[%s2507 + $0x61] sm:$0xff]
      %v2823 = vld [vmem:[%s2507 + $0x69] sm:$0xff]
      %v2824 = vld [vmem:[%s2507 + $0x79] sm:$0xff]
      %v2825 = vld [vmem:[%s2507 + $0x81] sm:$0xff]
      %v2826 = vld [vmem:[%s2507 + $0x91] sm:$0xff]
      %v2827 = vld [vmem:[%s2507 + $0x99] sm:$0xff]
      %v2828 = vld [vmem:[%s2507 + $0xa9] sm:$0xff]
      %v2829 = vld [vmem:[%s2507 + $0xb1] sm:$0xff]
      %v2830 = vld [vmem:[%s2507 + $0xc1] sm:$0xff]
      %v2831 = vld [vmem:[%s2507 + $0xc9] sm:$0xff]
      %v2832 = vld [vmem:[%s2507 + $0xd9] sm:$0xff]
      %v2833 = vld [vmem:[%s2507 + $0xe1] sm:$0xff]
      %v2834 = vld [vmem:[%s2507 + $0xf1] sm:$0xff]
      %v2835 = vld [vmem:[%s2507 + $0xf9] sm:$0xff]
      %v2836 = vld [vmem:[%s2507 + $0x109] sm:$0xff]
      %v2837 = vld [vmem:[%s2507 + $0x111] sm:$0xff]
      %v2838 = vld [vmem:[%s2507 + $0x121] sm:$0xff]
      %v2839 = vld [vmem:[%s2507 + $0x129] sm:$0xff]
      %v2840 = vld [vmem:[%s2507 + $0x139] sm:$0xff]
      %v2841 = vld [vmem:[%s2507 + $0x141] sm:$0xff]
      %v2842 = vld [vmem:[%s2507 + $0x151] sm:$0xff]
      %v2843 = vld [vmem:[%s2507 + $0x159] sm:$0xff]
      %v2844 = vld [vmem:[%s2507 + $0x169] sm:$0xff]
      %v2845 = vld [vmem:[%s2507 + $0x171] sm:$0xff]
      %v2846 = vpack.c.bf16 %v2815, %v2814
      %v2847 = vpack.c.bf16 %v2817, %v2816
      %v2848 = vpack.c.bf16 %v2819, %v2818
      %v2849 = vpack.c.bf16 %v2821, %v2820
      %v2850 = vpack.c.bf16 %v2823, %v2822
      %v2851 = vpack.c.bf16 %v2825, %v2824
      %v2852 = vpack.c.bf16 %v2827, %v2826
      %v2853 = vpack.c.bf16 %v2829, %v2828
      %v2854 = vpack.c.bf16 %v2831, %v2830
      %v2855 = vpack.c.bf16 %v2833, %v2832
      %v2856 = vpack.c.bf16 %v2835, %v2834
      %v2857 = vpack.c.bf16 %v2837, %v2836
      %v2858 = vpack.c.bf16 %v2839, %v2838
      %v2859 = vpack.c.bf16 %v2841, %v2840
      %v2860 = vpack.c.bf16 %v2843, %v2842
      %v2861 = vpack.c.bf16 %v2845, %v2844
      %s2862 = scalar_lea.vmem %s3, 448
      %v2863 = vld [vmem:[%s2862] sm:$0xf]
      %v2864 = vld [vmem:[%s2862 + $0x4] sm:$0xf]
      %v2865 = vld [vmem:[%s2862 + $0x8] sm:$0xf]
      %v2866 = vld [vmem:[%s2862 + $0xc] sm:$0xf]
      %v2867 = vld [vmem:[%s2862 + $0x10] sm:$0xf]
      %v2868 = vld [vmem:[%s2862 + $0x14] sm:$0xf]
      %v2869 = vld [vmem:[%s2862 + $0x18] sm:$0xf]
      %v2870 = vld [vmem:[%s2862 + $0x1c] sm:$0xf]
      %v2871 = vld [vmem:[%s2862 + $0x20] sm:$0xf]
      %v2872 = vld [vmem:[%s2862 + $0x24] sm:$0xf]
      %v2873 = vld [vmem:[%s2862 + $0x28] sm:$0xf]
      %v2874 = vld [vmem:[%s2862 + $0x2c] sm:$0xf]
      %v2875 = vld [vmem:[%s2862 + $0x30] sm:$0xf]
      %v2876 = vld [vmem:[%s2862 + $0x34] sm:$0xf]
      %v2877 = vld [vmem:[%s2862 + $0x38] sm:$0xf]
      %v2878 = vld [vmem:[%s2862 + $0x3c] sm:$0xf]
      %v2895 = vunpack.c.l.b16 %v2863
      %v2896 = vunpack.c.l.b16 %v2864
      %v2897 = vunpack.c.l.b16 %v2865
      %v2898 = vunpack.c.l.b16 %v2866
      %v2899 = vunpack.c.l.b16 %v2867
      %v2900 = vunpack.c.l.b16 %v2868
      %v2901 = vunpack.c.l.b16 %v2869
      %v2902 = vunpack.c.l.b16 %v2870
      %v2903 = vunpack.c.l.b16 %v2871
      %v2904 = vunpack.c.l.b16 %v2872
      %v2905 = vunpack.c.l.b16 %v2873
      %v2906 = vunpack.c.l.b16 %v2874
      %v2907 = vunpack.c.l.b16 %v2875
      %v2908 = vunpack.c.l.b16 %v2876
      %v2909 = vunpack.c.l.b16 %v2877
      %v2910 = vunpack.c.l.b16 %v2878
      %v2911 = vpack.c.b16 %v2896, %v2895
      %v2912 = vpack.c.b16 %v2898, %v2897
      %v2913 = vpack.c.b16 %v2900, %v2899
      %v2914 = vpack.c.b16 %v2902, %v2901
      %v2915 = vpack.c.b16 %v2904, %v2903
      %v2916 = vpack.c.b16 %v2906, %v2905
      %v2917 = vpack.c.b16 %v2908, %v2907
      %v2918 = vpack.c.b16 %v2910, %v2909
      %2927 = vmatprep.subr.bf16.mxu0 0
      %2928 = vmatpush1.bf16.msra.mxu0 %v2911
      %2929 = vmatprep.subr.bf16.mxu0 0
      %2930 = vmatpush1.bf16.msra.mxu0 %v2912
      %2931 = vmatprep.subr.bf16.mxu0 0
      %2932 = vmatpush1.bf16.msra.mxu0 %v2913
      %2933 = vmatprep.subr.bf16.mxu0 0
      %2934 = vmatpush1.bf16.msra.mxu0 %v2914
      %2935 = vmatprep.subr.bf16.mxu0 0
      %2936 = vmatpush1.bf16.msra.mxu0 %v2915
      %2937 = vmatprep.subr.bf16.mxu0 0
      %2938 = vmatpush1.bf16.msra.mxu0 %v2916
      %2939 = vmatprep.subr.bf16.mxu0 0
      %2940 = vmatpush1.bf16.msra.mxu0 %v2917
      %2941 = vmatprep.subr.bf16.mxu0 0
      %2942 = vmatpush1.bf16.msra.mxu0 %v2918
      %2943 = vmatprep.subr.bf16.mxu0 0
      %2944 = vmatpush1.bf16.msra.mxu0 0
      %2945 = vmatprep.subr.bf16.mxu0 0
      %2946 = vmatpush1.bf16.msra.mxu0 0
      %2947 = vmatprep.subr.bf16.mxu0 0
      %2948 = vmatpush1.bf16.msra.mxu0 0
      %2949 = vmatprep.subr.bf16.mxu0 0
      %2950 = vmatpush1.bf16.msra.mxu0 0
      %2951 = vmatprep.subr.bf16.mxu0 0
      %2952 = vmatpush1.bf16.msra.mxu0 0
      %2953 = vmatprep.subr.bf16.mxu0 0
      %2954 = vmatpush1.bf16.msra.mxu0 0
      %2955 = vmatprep.subr.bf16.mxu0 0
      %2956 = vmatpush1.bf16.msra.mxu0 0
      %2957 = vmatprep.subr.bf16.mxu0 0
      %2958 = vmatpush1.bf16.msra.mxu0 0
      %2959 = vmatprep.mubr.bf16.mxu0 0
      %2960 = vmatmul.mubr.bf16.gmra.mrb[0].mxu0 %v2846
      %v2961 = vpop.f32.mrb[0].mxu0
      %v2962 = vadd.f32 0.0, %v2961
      %v2963 = vpop.f32.mrb[0].mxu0
      %v2964 = vpop.f32.mrb[0].mxu0
      %v2965 = vadd.f32 0.0, %v2964
      %v2966 = vpop.f32.mrb[0].mxu0
      %2967 = vmatprep.mubr.bf16.mxu0 0
      %2968 = vmatmul.mubr.bf16.gmra.mrb[0].mxu0 %v2847
      %v2969 = vpop.f32.mrb[0].mxu0
      %v2970 = vadd.f32 0.0, %v2969
      %v2971 = vpop.f32.mrb[0].mxu0
      %v2972 = vpop.f32.mrb[0].mxu0
      %v2973 = vadd.f32 0.0, %v2972
      %v2974 = vpop.f32.mrb[0].mxu0
      %2975 = vmatprep.mubr.bf16.mxu0 0
      %2976 = vmatmul.mubr.bf16.gmra.mrb[0].mxu0 %v2848
      %v2977 = vpop.f32.mrb[0].mxu0
      %v2978 = vadd.f32 0.0, %v2977
      %v2979 = vpop.f32.mrb[0].mxu0
      %v2980 = vpop.f32.mrb[0].mxu0
      %v2981 = vadd.f32 0.0, %v2980
      %v2982 = vpop.f32.mrb[0].mxu0
      %2983 = vmatprep.mubr.bf16.mxu0 0
      %2984 = vmatmul.mubr.bf16.gmra.mrb[0].mxu0 %v2849
      %v2985 = vpop.f32.mrb[0].mxu0
      %v2986 = vadd.f32 0.0, %v2985
      %v2987 = vpop.f32.mrb[0].mxu0
      %v2988 = vpop.f32.mrb[0].mxu0
      %v2989 = vadd.f32 0.0, %v2988
      %v2990 = vpop.f32.mrb[0].mxu0
      %2991 = vmatprep.mubr.bf16.mxu0 0
      %2992 = vmatmul.mubr.bf16.gmra.mrb[0].mxu0 %v2850
      %v2993 = vpop.f32.mrb[0].mxu0
      %v2994 = vadd.f32 0.0, %v2993
      %v2995 = vpop.f32.mrb[0].mxu0
      %v2996 = vpop.f32.mrb[0].mxu0
      %v2997 = vadd.f32 0.0, %v2996
      %v2998 = vpop.f32.mrb[0].mxu0
      %2999 = vmatprep.mubr.bf16.mxu0 0
      %3000 = vmatmul.mubr.bf16.gmra.mrb[0].mxu0 %v2851
      %v3001 = vpop.f32.mrb[0].mxu0
      %v3002 = vadd.f32 0.0, %v3001
      %v3003 = vpop.f32.mrb[0].mxu0
      %v3004 = vpop.f32.mrb[0].mxu0
      %v3005 = vadd.f32 0.0, %v3004
      %v3006 = vpop.f32.mrb[0].mxu0
      %3007 = vmatprep.mubr.bf16.mxu0 0
      %3008 = vmatmul.mubr.bf16.gmra.mrb[0].mxu0 %v2852
      %v3009 = vpop.f32.mrb[0].mxu0
      %v3010 = vadd.f32 0.0, %v3009
      %v3011 = vpop.f32.mrb[0].mxu0
      %v3012 = vpop.f32.mrb[0].mxu0
      %v3013 = vadd.f32 0.0, %v3012
      %v3014 = vpop.f32.mrb[0].mxu0
      %3015 = vmatprep.mubr.bf16.mxu0 0
      %3016 = vmatmul.mubr.bf16.gmra.mrb[0].mxu0 %v2853
      %v3017 = vpop.f32.mrb[0].mxu0
      %v3018 = vadd.f32 0.0, %v3017
      %v3019 = vpop.f32.mrb[0].mxu0
      %v3020 = vpop.f32.mrb[0].mxu0
      %v3021 = vadd.f32 0.0, %v3020
      %v3022 = vpop.f32.mrb[0].mxu0
      %3023 = vmatprep.mubr.bf16.mxu0 0
      %3024 = vmatmul.mubr.bf16.gmra.mrb[0].mxu0 %v2854
      %v3025 = vpop.f32.mrb[0].mxu0
      %v3026 = vadd.f32 0.0, %v3025
      %v3027 = vpop.f32.mrb[0].mxu0
      %v3028 = vpop.f32.mrb[0].mxu0
      %v3029 = vadd.f32 0.0, %v3028
      %v3030 = vpop.f32.mrb[0].mxu0
      %3031 = vmatprep.mubr.bf16.mxu0 0
      %3032 = vmatmul.mubr.bf16.gmra.mrb[0].mxu0 %v2855
      %v3033 = vpop.f32.mrb[0].mxu0
      %v3034 = vadd.f32 0.0, %v3033
      %v3035 = vpop.f32.mrb[0].mxu0
      %v3036 = vpop.f32.mrb[0].mxu0
      %v3037 = vadd.f32 0.0, %v3036
      %v3038 = vpop.f32.mrb[0].mxu0
      %3039 = vmatprep.mubr.bf16.mxu0 0
      %3040 = vmatmul.mubr.bf16.gmra.mrb[0].mxu0 %v2856
      %v3041 = vpop.f32.mrb[0].mxu0
      %v3042 = vadd.f32 0.0, %v3041
      %v3043 = vpop.f32.mrb[0].mxu0
      %v3044 = vpop.f32.mrb[0].mxu0
      %v3045 = vadd.f32 0.0, %v3044
      %v3046 = vpop.f32.mrb[0].mxu0
      %3047 = vmatprep.mubr.bf16.mxu0 0
      %3048 = vmatmul.mubr.bf16.gmra.mrb[0].mxu0 %v2857
      %v3049 = vpop.f32.mrb[0].mxu0
      %v3050 = vadd.f32 0.0, %v3049
      %v3051 = vpop.f32.mrb[0].mxu0
      %v3052 = vpop.f32.mrb[0].mxu0
      %v3053 = vadd.f32 0.0, %v3052
      %v3054 = vpop.f32.mrb[0].mxu0
      %3055 = vmatprep.mubr.bf16.mxu0 0
      %3056 = vmatmul.mubr.bf16.gmra.mrb[0].mxu0 %v2858
      %v3057 = vpop.f32.mrb[0].mxu0
      %v3058 = vadd.f32 0.0, %v3057
      %v3059 = vpop.f32.mrb[0].mxu0
      %v3060 = vpop.f32.mrb[0].mxu0
      %v3061 = vadd.f32 0.0, %v3060
      %v3062 = vpop.f32.mrb[0].mxu0
      %3063 = vmatprep.mubr.bf16.mxu0 0
      %3064 = vmatmul.mubr.bf16.gmra.mrb[0].mxu0 %v2859
      %v3065 = vpop.f32.mrb[0].mxu0
      %v3066 = vadd.f32 0.0, %v3065
      %v3067 = vpop.f32.mrb[0].mxu0
      %v3068 = vpop.f32.mrb[0].mxu0
      %v3069 = vadd.f32 0.0, %v3068
      %v3070 = vpop.f32.mrb[0].mxu0
      %3071 = vmatprep.mubr.bf16.mxu0 0
      %3072 = vmatmul.mubr.bf16.gmra.mrb[0].mxu0 %v2860
      %v3073 = vpop.f32.mrb[0].mxu0
      %v3074 = vadd.f32 0.0, %v3073
      %v3075 = vpop.f32.mrb[0].mxu0
      %v3076 = vpop.f32.mrb[0].mxu0
      %v3077 = vadd.f32 0.0, %v3076
      %v3078 = vpop.f32.mrb[0].mxu0
      %3079 = vmatprep.mubr.bf16.mxu0 0
      %3080 = vmatmul.mubr.bf16.gmra.mrb[0].mxu0 %v2861
      %v3081 = vpop.f32.mrb[0].mxu0
      %v3082 = vadd.f32 0.0, %v3081
      %v3083 = vpop.f32.mrb[0].mxu0
      %v3084 = vpop.f32.mrb[0].mxu0
      %v3085 = vadd.f32 0.0, %v3084
      %v3086 = vpop.f32.mrb[0].mxu0
      %3087 = vdwg.mxu0
      %v3088 = vadd.f32 %v2782, %v2962
      %v3089 = vadd.f32 %v2783, %v2965
      %v3090 = vadd.f32 %v2784, %v2970
      %v3091 = vadd.f32 %v2785, %v2973
      %v3092 = vadd.f32 %v2786, %v2978
      %v3093 = vadd.f32 %v2787, %v2981
      %v3094 = vadd.f32 %v2788, %v2986
      %v3095 = vadd.f32 %v2789, %v2989
      %v3096 = vadd.f32 %v2790, %v2994
      %v3097 = vadd.f32 %v2791, %v2997
      %v3098 = vadd.f32 %v2792, %v3002
      %v3099 = vadd.f32 %v2793, %v3005
      %v3100 = vadd.f32 %v2794, %v3010
      %v3101 = vadd.f32 %v2795, %v3013
      %v3102 = vadd.f32 %v2796, %v3018
      %v3103 = vadd.f32 %v2797, %v3021
      %v3104 = vadd.f32 %v2798, %v3026
      %v3105 = vadd.f32 %v2799, %v3029
      %v3106 = vadd.f32 %v2800, %v3034
      %v3107 = vadd.f32 %v2801, %v3037
      %v3108 = vadd.f32 %v2802, %v3042
      %v3109 = vadd.f32 %v2803, %v3045
      %v3110 = vadd.f32 %v2804, %v3050
      %v3111 = vadd.f32 %v2805, %v3053
      %v3112 = vadd.f32 %v2806, %v3058
      %v3113 = vadd.f32 %v2807, %v3061
      %v3114 = vadd.f32 %v2808, %v3066
      %v3115 = vadd.f32 %v2809, %v3069
      %v3116 = vadd.f32 %v2810, %v3074
      %v3117 = vadd.f32 %v2811, %v3077
      %v3118 = vadd.f32 %v2812, %v3082
      %v3119 = vadd.f32 %v2813, %v3085
      %v3120 = vld [vmem:[%s2507 + $0x2] sm:$0xff]
      %v3121 = vld [vmem:[%s2507 + $0xa] sm:$0xff]
      %v3122 = vld [vmem:[%s2507 + $0x1a] sm:$0xff]
      %v3123 = vld [vmem:[%s2507 + $0x22] sm:$0xff]
      %v3124 = vld [vmem:[%s2507 + $0x32] sm:$0xff]
      %v3125 = vld [vmem:[%s2507 + $0x3a] sm:$0xff]
      %v3126 = vld [vmem:[%s2507 + $0x4a] sm:$0xff]
      %v3127 = vld [vmem:[%s2507 + $0x52] sm:$0xff]
      %v3128 = vld [vmem:[%s2507 + $0x62] sm:$0xff]
      %v3129 = vld [vmem:[%s2507 + $0x6a] sm:$0xff]
      %v3130 = vld [vmem:[%s2507 + $0x7a] sm:$0xff]
      %v3131 = vld [vmem:[%s2507 + $0x82] sm:$0xff]
      %v3132 = vld [vmem:[%s2507 + $0x92] sm:$0xff]
      %v3133 = vld [vmem:[%s2507 + $0x9a] sm:$0xff]
      %v3134 = vld [vmem:[%s2507 + $0xaa] sm:$0xff]
      %v3135 = vld [vmem:[%s2507 + $0xb2] sm:$0xff]
      %v3136 = vld [vmem:[%s2507 + $0xc2] sm:$0xff]
      %v3137 = vld [vmem:[%s2507 + $0xca] sm:$0xff]
      %v3138 = vld [vmem:[%s2507 + $0xda] sm:$0xff]
      %v3139 = vld [vmem:[%s2507 + $0xe2] sm:$0xff]
      %v3140 = vld [vmem:[%s2507 + $0xf2] sm:$0xff]
      %v3141 = vld [vmem:[%s2507 + $0xfa] sm:$0xff]
      %v3142 = vld [vmem:[%s2507 + $0x10a] sm:$0xff]
      %v3143 = vld [vmem:[%s2507 + $0x112] sm:$0xff]
      %v3144 = vld [vmem:[%s2507 + $0x122] sm:$0xff]
      %v3145 = vld [vmem:[%s2507 + $0x12a] sm:$0xff]
      %v3146 = vld [vmem:[%s2507 + $0x13a] sm:$0xff]
      %v3147 = vld [vmem:[%s2507 + $0x142] sm:$0xff]
      %v3148 = vld [vmem:[%s2507 + $0x152] sm:$0xff]
      %v3149 = vld [vmem:[%s2507 + $0x15a] sm:$0xff]
      %v3150 = vld [vmem:[%s2507 + $0x16a] sm:$0xff]
      %v3151 = vld [vmem:[%s2507 + $0x172] sm:$0xff]
      %v3152 = vpack.c.bf16 %v3121, %v3120
      %v3153 = vpack.c.bf16 %v3123, %v3122
      %v3154 = vpack.c.bf16 %v3125, %v3124
      %v3155 = vpack.c.bf16 %v3127, %v3126
      %v3156 = vpack.c.bf16 %v3129, %v3128
      %v3157 = vpack.c.bf16 %v3131, %v3130
      %v3158 = vpack.c.bf16 %v3133, %v3132
      %v3159 = vpack.c.bf16 %v3135, %v3134
      %v3160 = vpack.c.bf16 %v3137, %v3136
      %v3161 = vpack.c.bf16 %v3139, %v3138
      %v3162 = vpack.c.bf16 %v3141, %v3140
      %v3163 = vpack.c.bf16 %v3143, %v3142
      %v3164 = vpack.c.bf16 %v3145, %v3144
      %v3165 = vpack.c.bf16 %v3147, %v3146
      %v3166 = vpack.c.bf16 %v3149, %v3148
      %v3167 = vpack.c.bf16 %v3151, %v3150
      %s3168 = scalar_lea.vmem %s3, 512
      %v3169 = vld [vmem:[%s3168] sm:$0xf]
      %v3170 = vld [vmem:[%s3168 + $0x4] sm:$0xf]
      %v3171 = vld [vmem:[%s3168 + $0x8] sm:$0xf]
      %v3172 = vld [vmem:[%s3168 + $0xc] sm:$0xf]
      %v3173 = vld [vmem:[%s3168 + $0x10] sm:$0xf]
      %v3174 = vld [vmem:[%s3168 + $0x14] sm:$0xf]
      %v3175 = vld [vmem:[%s3168 + $0x18] sm:$0xf]
      %v3176 = vld [vmem:[%s3168 + $0x1c] sm:$0xf]
      %v3177 = vld [vmem:[%s3168 + $0x20] sm:$0xf]
      %v3178 = vld [vmem:[%s3168 + $0x24] sm:$0xf]
      %v3179 = vld [vmem:[%s3168 + $0x28] sm:$0xf]
      %v3180 = vld [vmem:[%s3168 + $0x2c] sm:$0xf]
      %v3181 = vld [vmem:[%s3168 + $0x30] sm:$0xf]
      %v3182 = vld [vmem:[%s3168 + $0x34] sm:$0xf]
      %v3183 = vld [vmem:[%s3168 + $0x38] sm:$0xf]
      %v3184 = vld [vmem:[%s3168 + $0x3c] sm:$0xf]
      %v3201 = vunpack.c.l.b16 %v3169
      %v3202 = vunpack.c.l.b16 %v3170
      %v3203 = vunpack.c.l.b16 %v3171
      %v3204 = vunpack.c.l.b16 %v3172
      %v3205 = vunpack.c.l.b16 %v3173
      %v3206 = vunpack.c.l.b16 %v3174
      %v3207 = vunpack.c.l.b16 %v3175
      %v3208 = vunpack.c.l.b16 %v3176
      %v3209 = vunpack.c.l.b16 %v3177
      %v3210 = vunpack.c.l.b16 %v3178
      %v3211 = vunpack.c.l.b16 %v3179
      %v3212 = vunpack.c.l.b16 %v3180
      %v3213 = vunpack.c.l.b16 %v3181
      %v3214 = vunpack.c.l.b16 %v3182
      %v3215 = vunpack.c.l.b16 %v3183
      %v3216 = vunpack.c.l.b16 %v3184
      %v3217 = vpack.c.b16 %v3202, %v3201
      %v3218 = vpack.c.b16 %v3204, %v3203
      %v3219 = vpack.c.b16 %v3206, %v3205
      %v3220 = vpack.c.b16 %v3208, %v3207
      %v3221 = vpack.c.b16 %v3210, %v3209
      %v3222 = vpack.c.b16 %v3212, %v3211
      %v3223 = vpack.c.b16 %v3214, %v3213
      %v3224 = vpack.c.b16 %v3216, %v3215
      %3233 = vmatprep.subr.bf16.mxu0 0
      %3234 = vmatpush1.bf16.msra.mxu0 %v3217
      %3235 = vmatprep.subr.bf16.mxu0 0
      %3236 = vmatpush1.bf16.msra.mxu0 %v3218
      %3237 = vmatprep.subr.bf16.mxu0 0
      %3238 = vmatpush1.bf16.msra.mxu0 %v3219
      %3239 = vmatprep.subr.bf16.mxu0 0
      %3240 = vmatpush1.bf16.msra.mxu0 %v3220
      %3241 = vmatprep.subr.bf16.mxu0 0
      %3242 = vmatpush1.bf16.msra.mxu0 %v3221
      %3243 = vmatprep.subr.bf16.mxu0 0
      %3244 = vmatpush1.bf16.msra.mxu0 %v3222
      %3245 = vmatprep.subr.bf16.mxu0 0
      %3246 = vmatpush1.bf16.msra.mxu0 %v3223
      %3247 = vmatprep.subr.bf16.mxu0 0
      %3248 = vmatpush1.bf16.msra.mxu0 %v3224
      %3249 = vmatprep.subr.bf16.mxu0 0
      %3250 = vmatpush1.bf16.msra.mxu0 0
      %3251 = vmatprep.subr.bf16.mxu0 0
      %3252 = vmatpush1.bf16.msra.mxu0 0
      %3253 = vmatprep.subr.bf16.mxu0 0
      %3254 = vmatpush1.bf16.msra.mxu0 0
      %3255 = vmatprep.subr.bf16.mxu0 0
      %3256 = vmatpush1.bf16.msra.mxu0 0
      %3257 = vmatprep.subr.bf16.mxu0 0
      %3258 = vmatpush1.bf16.msra.mxu0 0
      %3259 = vmatprep.subr.bf16.mxu0 0
      %3260 = vmatpush1.bf16.msra.mxu0 0
      %3261 = vmatprep.subr.bf16.mxu0 0
      %3262 = vmatpush1.bf16.msra.mxu0 0
      %3263 = vmatprep.subr.bf16.mxu0 0
      %3264 = vmatpush1.bf16.msra.mxu0 0
      %3265 = vmatprep.mubr.bf16.mxu0 0
      %3266 = vmatmul.mubr.bf16.gmra.mrb[0].mxu0 %v3152
      %v3267 = vpop.f32.mrb[0].mxu0
      %v3268 = vadd.f32 0.0, %v3267
      %v3269 = vpop.f32.mrb[0].mxu0
      %v3270 = vpop.f32.mrb[0].mxu0
      %v3271 = vadd.f32 0.0, %v3270
      %v3272 = vpop.f32.mrb[0].mxu0
      %3273 = vmatprep.mubr.bf16.mxu0 0
      %3274 = vmatmul.mubr.bf16.gmra.mrb[0].mxu0 %v3153
      %v3275 = vpop.f32.mrb[0].mxu0
      %v3276 = vadd.f32 0.0, %v3275
      %v3277 = vpop.f32.mrb[0].mxu0
      %v3278 = vpop.f32.mrb[0].mxu0
      %v3279 = vadd.f32 0.0, %v3278
      %v3280 = vpop.f32.mrb[0].mxu0
      %3281 = vmatprep.mubr.bf16.mxu0 0
      %3282 = vmatmul.mubr.bf16.gmra.mrb[0].mxu0 %v3154
      %v3283 = vpop.f32.mrb[0].mxu0
      %v3284 = vadd.f32 0.0, %v3283
      %v3285 = vpop.f32.mrb[0].mxu0
      %v3286 = vpop.f32.mrb[0].mxu0
      %v3287 = vadd.f32 0.0, %v3286
      %v3288 = vpop.f32.mrb[0].mxu0
      %3289 = vmatprep.mubr.bf16.mxu0 0
      %3290 = vmatmul.mubr.bf16.gmra.mrb[0].mxu0 %v3155
      %v3291 = vpop.f32.mrb[0].mxu0
      %v3292 = vadd.f32 0.0, %v3291
      %v3293 = vpop.f32.mrb[0].mxu0
      %v3294 = vpop.f32.mrb[0].mxu0
      %v3295 = vadd.f32 0.0, %v3294
      %v3296 = vpop.f32.mrb[0].mxu0
      %3297 = vmatprep.mubr.bf16.mxu0 0
      %3298 = vmatmul.mubr.bf16.gmra.mrb[0].mxu0 %v3156
      %v3299 = vpop.f32.mrb[0].mxu0
      %v3300 = vadd.f32 0.0, %v3299
      %v3301 = vpop.f32.mrb[0].mxu0
      %v3302 = vpop.f32.mrb[0].mxu0
      %v3303 = vadd.f32 0.0, %v3302
      %v3304 = vpop.f32.mrb[0].mxu0
      %3305 = vmatprep.mubr.bf16.mxu0 0
      %3306 = vmatmul.mubr.bf16.gmra.mrb[0].mxu0 %v3157
      %v3307 = vpop.f32.mrb[0].mxu0
      %v3308 = vadd.f32 0.0, %v3307
      %v3309 = vpop.f32.mrb[0].mxu0
      %v3310 = vpop.f32.mrb[0].mxu0
      %v3311 = vadd.f32 0.0, %v3310
      %v3312 = vpop.f32.mrb[0].mxu0
      %3313 = vmatprep.mubr.bf16.mxu0 0
      %3314 = vmatmul.mubr.bf16.gmra.mrb[0].mxu0 %v3158
      %v3315 = vpop.f32.mrb[0].mxu0
      %v3316 = vadd.f32 0.0, %v3315
      %v3317 = vpop.f32.mrb[0].mxu0
      %v3318 = vpop.f32.mrb[0].mxu0
      %v3319 = vadd.f32 0.0, %v3318
      %v3320 = vpop.f32.mrb[0].mxu0
      %3321 = vmatprep.mubr.bf16.mxu0 0
      %3322 = vmatmul.mubr.bf16.gmra.mrb[0].mxu0 %v3159
      %v3323 = vpop.f32.mrb[0].mxu0
      %v3324 = vadd.f32 0.0, %v3323
      %v3325 = vpop.f32.mrb[0].mxu0
      %v3326 = vpop.f32.mrb[0].mxu0
      %v3327 = vadd.f32 0.0, %v3326
      %v3328 = vpop.f32.mrb[0].mxu0
      %3329 = vmatprep.mubr.bf16.mxu0 0
      %3330 = vmatmul.mubr.bf16.gmra.mrb[0].mxu0 %v3160
      %v3331 = vpop.f32.mrb[0].mxu0
      %v3332 = vadd.f32 0.0, %v3331
      %v3333 = vpop.f32.mrb[0].mxu0
      %v3334 = vpop.f32.mrb[0].mxu0
      %v3335 = vadd.f32 0.0, %v3334
      %v3336 = vpop.f32.mrb[0].mxu0
      %3337 = vmatprep.mubr.bf16.mxu0 0
      %3338 = vmatmul.mubr.bf16.gmra.mrb[0].mxu0 %v3161
      %v3339 = vpop.f32.mrb[0].mxu0
      %v3340 = vadd.f32 0.0, %v3339
      %v3341 = vpop.f32.mrb[0].mxu0
      %v3342 = vpop.f32.mrb[0].mxu0
      %v3343 = vadd.f32 0.0, %v3342
      %v3344 = vpop.f32.mrb[0].mxu0
      %3345 = vmatprep.mubr.bf16.mxu0 0
      %3346 = vmatmul.mubr.bf16.gmra.mrb[0].mxu0 %v3162
      %v3347 = vpop.f32.mrb[0].mxu0
      %v3348 = vadd.f32 0.0, %v3347
      %v3349 = vpop.f32.mrb[0].mxu0
      %v3350 = vpop.f32.mrb[0].mxu0
      %v3351 = vadd.f32 0.0, %v3350
      %v3352 = vpop.f32.mrb[0].mxu0
      %3353 = vmatprep.mubr.bf16.mxu0 0
      %3354 = vmatmul.mubr.bf16.gmra.mrb[0].mxu0 %v3163
      %v3355 = vpop.f32.mrb[0].mxu0
      %v3356 = vadd.f32 0.0, %v3355
      %v3357 = vpop.f32.mrb[0].mxu0
      %v3358 = vpop.f32.mrb[0].mxu0
      %v3359 = vadd.f32 0.0, %v3358
      %v3360 = vpop.f32.mrb[0].mxu0
      %3361 = vmatprep.mubr.bf16.mxu0 0
      %3362 = vmatmul.mubr.bf16.gmra.mrb[0].mxu0 %v3164
      %v3363 = vpop.f32.mrb[0].mxu0
      %v3364 = vadd.f32 0.0, %v3363
      %v3365 = vpop.f32.mrb[0].mxu0
      %v3366 = vpop.f32.mrb[0].mxu0
      %v3367 = vadd.f32 0.0, %v3366
      %v3368 = vpop.f32.mrb[0].mxu0
      %3369 = vmatprep.mubr.bf16.mxu0 0
      %3370 = vmatmul.mubr.bf16.gmra.mrb[0].mxu0 %v3165
      %v3371 = vpop.f32.mrb[0].mxu0
      %v3372 = vadd.f32 0.0, %v3371
      %v3373 = vpop.f32.mrb[0].mxu0
      %v3374 = vpop.f32.mrb[0].mxu0
      %v3375 = vadd.f32 0.0, %v3374
      %v3376 = vpop.f32.mrb[0].mxu0
      %3377 = vmatprep.mubr.bf16.mxu0 0
      %3378 = vmatmul.mubr.bf16.gmra.mrb[0].mxu0 %v3166
      %v3379 = vpop.f32.mrb[0].mxu0
      %v3380 = vadd.f32 0.0, %v3379
      %v3381 = vpop.f32.mrb[0].mxu0
      %v3382 = vpop.f32.mrb[0].mxu0
      %v3383 = vadd.f32 0.0, %v3382
      %v3384 = vpop.f32.mrb[0].mxu0
      %3385 = vmatprep.mubr.bf16.mxu0 0
      %3386 = vmatmul.mubr.bf16.gmra.mrb[0].mxu0 %v3167
      %v3387 = vpop.f32.mrb[0].mxu0
      %v3388 = vadd.f32 0.0, %v3387
      %v3389 = vpop.f32.mrb[0].mxu0
      %v3390 = vpop.f32.mrb[0].mxu0
      %v3391 = vadd.f32 0.0, %v3390
      %v3392 = vpop.f32.mrb[0].mxu0
      %3393 = vdwg.mxu0
      %v3394 = vadd.f32 %v3088, %v3268
      %v3395 = vadd.f32 %v3089, %v3271
      %v3396 = vadd.f32 %v3090, %v3276
      %v3397 = vadd.f32 %v3091, %v3279
      %v3398 = vadd.f32 %v3092, %v3284
      %v3399 = vadd.f32 %v3093, %v3287
      %v3400 = vadd.f32 %v3094, %v3292
      %v3401 = vadd.f32 %v3095, %v3295
      %v3402 = vadd.f32 %v3096, %v3300
      %v3403 = vadd.f32 %v3097, %v3303
      %v3404 = vadd.f32 %v3098, %v3308
      %v3405 = vadd.f32 %v3099, %v3311
      %v3406 = vadd.f32 %v3100, %v3316
      %v3407 = vadd.f32 %v3101, %v3319
      %v3408 = vadd.f32 %v3102, %v3324
      %v3409 = vadd.f32 %v3103, %v3327
      %v3410 = vadd.f32 %v3104, %v3332
      %v3411 = vadd.f32 %v3105, %v3335
      %v3412 = vadd.f32 %v3106, %v3340
      %v3413 = vadd.f32 %v3107, %v3343
      %v3414 = vadd.f32 %v3108, %v3348
      %v3415 = vadd.f32 %v3109, %v3351
      %v3416 = vadd.f32 %v3110, %v3356
      %v3417 = vadd.f32 %v3111, %v3359
      %v3418 = vadd.f32 %v3112, %v3364
      %v3419 = vadd.f32 %v3113, %v3367
      %v3420 = vadd.f32 %v3114, %v3372
      %v3421 = vadd.f32 %v3115, %v3375
      %v3422 = vadd.f32 %v3116, %v3380
      %v3423 = vadd.f32 %v3117, %v3383
      %v3424 = vadd.f32 %v3118, %v3388
      %v3425 = vadd.f32 %v3119, %v3391
      %v3426 = vld [vmem:[%s4] sm:$0x1]
      %v3428 = vlaneseq
      %v3429 = vshrl.u32 %v3428, 7
      %v3430 = vsub.s32 0, %v3429
      %v3431 = vrot.slane %v3426, %v3430
      %v3433 = vadd.f32 %v3394, %v3431
      %v3434 = vadd.f32 %v3395, %v3431
      %v3435 = vadd.f32 %v3396, %v3431
      %v3436 = vadd.f32 %v3397, %v3431
      %v3437 = vadd.f32 %v3398, %v3431
      %v3438 = vadd.f32 %v3399, %v3431
      %v3439 = vadd.f32 %v3400, %v3431
      %v3440 = vadd.f32 %v3401, %v3431
      %v3441 = vadd.f32 %v3402, %v3431
      %v3442 = vadd.f32 %v3403, %v3431
      %v3443 = vadd.f32 %v3404, %v3431
      %v3444 = vadd.f32 %v3405, %v3431
      %v3445 = vadd.f32 %v3406, %v3431
      %v3446 = vadd.f32 %v3407, %v3431
      %v3447 = vadd.f32 %v3408, %v3431
      %v3448 = vadd.f32 %v3409, %v3431
      %v3449 = vadd.f32 %v3410, %v3431
      %v3450 = vadd.f32 %v3411, %v3431
      %v3451 = vadd.f32 %v3412, %v3431
      %v3452 = vadd.f32 %v3413, %v3431
      %v3453 = vadd.f32 %v3414, %v3431
      %v3454 = vadd.f32 %v3415, %v3431
      %v3455 = vadd.f32 %v3416, %v3431
      %v3456 = vadd.f32 %v3417, %v3431
      %v3457 = vadd.f32 %v3418, %v3431
      %v3458 = vadd.f32 %v3419, %v3431
      %v3459 = vadd.f32 %v3420, %v3431
      %v3460 = vadd.f32 %v3421, %v3431
      %v3461 = vadd.f32 %v3422, %v3431
      %v3462 = vadd.f32 %v3423, %v3431
      %v3463 = vadd.f32 %v3424, %v3431
      %v3464 = vadd.f32 %v3425, %v3431
      %v3465 = vmax.f32 %v3433, 0.0
      %v3466 = vmax.f32 %v3434, 0.0
      %v3467 = vmax.f32 %v3435, 0.0
      %v3468 = vmax.f32 %v3436, 0.0
      %v3469 = vmax.f32 %v3437, 0.0
      %v3470 = vmax.f32 %v3438, 0.0
      %v3471 = vmax.f32 %v3439, 0.0
      %v3472 = vmax.f32 %v3440, 0.0
      %v3473 = vmax.f32 %v3441, 0.0
      %v3474 = vmax.f32 %v3442, 0.0
      %v3475 = vmax.f32 %v3443, 0.0
      %v3476 = vmax.f32 %v3444, 0.0
      %v3477 = vmax.f32 %v3445, 0.0
      %v3478 = vmax.f32 %v3446, 0.0
      %v3479 = vmax.f32 %v3447, 0.0
      %v3480 = vmax.f32 %v3448, 0.0
      %v3481 = vmax.f32 %v3449, 0.0
      %v3482 = vmax.f32 %v3450, 0.0
      %v3483 = vmax.f32 %v3451, 0.0
      %v3484 = vmax.f32 %v3452, 0.0
      %v3485 = vmax.f32 %v3453, 0.0
      %v3486 = vmax.f32 %v3454, 0.0
      %v3487 = vmax.f32 %v3455, 0.0
      %v3488 = vmax.f32 %v3456, 0.0
      %v3489 = vmax.f32 %v3457, 0.0
      %v3490 = vmax.f32 %v3458, 0.0
      %v3491 = vmax.f32 %v3459, 0.0
      %v3492 = vmax.f32 %v3460, 0.0
      %v3493 = vmax.f32 %v3461, 0.0
      %v3494 = vmax.f32 %v3462, 0.0
      %v3495 = vmax.f32 %v3463, 0.0
      %v3496 = vmax.f32 %v3464, 0.0
      %v3497 = vpack.c.bf16 %v3466, %v3465
      %v3498 = vpack.c.bf16 %v3468, %v3467
      %v3499 = vpack.c.bf16 %v3470, %v3469
      %v3500 = vpack.c.bf16 %v3472, %v3471
      %v3501 = vpack.c.bf16 %v3474, %v3473
      %v3502 = vpack.c.bf16 %v3476, %v3475
      %v3503 = vpack.c.bf16 %v3478, %v3477
      %v3504 = vpack.c.bf16 %v3480, %v3479
      %v3505 = vpack.c.bf16 %v3482, %v3481
      %v3506 = vpack.c.bf16 %v3484, %v3483
      %v3507 = vpack.c.bf16 %v3486, %v3485
      %v3508 = vpack.c.bf16 %v3488, %v3487
      %v3509 = vpack.c.bf16 %v3490, %v3489
      %v3510 = vpack.c.bf16 %v3492, %v3491
      %v3511 = vpack.c.bf16 %v3494, %v3493
      %v3512 = vpack.c.bf16 %v3496, %v3495
      %v3513 = vld [vmem:[%s5] sm:$0xf]
      %v3514 = vld [vmem:[%s5 + $0x4] sm:$0xf]
      %v3515 = vld [vmem:[%s5 + $0x8] sm:$0xf]
      %v3516 = vld [vmem:[%s5 + $0xc] sm:$0xf]
      %v3517 = vld [vmem:[%s5 + $0x10] sm:$0xf]
      %v3518 = vld [vmem:[%s5 + $0x14] sm:$0xf]
      %v3519 = vld [vmem:[%s5 + $0x18] sm:$0xf]
      %v3520 = vld [vmem:[%s5 + $0x1c] sm:$0xf]
      %v3521 = vld [vmem:[%s5 + $0x20] sm:$0xf]
      %v3522 = vld [vmem:[%s5 + $0x24] sm:$0xf]
      %v3523 = vld [vmem:[%s5 + $0x28] sm:$0xf]
      %v3524 = vld [vmem:[%s5 + $0x2c] sm:$0xf]
      %v3525 = vld [vmem:[%s5 + $0x30] sm:$0xf]
      %v3526 = vld [vmem:[%s5 + $0x34] sm:$0xf]
      %v3527 = vld [vmem:[%s5 + $0x38] sm:$0xf]
      %v3528 = vld [vmem:[%s5 + $0x3c] sm:$0xf]
      %v3529 = vld [vmem:[%s6] sm:$0x1]
      %v3531 = vlaneseq
      %v3532 = vshrl.u32 %v3531, 7
      %v3533 = vsub.s32 0, %v3532
      %v3534 = vrot.slane %v3529, %v3533
      %v3552 = vunpack.c.l.b16 %v3513
      %v3553 = vunpack.c.l.b16 %v3514
      %v3554 = vunpack.c.l.b16 %v3515
      %v3555 = vunpack.c.l.b16 %v3516
      %v3556 = vunpack.c.l.b16 %v3517
      %v3557 = vunpack.c.l.b16 %v3518
      %v3558 = vunpack.c.l.b16 %v3519
      %v3559 = vunpack.c.l.b16 %v3520
      %v3560 = vunpack.c.l.b16 %v3521
      %v3561 = vunpack.c.l.b16 %v3522
      %v3562 = vunpack.c.l.b16 %v3523
      %v3563 = vunpack.c.l.b16 %v3524
      %v3564 = vunpack.c.l.b16 %v3525
      %v3565 = vunpack.c.l.b16 %v3526
      %v3566 = vunpack.c.l.b16 %v3527
      %v3567 = vunpack.c.l.b16 %v3528
      %v3568 = vpack.c.b16 %v3553, %v3552
      %v3569 = vpack.c.b16 %v3555, %v3554
      %v3570 = vpack.c.b16 %v3557, %v3556
      %v3571 = vpack.c.b16 %v3559, %v3558
      %v3572 = vpack.c.b16 %v3561, %v3560
      %v3573 = vpack.c.b16 %v3563, %v3562
      %v3574 = vpack.c.b16 %v3565, %v3564
      %v3575 = vpack.c.b16 %v3567, %v3566
      %3584 = vmatprep.subr.bf16.mxu0 0
      %3585 = vmatpush1.bf16.msra.mxu0 %v3568
      %3586 = vmatprep.subr.bf16.mxu0 0
      %3587 = vmatpush1.bf16.msra.mxu0 %v3569
      %3588 = vmatprep.subr.bf16.mxu0 0
      %3589 = vmatpush1.bf16.msra.mxu0 %v3570
      %3590 = vmatprep.subr.bf16.mxu0 0
      %3591 = vmatpush1.bf16.msra.mxu0 %v3571
      %3592 = vmatprep.subr.bf16.mxu0 0
      %3593 = vmatpush1.bf16.msra.mxu0 %v3572
      %3594 = vmatprep.subr.bf16.mxu0 0
      %3595 = vmatpush1.bf16.msra.mxu0 %v3573
      %3596 = vmatprep.subr.bf16.mxu0 0
      %3597 = vmatpush1.bf16.msra.mxu0 %v3574
      %3598 = vmatprep.subr.bf16.mxu0 0
      %3599 = vmatpush1.bf16.msra.mxu0 %v3575
      %3600 = vmatprep.subr.bf16.mxu0 0
      %3601 = vmatpush1.bf16.msra.mxu0 0
      %3602 = vmatprep.subr.bf16.mxu0 0
      %3603 = vmatpush1.bf16.msra.mxu0 0
      %3604 = vmatprep.subr.bf16.mxu0 0
      %3605 = vmatpush1.bf16.msra.mxu0 0
      %3606 = vmatprep.subr.bf16.mxu0 0
      %3607 = vmatpush1.bf16.msra.mxu0 0
      %3608 = vmatprep.subr.bf16.mxu0 0
      %3609 = vmatpush1.bf16.msra.mxu0 0
      %3610 = vmatprep.subr.bf16.mxu0 0
      %3611 = vmatpush1.bf16.msra.mxu0 0
      %3612 = vmatprep.subr.bf16.mxu0 0
      %3613 = vmatpush1.bf16.msra.mxu0 0
      %3614 = vmatprep.subr.bf16.mxu0 0
      %3615 = vmatpush1.bf16.msra.mxu0 0
      %3616 = vmatprep.mubr.bf16.mxu0 0
      %3617 = vmatmul.mubr.bf16.gmra.mrb[0].mxu0 %v3497
      %v3618 = vpop.f32.mrb[0].mxu0
      %v3619 = vadd.f32 %v3534, %v3618
      %v3620 = vpop.f32.mrb[0].mxu0
      %v3621 = vpop.f32.mrb[0].mxu0
      %v3622 = vadd.f32 %v3534, %v3621
      %v3623 = vpop.f32.mrb[0].mxu0
      %3624 = vmatprep.mubr.bf16.mxu0 0
      %3625 = vmatmul.mubr.bf16.gmra.mrb[0].mxu0 %v3498
      %v3626 = vpop.f32.mrb[0].mxu0
      %v3627 = vadd.f32 %v3534, %v3626
      %v3628 = vpop.f32.mrb[0].mxu0
      %v3629 = vpop.f32.mrb[0].mxu0
      %v3630 = vadd.f32 %v3534, %v3629
      %v3631 = vpop.f32.mrb[0].mxu0
      %3632 = vmatprep.mubr.bf16.mxu0 0
      %3633 = vmatmul.mubr.bf16.gmra.mrb[0].mxu0 %v3499
      %v3634 = vpop.f32.mrb[0].mxu0
      %v3635 = vadd.f32 %v3534, %v3634
      %v3636 = vpop.f32.mrb[0].mxu0
      %v3637 = vpop.f32.mrb[0].mxu0
      %v3638 = vadd.f32 %v3534, %v3637
      %v3639 = vpop.f32.mrb[0].mxu0
      %3640 = vmatprep.mubr.bf16.mxu0 0
      %3641 = vmatmul.mubr.bf16.gmra.mrb[0].mxu0 %v3500
      %v3642 = vpop.f32.mrb[0].mxu0
      %v3643 = vadd.f32 %v3534, %v3642
      %v3644 = vpop.f32.mrb[0].mxu0
      %v3645 = vpop.f32.mrb[0].mxu0
      %v3646 = vadd.f32 %v3534, %v3645
      %v3647 = vpop.f32.mrb[0].mxu0
      %3648 = vmatprep.mubr.bf16.mxu0 0
      %3649 = vmatmul.mubr.bf16.gmra.mrb[0].mxu0 %v3501
      %v3650 = vpop.f32.mrb[0].mxu0
      %v3651 = vadd.f32 %v3534, %v3650
      %v3652 = vpop.f32.mrb[0].mxu0
      %v3653 = vpop.f32.mrb[0].mxu0
      %v3654 = vadd.f32 %v3534, %v3653
      %v3655 = vpop.f32.mrb[0].mxu0
      %3656 = vmatprep.mubr.bf16.mxu0 0
      %3657 = vmatmul.mubr.bf16.gmra.mrb[0].mxu0 %v3502
      %v3658 = vpop.f32.mrb[0].mxu0
      %v3659 = vadd.f32 %v3534, %v3658
      %v3660 = vpop.f32.mrb[0].mxu0
      %v3661 = vpop.f32.mrb[0].mxu0
      %v3662 = vadd.f32 %v3534, %v3661
      %v3663 = vpop.f32.mrb[0].mxu0
      %3664 = vmatprep.mubr.bf16.mxu0 0
      %3665 = vmatmul.mubr.bf16.gmra.mrb[0].mxu0 %v3503
      %v3666 = vpop.f32.mrb[0].mxu0
      %v3667 = vadd.f32 %v3534, %v3666
      %v3668 = vpop.f32.mrb[0].mxu0
      %v3669 = vpop.f32.mrb[0].mxu0
      %v3670 = vadd.f32 %v3534, %v3669
      %v3671 = vpop.f32.mrb[0].mxu0
      %3672 = vmatprep.mubr.bf16.mxu0 0
      %3673 = vmatmul.mubr.bf16.gmra.mrb[0].mxu0 %v3504
      %v3674 = vpop.f32.mrb[0].mxu0
      %v3675 = vadd.f32 %v3534, %v3674
      %v3676 = vpop.f32.mrb[0].mxu0
      %v3677 = vpop.f32.mrb[0].mxu0
      %v3678 = vadd.f32 %v3534, %v3677
      %v3679 = vpop.f32.mrb[0].mxu0
      %3680 = vmatprep.mubr.bf16.mxu0 0
      %3681 = vmatmul.mubr.bf16.gmra.mrb[0].mxu0 %v3505
      %v3682 = vpop.f32.mrb[0].mxu0
      %v3683 = vadd.f32 %v3534, %v3682
      %v3684 = vpop.f32.mrb[0].mxu0
      %v3685 = vpop.f32.mrb[0].mxu0
      %v3686 = vadd.f32 %v3534, %v3685
      %v3687 = vpop.f32.mrb[0].mxu0
      %3688 = vmatprep.mubr.bf16.mxu0 0
      %3689 = vmatmul.mubr.bf16.gmra.mrb[0].mxu0 %v3506
      %v3690 = vpop.f32.mrb[0].mxu0
      %v3691 = vadd.f32 %v3534, %v3690
      %v3692 = vpop.f32.mrb[0].mxu0
      %v3693 = vpop.f32.mrb[0].mxu0
      %v3694 = vadd.f32 %v3534, %v3693
      %v3695 = vpop.f32.mrb[0].mxu0
      %3696 = vmatprep.mubr.bf16.mxu0 0
      %3697 = vmatmul.mubr.bf16.gmra.mrb[0].mxu0 %v3507
      %v3698 = vpop.f32.mrb[0].mxu0
      %v3699 = vadd.f32 %v3534, %v3698
      %v3700 = vpop.f32.mrb[0].mxu0
      %v3701 = vpop.f32.mrb[0].mxu0
      %v3702 = vadd.f32 %v3534, %v3701
      %v3703 = vpop.f32.mrb[0].mxu0
      %3704 = vmatprep.mubr.bf16.mxu0 0
      %3705 = vmatmul.mubr.bf16.gmra.mrb[0].mxu0 %v3508
      %v3706 = vpop.f32.mrb[0].mxu0
      %v3707 = vadd.f32 %v3534, %v3706
      %v3708 = vpop.f32.mrb[0].mxu0
      %v3709 = vpop.f32.mrb[0].mxu0
      %v3710 = vadd.f32 %v3534, %v3709
      %v3711 = vpop.f32.mrb[0].mxu0
      %3712 = vmatprep.mubr.bf16.mxu0 0
      %3713 = vmatmul.mubr.bf16.gmra.mrb[0].mxu0 %v3509
      %v3714 = vpop.f32.mrb[0].mxu0
      %v3715 = vadd.f32 %v3534, %v3714
      %v3716 = vpop.f32.mrb[0].mxu0
      %v3717 = vpop.f32.mrb[0].mxu0
      %v3718 = vadd.f32 %v3534, %v3717
      %v3719 = vpop.f32.mrb[0].mxu0
      %3720 = vmatprep.mubr.bf16.mxu0 0
      %3721 = vmatmul.mubr.bf16.gmra.mrb[0].mxu0 %v3510
      %v3722 = vpop.f32.mrb[0].mxu0
      %v3723 = vadd.f32 %v3534, %v3722
      %v3724 = vpop.f32.mrb[0].mxu0
      %v3725 = vpop.f32.mrb[0].mxu0
      %v3726 = vadd.f32 %v3534, %v3725
      %v3727 = vpop.f32.mrb[0].mxu0
      %3728 = vmatprep.mubr.bf16.mxu0 0
      %3729 = vmatmul.mubr.bf16.gmra.mrb[0].mxu0 %v3511
      %v3730 = vpop.f32.mrb[0].mxu0
      %v3731 = vadd.f32 %v3534, %v3730
      %v3732 = vpop.f32.mrb[0].mxu0
      %v3733 = vpop.f32.mrb[0].mxu0
      %v3734 = vadd.f32 %v3534, %v3733
      %v3735 = vpop.f32.mrb[0].mxu0
      %3736 = vmatprep.mubr.bf16.mxu0 0
      %3737 = vmatmul.mubr.bf16.gmra.mrb[0].mxu0 %v3512
      %v3738 = vpop.f32.mrb[0].mxu0
      %v3739 = vadd.f32 %v3534, %v3738
      %v3740 = vpop.f32.mrb[0].mxu0
      %v3741 = vpop.f32.mrb[0].mxu0
      %v3742 = vadd.f32 %v3534, %v3741
      %v3743 = vpop.f32.mrb[0].mxu0
      %3744 = vdwg.mxu0
      %3745 = vst [vmem:[%s278] sm:$0xff] %v3619
      %3746 = vst [vmem:[%s278 + $0x8] sm:$0xff] %v3622
      %3747 = vst [vmem:[%s278 + $0x10] sm:$0xff] %v3627
      %3748 = vst [vmem:[%s278 + $0x18] sm:$0xff] %v3630
      %3749 = vst [vmem:[%s278 + $0x20] sm:$0xff] %v3635
      %3750 = vst [vmem:[%s278 + $0x28] sm:$0xff] %v3638
      %3751 = vst [vmem:[%s278 + $0x30] sm:$0xff] %v3643
      %3752 = vst [vmem:[%s278 + $0x38] sm:$0xff] %v3646
      %3753 = vst [vmem:[%s278 + $0x40] sm:$0xff] %v3651
      %3754 = vst [vmem:[%s278 + $0x48] sm:$0xff] %v3654
      %3755 = vst [vmem:[%s278 + $0x50] sm:$0xff] %v3659
      %3756 = vst [vmem:[%s278 + $0x58] sm:$0xff] %v3662
      %3757 = vst [vmem:[%s278 + $0x60] sm:$0xff] %v3667
      %3758 = vst [vmem:[%s278 + $0x68] sm:$0xff] %v3670
      %3759 = vst [vmem:[%s278 + $0x70] sm:$0xff] %v3675
      %3760 = vst [vmem:[%s278 + $0x78] sm:$0xff] %v3678
      %3761 = vst [vmem:[%s278 + $0x80] sm:$0xff] %v3683
      %3762 = vst [vmem:[%s278 + $0x88] sm:$0xff] %v3686
      %3763 = vst [vmem:[%s278 + $0x90] sm:$0xff] %v3691
      %3764 = vst [vmem:[%s278 + $0x98] sm:$0xff] %v3694
      %3765 = vst [vmem:[%s278 + $0xa0] sm:$0xff] %v3699
      %3766 = vst [vmem:[%s278 + $0xa8] sm:$0xff] %v3702
      %3767 = vst [vmem:[%s278 + $0xb0] sm:$0xff] %v3707
      %3768 = vst [vmem:[%s278 + $0xb8] sm:$0xff] %v3710
      %3769 = vst [vmem:[%s278 + $0xc0] sm:$0xff] %v3715
      %3770 = vst [vmem:[%s278 + $0xc8] sm:$0xff] %v3718
      %3771 = vst [vmem:[%s278 + $0xd0] sm:$0xff] %v3723
      %3772 = vst [vmem:[%s278 + $0xd8] sm:$0xff] %v3726
      %3773 = vst [vmem:[%s278 + $0xe0] sm:$0xff] %v3731
      %3774 = vst [vmem:[%s278 + $0xe8] sm:$0xff] %v3734
      %3775 = vst [vmem:[%s278 + $0xf0] sm:$0xff] %v3739
      %3776 = vst [vmem:[%s278 + $0xf8] sm:$0xff] %v3742
      %p3777 = scmp.lt.s32.totalorder %s18, 1
      %s3778 = scalar_select %p3777, %s18, 1
      %s3779 = smul.addr %s3778, 32
      %s3780 = smul.addr %s3779, 8
      %s3781 = scalar_lea.vmem %s7, %s3780
      // Predicated region
      $region49: #{bottleneck_forward.1} parent=47 // pred_check
        %p3782 = pneg %p188
      $region50: #{bottleneck_forward.1} parent=47 // pred_check_branch
        %3784 = sbr.rel (%p3782) target = $region52
      $region51: #{bottleneck_forward.1} parent=47 // pred_region
        _
      $region52: #{bottleneck_forward.1} parent=47 // pred_fallthru
        _
    $region48: #{bottleneck_forward.1} parent=5 // pred_fallthru
      _
    %p3785 = scmp.le.s32.totalorder 2, %s13
    // Predicated region
    $region53: #{bottleneck_forward.1} parent=5 // pred_check
      %p3786 = pneg %p3785
    $region54: #{bottleneck_forward.1} parent=5 // pred_check_branch
      %3788 = sbr.rel (%p3786) target = $region56
    $region55: #{bottleneck_forward.1} parent=5 // pred_region
      %s3789 = ssub.s32 %s13, 2
      // Predicated region
      $region57: #{bottleneck_forward.1} parent=55 // pred_check
        %p3790 = pneg %p194
      $region58: #{bottleneck_forward.1} parent=55 // pred_check_branch
        %3792 = sbr.rel (%p3790) target = $region60
      $region59: #{bottleneck_forward.1} parent=55 // pred_region
        %p3793 = scmp.lt.s32.totalorder %s19, 1
        %s3794 = scalar_select %p3793, %s19, 1
        %s3795 = smul.addr %s3794, 32
        %s3796 = smul.addr %s3795, 8
        %s3797 = scalar_lea.vmem %s7, %s3796
      $region60: #{bottleneck_forward.1} parent=55 // pred_fallthru
        _
    $region56: #{bottleneck_forward.1} parent=5 // pred_fallthru
      _
  $region6: #{bottleneck_forward.1} parent=0 // loop_footer
    %s17 = sadd.s32 1, %s13
  $region7: #{bottleneck_forward.1} parent=0 // loop_footer_branch
    %12 = sbr.rel target = $region3
  $region8: #{bottleneck_forward.1} parent=0 // loop_exit
    _

</llo_original>
